<compile_context>
chip_gen: v7x
topology: tpu7x:2x2x1
jax: 0.10.0
libtpu: 0.0.40
codegen_flags: <defaults>
</compile_context>

<pallas_src>
import functools

import numpy as np
import jax
import jax.numpy as jnp
from jax import lax
from jax.experimental import pallas as pl
from jax.experimental.pallas import tpu as pltpu

TB = 8        # images per grid step (batch tile)
K = 5         # conv kernel size
LANES = 128   # FC width padding -> lane-dense stores


# ---------------------------------------------------------------------------
# The fused Pallas kernel (everything is plain 2D matmul + add + relu)
# ---------------------------------------------------------------------------
def _lenet_fused_kernel(x_ref, s1_ref, m1_ref, b1_ref, s2_ref, m2_ref, b2_ref,
                        e_ref, g_ref, fb1_ref, fw2_ref, fb2_ref, fw3_ref,
                        fb3_ref, o_ref):
    f32 = jnp.float32
    x = x_ref[...]                                       # (TB*32, 32) padded input

    # conv1 (1->6, k=5, 'same') + AvgPool2d(2) + ReLU, folded into matmuls.
    acc1 = jnp.zeros((TB * 14, 14 * 6), f32)
    for s in range(K + 1):
        rows = jnp.dot(s1_ref[s], x, preferred_element_type=f32)        # (TB*14, 32)
        acc1 = acc1 + jnp.dot(rows, m1_ref[s], preferred_element_type=f32)
    h1 = jnp.maximum(acc1 * 0.25 + b1_ref[...], 0.0)                    # (TB*14, 84)

    # conv2 (6->16, k=5, valid) + AvgPool2d(2) + ReLU.
    acc2 = jnp.zeros((TB * 5, 5 * 16), f32)
    for s in range(K + 1):
        rows = jnp.dot(s2_ref[s], h1, preferred_element_type=f32)       # (TB*5, 84)
        acc2 = acc2 + jnp.dot(rows, m2_ref[s], preferred_element_type=f32)
    h2 = jnp.maximum(acc2 * 0.25 + b2_ref[...], 0.0)                    # (TB*5, 80)

    # fc_1 with PyTorch's NCHW flatten folded into per-row weight slabs g[h].
    y = jnp.zeros((TB, LANES), f32) + fb1_ref[...]
    for h in range(5):
        rows = jnp.dot(e_ref[h], h2, preferred_element_type=f32)        # (TB, 80)
        y = y + jnp.dot(rows, g_ref[h], preferred_element_type=f32)     # (TB, 128)

    # fc_2, fc_3 (the reference module applies no ReLU on the FC stack).
    y = jnp.dot(y, fw2_ref[...], preferred_element_type=f32) + fb2_ref[...]
    y = jnp.dot(y, fw3_ref[...], preferred_element_type=f32) + fb3_ref[...]
    o_ref[...] = y                                                       # (TB, 128)


# ---------------------------------------------------------------------------
# One-time weight packing (plain JAX / numpy on tiny arrays)
# ---------------------------------------------------------------------------
def _pool_folded_taps(w_oihw):
    """V[s, t, ci, co] = sum over the four 2x2 pool corners of kernel taps."""
    k = w_oihw.shape[-1]
    wk = jnp.transpose(w_oihw, (2, 3, 1, 0))             # (kh, kw, ci, co)
    v = jnp.zeros((k + 1, k + 1) + wk.shape[2:], wk.dtype)
    for ph in (0, 1):
        for pw in (0, 1):
            v = v.at[ph:ph + k, pw:pw + k].add(wk)
    return v


def _band_matrices(w_oihw, wi, jo):
    """Right-hand band matrices M[s]: (wi*ci, jo*co); cols are (w*ci+ci, j*co+co)."""
    co, ci, k, _ = w_oihw.shape
    v = _pool_folded_taps(w_oihw)                        # (k+1, k+1, ci, co)
    m = jnp.zeros((k + 1, wi, ci, jo, co), w_oihw.dtype)
    for j in range(jo):
        for t in range(k + 1):
            w = 2 * j + t
            if w < wi:
                m = m.at[:, w, :, j, :].add(v[:, t, :, :])
    return m.reshape(k + 1, wi * ci, jo * co)


def _row_select(io, hi):
    """Left 0/1 selection matrices S[s]: block-diagonal over the TB images."""
    out = np.zeros((K + 1, TB * io, TB * hi), np.float32)
    for s in range(K + 1):
        blk = np.zeros((io, hi), np.float32)
        for i in range(io):
            h = 2 * i + s
            if h < hi:
                blk[i, h] = 1.0
        out[s] = np.kron(np.eye(TB, dtype=np.float32), blk)
    return jnp.asarray(out)


def _flatten_select():
    """E[h]: picks spatial row h of each image's 5-row block -> (TB, TB*5)."""
    out = np.zeros((5, TB, TB * 5), np.float32)
    for h in range(5):
        blk = np.zeros((1, 5), np.float32)
        blk[0, h] = 1.0
        out[h] = np.kron(np.eye(TB, dtype=np.float32), blk)
    return jnp.asarray(out)


def _fc1_slabs(fw1):
    """Fold the NCHW (c,h,w) flatten order into per-h fc1 weight slabs (80, 128)."""
    g = fw1.reshape(120, 16, 5, 5)                       # (n, c, h, w)
    g = jnp.transpose(g, (2, 3, 1, 0))                   # (h, w, c, n)
    g = g.reshape(5, 5 * 16, 120)                        # rows are w*16 + c
    return jnp.pad(g, ((0, 0), (0, 0), (0, LANES - 120)))


def pack_params(params):
    num_classes = params["fw3"].shape[0]
    assert num_classes <= LANES
    return {
        "s1": _row_select(14, 32),
        "m1": _band_matrices(params["w1"], 32, 14),
        "b1": jnp.tile(params["b1"], 14).reshape(1, 14 * 6),
        "s2": _row_select(5, 14),
        "m2": _band_matrices(params["w2"], 14, 5),
        "b2": jnp.tile(params["b2"], 5).reshape(1, 5 * 16),
        "e": _flatten_select(),
        "g": _fc1_slabs(params["fw1"]),
        "fb1": jnp.pad(params["fb1"], (0, LANES - 120)).reshape(1, LANES),
        "fw2": jnp.pad(params["fw2"].T, ((0, LANES - 120), (0, LANES - 84))),
        "fb2": jnp.pad(params["fb2"], (0, LANES - 84)).reshape(1, LANES),
        "fw3": jnp.pad(params["fw3"].T,
                       ((0, LANES - 84), (0, LANES - num_classes))),
        "fb3": jnp.pad(params["fb3"], (0, LANES - num_classes)).reshape(1, LANES),
    }


# ---------------------------------------------------------------------------
# Forward pass
# ---------------------------------------------------------------------------
@functools.partial(jax.jit, static_argnames=("num_classes",))
def lenet_forward(packed, x_nchw, *, num_classes):
    b = x_nchw.shape[0]
    b_pad = -(-b // TB) * TB
    # NCHW -> (B, 28, 28), apply conv1's 'same' padding (2), pad batch to TB.
    x = x_nchw[:, 0]
    x = jnp.pad(x, ((0, b_pad - b), (2, 2), (2, 2)))      # (b_pad, 32, 32)
    x2d = x.reshape(b_pad * 32, 32).astype(jnp.float32)

    weight_keys = ("s1", "m1", "b1", "s2", "m2", "b2", "e", "g",
                   "fb1", "fw2", "fb2", "fw3", "fb3")
    weights = [packed[k] for k in weight_keys]

    def full_spec(a):
        return pl.BlockSpec(a.shape, lambda i, nd=a.ndim: (0,) * nd)

    out = pl.pallas_call(
        _lenet_fused_kernel,
        out_shape=jax.ShapeDtypeStruct((b_pad, LANES), jnp.float32),
        grid=(b_pad // TB,),
        in_specs=[pl.BlockSpec((TB * 32, 32), lambda i: (i, 0))]
                 + [full_spec(w) for w in weights],
        out_specs=pl.BlockSpec((TB, LANES), lambda i: (i, 0)),
        compiler_params=pltpu.CompilerParams(
            dimension_semantics=("parallel",),       # megacore sharding on v7x
            vmem_limit_bytes=32 * 1024 * 1024,       # safe on v5e/v6e/v7x
        ),
    )(x2d, *weights)
    return out[:b, :num_classes]


# ---------------------------------------------------------------------------
# Parameter init (PyTorch default layouts / init) + plain-JAX reference
# ---------------------------------------------------------------------------
def init_params(key, num_classes):
    def uniform(k, shape, fan_in):
        bound = 1.0 / jnp.sqrt(float(fan_in))
        return jax.random.uniform(k, shape, jnp.float32, -bound, bound)

    ks = jax.random.split(key, 10)
    return {
        "w1": uniform(ks[0], (6, 1, 5, 5), 25),
        "b1": uniform(ks[1], (6,), 25),
        "w2": uniform(ks[2], (16, 6, 5, 5), 150),
        "b2": uniform(ks[3], (16,), 150),
        "fw1": uniform(ks[4], (120, 16 * 5 * 5), 400),
        "fb1": uniform(ks[5], (120,), 400),
        "fw2": uniform(ks[6], (84, 120), 120),
        "fb2": uniform(ks[7], (84,), 120),
        "fw3": uniform(ks[8], (num_classes, 84), 84),
        "fb3": uniform(ks[9], (num_classes,), 84),
    }


def reference_forward(params, x_nchw):
    dn1 = lax.conv_dimension_numbers(x_nchw.shape, params["w1"].shape,
                                     ("NCHW", "OIHW", "NCHW"))
    y = lax.conv_general_dilated(x_nchw, params["w1"], (1, 1), ((2, 2), (2, 2)),
                                 dimension_numbers=dn1,
                                 precision=lax.Precision.HIGHEST)
    y = y + params["b1"][None, :, None, None]
    y = lax.reduce_window(y, 0.0, lax.add, (1, 1, 2, 2), (1, 1, 2, 2), "VALID") * 0.25
    y = jnp.maximum(y, 0.0)
    dn2 = lax.conv_dimension_numbers(y.shape, params["w2"].shape,
                                     ("NCHW", "OIHW", "NCHW"))
    y = lax.conv_general_dilated(y, params["w2"], (1, 1), "VALID",
                                 dimension_numbers=dn2,
                                 precision=lax.Precision.HIGHEST)
    y = y + params["b2"][None, :, None, None]
    y = lax.reduce_window(y, 0.0, lax.add, (1, 1, 2, 2), (1, 1, 2, 2), "VALID") * 0.25
    y = jnp.maximum(y, 0.0)
    y = y.reshape(y.shape[0], -1)
    y = y @ params["fw1"].T + params["fb1"]
    y = y @ params["fw2"].T + params["fb2"]
    y = y @ params["fw3"].T + params["fb3"]
    return y


if __name__ == "__main__":
    num_classes = 10
    key = jax.random.PRNGKey(0)
    k_x, k_p = jax.random.split(key)

    # MNIST-shaped input (the 16*5*5 FC dim requires 28x28); small batch.
    x = jax.random.normal(k_x, (2, 1, 28, 28), dtype=jnp.float32)
    params = init_params(k_p, num_classes)
    packed = pack_params(params)          # one-time weight packing

    logits = lenet_forward(packed, x, num_classes=num_classes)
    logits = jax.block_until_ready(logits)

    assert logits.shape == (2, num_classes), logits.shape
    assert bool(jnp.all(jnp.isfinite(logits)))
    ref = reference_forward(params, x)
    assert bool(jnp.allclose(logits, ref, rtol=5e-2, atol=5e-2)), \
        float(jnp.max(jnp.abs(logits - ref)))
    print("KERNEL_OK")
</pallas_src>

<mosaic_0001>
module attributes {stable_mosaic.version = 11 : i64} {
  func.func @_lenet_fused_kernel(%arg0: i32, %arg1: memref<256x32xf32, #tpu.memory_space<vmem>>, %arg2: memref<6x112x256xf32, #tpu.memory_space<vmem>>, %arg3: memref<6x32x84xf32, #tpu.memory_space<vmem>>, %arg4: memref<1x84xf32, #tpu.memory_space<vmem>>, %arg5: memref<6x40x112xf32, #tpu.memory_space<vmem>>, %arg6: memref<6x84x80xf32, #tpu.memory_space<vmem>>, %arg7: memref<1x80xf32, #tpu.memory_space<vmem>>, %arg8: memref<5x8x40xf32, #tpu.memory_space<vmem>>, %arg9: memref<5x80x128xf32, #tpu.memory_space<vmem>>, %arg10: memref<1x128xf32, #tpu.memory_space<vmem>>, %arg11: memref<128x128xf32, #tpu.memory_space<vmem>>, %arg12: memref<1x128xf32, #tpu.memory_space<vmem>>, %arg13: memref<128x128xf32, #tpu.memory_space<vmem>>, %arg14: memref<1x128xf32, #tpu.memory_space<vmem>>, %arg15: memref<8x128xf32, #tpu.memory_space<vmem>>) attributes {dimension_semantics = [#tpu.dimension_semantics<parallel>], iteration_bounds = array<i64: 1>, scalar_prefetch = 0 : i64, scratch_operands = 0 : i64, tpu.core_type = #tpu.core_type<tc>, window_params = [{transform_indices = @transform_0, window_bounds = array<i64: 256, 32>}, {pipeline_mode = #tpu.pipeline_mode<synchronous>, transform_indices = @transform_1, window_bounds = array<i64: 6, 112, 256>}, {pipeline_mode = #tpu.pipeline_mode<synchronous>, transform_indices = @transform_2, window_bounds = array<i64: 6, 32, 84>}, {pipeline_mode = #tpu.pipeline_mode<synchronous>, transform_indices = @transform_3, window_bounds = array<i64: 1, 84>}, {pipeline_mode = #tpu.pipeline_mode<synchronous>, transform_indices = @transform_4, window_bounds = array<i64: 6, 40, 112>}, {pipeline_mode = #tpu.pipeline_mode<synchronous>, transform_indices = @transform_5, window_bounds = array<i64: 6, 84, 80>}, {pipeline_mode = #tpu.pipeline_mode<synchronous>, transform_indices = @transform_6, window_bounds = array<i64: 1, 80>}, {pipeline_mode = #tpu.pipeline_mode<synchronous>, transform_indices = @transform_7, window_bounds = array<i64: 5, 8, 40>}, {pipeline_mode = #tpu.pipeline_mode<synchronous>, transform_indices = @transform_8, window_bounds = array<i64: 5, 80, 128>}, {pipeline_mode = #tpu.pipeline_mode<synchronous>, transform_indices = @transform_9, window_bounds = array<i64: 1, 128>}, {pipeline_mode = #tpu.pipeline_mode<synchronous>, transform_indices = @transform_10, window_bounds = array<i64: 128, 128>}, {pipeline_mode = #tpu.pipeline_mode<synchronous>, transform_indices = @transform_11, window_bounds = array<i64: 1, 128>}, {pipeline_mode = #tpu.pipeline_mode<synchronous>, transform_indices = @transform_12, window_bounds = array<i64: 128, 128>}, {pipeline_mode = #tpu.pipeline_mode<synchronous>, transform_indices = @transform_13, window_bounds = array<i64: 1, 128>}, {transform_indices = @transform_14, window_bounds = array<i64: 8, 128>}]} {
    %c0 = arith.constant 0 : index
    %c0_0 = arith.constant 0 : index
    %0 = vector.load %arg1[%c0, %c0_0] : memref<256x32xf32, #tpu.memory_space<vmem>>, vector<256x32xf32>
    %cst = arith.constant 0.000000e+00 : f32
    %1 = vector.broadcast %cst : f32 to vector<112x84xf32>
    %c0_1 = arith.constant 0 : index
    %c0_2 = arith.constant 0 : index
    %c0_3 = arith.constant 0 : index
    %2 = vector.load %arg2[%c0_1, %c0_2, %c0_3] : memref<6x112x256xf32, #tpu.memory_space<vmem>>, vector<1x112x256xf32>
    %3 = vector.shape_cast %2 : vector<1x112x256xf32> to vector<112x256xf32>
    %cst_4 = arith.constant dense<0.000000e+00> : vector<112x32xf32>
    %4 = tpu.matmul %3, %0, %cst_4 {dimension_numbers = #tpu.dot_dimension_numbers<[1], [0], [0], [1], [0, 0, 1, 1], [], []>} : vector<112x256xf32>, vector<256x32xf32>, vector<112x32xf32> -> vector<112x32xf32>
    %c0_5 = arith.constant 0 : index
    %c0_6 = arith.constant 0 : index
    %c0_7 = arith.constant 0 : index
    %5 = vector.load %arg3[%c0_5, %c0_6, %c0_7] : memref<6x32x84xf32, #tpu.memory_space<vmem>>, vector<1x32x84xf32>
    %6 = vector.shape_cast %5 : vector<1x32x84xf32> to vector<32x84xf32>
    %cst_8 = arith.constant dense<0.000000e+00> : vector<112x84xf32>
    %7 = tpu.matmul %4, %6, %cst_8 {dimension_numbers = #tpu.dot_dimension_numbers<[1], [0], [0], [1], [0, 0, 1, 1], [], []>} : vector<112x32xf32>, vector<32x84xf32>, vector<112x84xf32> -> vector<112x84xf32>
    %8 = arith.addf %1, %7 : vector<112x84xf32>
    %c1 = arith.constant 1 : index
    %c0_9 = arith.constant 0 : index
    %c0_10 = arith.constant 0 : index
    %9 = vector.load %arg2[%c1, %c0_9, %c0_10] : memref<6x112x256xf32, #tpu.memory_space<vmem>>, vector<1x112x256xf32>
    %10 = vector.shape_cast %9 : vector<1x112x256xf32> to vector<112x256xf32>
    %cst_11 = arith.constant dense<0.000000e+00> : vector<112x32xf32>
    %11 = tpu.matmul %10, %0, %cst_11 {dimension_numbers = #tpu.dot_dimension_numbers<[1], [0], [0], [1], [0, 0, 1, 1], [], []>} : vector<112x256xf32>, vector<256x32xf32>, vector<112x32xf32> -> vector<112x32xf32>
    %c1_12 = arith.constant 1 : index
    %c0_13 = arith.constant 0 : index
    %c0_14 = arith.constant 0 : index
    %12 = vector.load %arg3[%c1_12, %c0_13, %c0_14] : memref<6x32x84xf32, #tpu.memory_space<vmem>>, vector<1x32x84xf32>
    %13 = vector.shape_cast %12 : vector<1x32x84xf32> to vector<32x84xf32>
    %cst_15 = arith.constant dense<0.000000e+00> : vector<112x84xf32>
    %14 = tpu.matmul %11, %13, %cst_15 {dimension_numbers = #tpu.dot_dimension_numbers<[1], [0], [0], [1], [0, 0, 1, 1], [], []>} : vector<112x32xf32>, vector<32x84xf32>, vector<112x84xf32> -> vector<112x84xf32>
    %15 = arith.addf %8, %14 : vector<112x84xf32>
    %c2 = arith.constant 2 : index
    %c0_16 = arith.constant 0 : index
    %c0_17 = arith.constant 0 : index
    %16 = vector.load %arg2[%c2, %c0_16, %c0_17] : memref<6x112x256xf32, #tpu.memory_space<vmem>>, vector<1x112x256xf32>
    %17 = vector.shape_cast %16 : vector<1x112x256xf32> to vector<112x256xf32>
    %cst_18 = arith.constant dense<0.000000e+00> : vector<112x32xf32>
    %18 = tpu.matmul %17, %0, %cst_18 {dimension_numbers = #tpu.dot_dimension_numbers<[1], [0], [0], [1], [0, 0, 1, 1], [], []>} : vector<112x256xf32>, vector<256x32xf32>, vector<112x32xf32> -> vector<112x32xf32>
    %c2_19 = arith.constant 2 : index
    %c0_20 = arith.constant 0 : index
    %c0_21 = arith.constant 0 : index
    %19 = vector.load %arg3[%c2_19, %c0_20, %c0_21] : memref<6x32x84xf32, #tpu.memory_space<vmem>>, vector<1x32x84xf32>
    %20 = vector.shape_cast %19 : vector<1x32x84xf32> to vector<32x84xf32>
    %cst_22 = arith.constant dense<0.000000e+00> : vector<112x84xf32>
    %21 = tpu.matmul %18, %20, %cst_22 {dimension_numbers = #tpu.dot_dimension_numbers<[1], [0], [0], [1], [0, 0, 1, 1], [], []>} : vector<112x32xf32>, vector<32x84xf32>, vector<112x84xf32> -> vector<112x84xf32>
    %22 = arith.addf %15, %21 : vector<112x84xf32>
    %c3 = arith.constant 3 : index
    %c0_23 = arith.constant 0 : index
    %c0_24 = arith.constant 0 : index
    %23 = vector.load %arg2[%c3, %c0_23, %c0_24] : memref<6x112x256xf32, #tpu.memory_space<vmem>>, vector<1x112x256xf32>
    %24 = vector.shape_cast %23 : vector<1x112x256xf32> to vector<112x256xf32>
    %cst_25 = arith.constant dense<0.000000e+00> : vector<112x32xf32>
    %25 = tpu.matmul %24, %0, %cst_25 {dimension_numbers = #tpu.dot_dimension_numbers<[1], [0], [0], [1], [0, 0, 1, 1], [], []>} : vector<112x256xf32>, vector<256x32xf32>, vector<112x32xf32> -> vector<112x32xf32>
    %c3_26 = arith.constant 3 : index
    %c0_27 = arith.constant 0 : index
    %c0_28 = arith.constant 0 : index
    %26 = vector.load %arg3[%c3_26, %c0_27, %c0_28] : memref<6x32x84xf32, #tpu.memory_space<vmem>>, vector<1x32x84xf32>
    %27 = vector.shape_cast %26 : vector<1x32x84xf32> to vector<32x84xf32>
    %cst_29 = arith.constant dense<0.000000e+00> : vector<112x84xf32>
    %28 = tpu.matmul %25, %27, %cst_29 {dimension_numbers = #tpu.dot_dimension_numbers<[1], [0], [0], [1], [0, 0, 1, 1], [], []>} : vector<112x32xf32>, vector<32x84xf32>, vector<112x84xf32> -> vector<112x84xf32>
    %29 = arith.addf %22, %28 : vector<112x84xf32>
    %c4 = arith.constant 4 : index
    %c0_30 = arith.constant 0 : index
    %c0_31 = arith.constant 0 : index
    %30 = vector.load %arg2[%c4, %c0_30, %c0_31] : memref<6x112x256xf32, #tpu.memory_space<vmem>>, vector<1x112x256xf32>
    %31 = vector.shape_cast %30 : vector<1x112x256xf32> to vector<112x256xf32>
    %cst_32 = arith.constant dense<0.000000e+00> : vector<112x32xf32>
    %32 = tpu.matmul %31, %0, %cst_32 {dimension_numbers = #tpu.dot_dimension_numbers<[1], [0], [0], [1], [0, 0, 1, 1], [], []>} : vector<112x256xf32>, vector<256x32xf32>, vector<112x32xf32> -> vector<112x32xf32>
    %c4_33 = arith.constant 4 : index
    %c0_34 = arith.constant 0 : index
    %c0_35 = arith.constant 0 : index
    %33 = vector.load %arg3[%c4_33, %c0_34, %c0_35] : memref<6x32x84xf32, #tpu.memory_space<vmem>>, vector<1x32x84xf32>
    %34 = vector.shape_cast %33 : vector<1x32x84xf32> to vector<32x84xf32>
    %cst_36 = arith.constant dense<0.000000e+00> : vector<112x84xf32>
    %35 = tpu.matmul %32, %34, %cst_36 {dimension_numbers = #tpu.dot_dimension_numbers<[1], [0], [0], [1], [0, 0, 1, 1], [], []>} : vector<112x32xf32>, vector<32x84xf32>, vector<112x84xf32> -> vector<112x84xf32>
    %36 = arith.addf %29, %35 : vector<112x84xf32>
    %c5 = arith.constant 5 : index
    %c0_37 = arith.constant 0 : index
    %c0_38 = arith.constant 0 : index
    %37 = vector.load %arg2[%c5, %c0_37, %c0_38] : memref<6x112x256xf32, #tpu.memory_space<vmem>>, vector<1x112x256xf32>
    %38 = vector.shape_cast %37 : vector<1x112x256xf32> to vector<112x256xf32>
    %cst_39 = arith.constant dense<0.000000e+00> : vector<112x32xf32>
    %39 = tpu.matmul %38, %0, %cst_39 {dimension_numbers = #tpu.dot_dimension_numbers<[1], [0], [0], [1], [0, 0, 1, 1], [], []>} : vector<112x256xf32>, vector<256x32xf32>, vector<112x32xf32> -> vector<112x32xf32>
    %c5_40 = arith.constant 5 : index
    %c0_41 = arith.constant 0 : index
    %c0_42 = arith.constant 0 : index
    %40 = vector.load %arg3[%c5_40, %c0_41, %c0_42] : memref<6x32x84xf32, #tpu.memory_space<vmem>>, vector<1x32x84xf32>
    %41 = vector.shape_cast %40 : vector<1x32x84xf32> to vector<32x84xf32>
    %cst_43 = arith.constant dense<0.000000e+00> : vector<112x84xf32>
    %42 = tpu.matmul %39, %41, %cst_43 {dimension_numbers = #tpu.dot_dimension_numbers<[1], [0], [0], [1], [0, 0, 1, 1], [], []>} : vector<112x32xf32>, vector<32x84xf32>, vector<112x84xf32> -> vector<112x84xf32>
    %43 = arith.addf %36, %42 : vector<112x84xf32>
    %cst_44 = arith.constant 2.500000e-01 : f32
    %44 = vector.broadcast %cst_44 : f32 to vector<112x84xf32>
    %45 = arith.mulf %43, %44 : vector<112x84xf32>
    %c0_45 = arith.constant 0 : index
    %c0_46 = arith.constant 0 : index
    %46 = vector.load %arg4[%c0_45, %c0_46] : memref<1x84xf32, #tpu.memory_space<vmem>>, vector<1x84xf32>
    %47 = vector.broadcast %46 : vector<1x84xf32> to vector<112x84xf32>
    %48 = arith.addf %45, %47 : vector<112x84xf32>
    %cst_47 = arith.constant 0.000000e+00 : f32
    %49 = vector.broadcast %cst_47 : f32 to vector<112x84xf32>
    %50 = arith.maximumf %48, %49 : vector<112x84xf32>
    %cst_48 = arith.constant 0.000000e+00 : f32
    %51 = vector.broadcast %cst_48 : f32 to vector<40x80xf32>
    %c0_49 = arith.constant 0 : index
    %c0_50 = arith.constant 0 : index
    %c0_51 = arith.constant 0 : index
    %52 = vector.load %arg5[%c0_49, %c0_50, %c0_51] : memref<6x40x112xf32, #tpu.memory_space<vmem>>, vector<1x40x112xf32>
    %53 = vector.shape_cast %52 : vector<1x40x112xf32> to vector<40x112xf32>
    %cst_52 = arith.constant dense<0.000000e+00> : vector<40x84xf32>
    %54 = tpu.matmul %53, %50, %cst_52 {dimension_numbers = #tpu.dot_dimension_numbers<[1], [0], [0], [1], [0, 0, 1, 1], [], []>} : vector<40x112xf32>, vector<112x84xf32>, vector<40x84xf32> -> vector<40x84xf32>
    %c0_53 = arith.constant 0 : index
    %c0_54 = arith.constant 0 : index
    %c0_55 = arith.constant 0 : index
    %55 = vector.load %arg6[%c0_53, %c0_54, %c0_55] : memref<6x84x80xf32, #tpu.memory_space<vmem>>, vector<1x84x80xf32>
    %56 = vector.shape_cast %55 : vector<1x84x80xf32> to vector<84x80xf32>
    %cst_56 = arith.constant dense<0.000000e+00> : vector<40x80xf32>
    %57 = tpu.matmul %54, %56, %cst_56 {dimension_numbers = #tpu.dot_dimension_numbers<[1], [0], [0], [1], [0, 0, 1, 1], [], []>} : vector<40x84xf32>, vector<84x80xf32>, vector<40x80xf32> -> vector<40x80xf32>
    %58 = arith.addf %51, %57 : vector<40x80xf32>
    %c1_57 = arith.constant 1 : index
    %c0_58 = arith.constant 0 : index
    %c0_59 = arith.constant 0 : index
    %59 = vector.load %arg5[%c1_57, %c0_58, %c0_59] : memref<6x40x112xf32, #tpu.memory_space<vmem>>, vector<1x40x112xf32>
    %60 = vector.shape_cast %59 : vector<1x40x112xf32> to vector<40x112xf32>
    %cst_60 = arith.constant dense<0.000000e+00> : vector<40x84xf32>
    %61 = tpu.matmul %60, %50, %cst_60 {dimension_numbers = #tpu.dot_dimension_numbers<[1], [0], [0], [1], [0, 0, 1, 1], [], []>} : vector<40x112xf32>, vector<112x84xf32>, vector<40x84xf32> -> vector<40x84xf32>
    %c1_61 = arith.constant 1 : index
    %c0_62 = arith.constant 0 : index
    %c0_63 = arith.constant 0 : index
    %62 = vector.load %arg6[%c1_61, %c0_62, %c0_63] : memref<6x84x80xf32, #tpu.memory_space<vmem>>, vector<1x84x80xf32>
    %63 = vector.shape_cast %62 : vector<1x84x80xf32> to vector<84x80xf32>
    %cst_64 = arith.constant dense<0.000000e+00> : vector<40x80xf32>
    %64 = tpu.matmul %61, %63, %cst_64 {dimension_numbers = #tpu.dot_dimension_numbers<[1], [0], [0], [1], [0, 0, 1, 1], [], []>} : vector<40x84xf32>, vector<84x80xf32>, vector<40x80xf32> -> vector<40x80xf32>
    %65 = arith.addf %58, %64 : vector<40x80xf32>
    %c2_65 = arith.constant 2 : index
    %c0_66 = arith.constant 0 : index
    %c0_67 = arith.constant 0 : index
    %66 = vector.load %arg5[%c2_65, %c0_66, %c0_67] : memref<6x40x112xf32, #tpu.memory_space<vmem>>, vector<1x40x112xf32>
    %67 = vector.shape_cast %66 : vector<1x40x112xf32> to vector<40x112xf32>
    %cst_68 = arith.constant dense<0.000000e+00> : vector<40x84xf32>
    %68 = tpu.matmul %67, %50, %cst_68 {dimension_numbers = #tpu.dot_dimension_numbers<[1], [0], [0], [1], [0, 0, 1, 1], [], []>} : vector<40x112xf32>, vector<112x84xf32>, vector<40x84xf32> -> vector<40x84xf32>
    %c2_69 = arith.constant 2 : index
    %c0_70 = arith.constant 0 : index
    %c0_71 = arith.constant 0 : index
    %69 = vector.load %arg6[%c2_69, %c0_70, %c0_71] : memref<6x84x80xf32, #tpu.memory_space<vmem>>, vector<1x84x80xf32>
    %70 = vector.shape_cast %69 : vector<1x84x80xf32> to vector<84x80xf32>
    %cst_72 = arith.constant dense<0.000000e+00> : vector<40x80xf32>
    %71 = tpu.matmul %68, %70, %cst_72 {dimension_numbers = #tpu.dot_dimension_numbers<[1], [0], [0], [1], [0, 0, 1, 1], [], []>} : vector<40x84xf32>, vector<84x80xf32>, vector<40x80xf32> -> vector<40x80xf32>
    %72 = arith.addf %65, %71 : vector<40x80xf32>
    %c3_73 = arith.constant 3 : index
    %c0_74 = arith.constant 0 : index
    %c0_75 = arith.constant 0 : index
    %73 = vector.load %arg5[%c3_73, %c0_74, %c0_75] : memref<6x40x112xf32, #tpu.memory_space<vmem>>, vector<1x40x112xf32>
    %74 = vector.shape_cast %73 : vector<1x40x112xf32> to vector<40x112xf32>
    %cst_76 = arith.constant dense<0.000000e+00> : vector<40x84xf32>
    %75 = tpu.matmul %74, %50, %cst_76 {dimension_numbers = #tpu.dot_dimension_numbers<[1], [0], [0], [1], [0, 0, 1, 1], [], []>} : vector<40x112xf32>, vector<112x84xf32>, vector<40x84xf32> -> vector<40x84xf32>
    %c3_77 = arith.constant 3 : index
    %c0_78 = arith.constant 0 : index
    %c0_79 = arith.constant 0 : index
    %76 = vector.load %arg6[%c3_77, %c0_78, %c0_79] : memref<6x84x80xf32, #tpu.memory_space<vmem>>, vector<1x84x80xf32>
    %77 = vector.shape_cast %76 : vector<1x84x80xf32> to vector<84x80xf32>
    %cst_80 = arith.constant dense<0.000000e+00> : vector<40x80xf32>
    %78 = tpu.matmul %75, %77, %cst_80 {dimension_numbers = #tpu.dot_dimension_numbers<[1], [0], [0], [1], [0, 0, 1, 1], [], []>} : vector<40x84xf32>, vector<84x80xf32>, vector<40x80xf32> -> vector<40x80xf32>
    %79 = arith.addf %72, %78 : vector<40x80xf32>
    %c4_81 = arith.constant 4 : index
    %c0_82 = arith.constant 0 : index
    %c0_83 = arith.constant 0 : index
    %80 = vector.load %arg5[%c4_81, %c0_82, %c0_83] : memref<6x40x112xf32, #tpu.memory_space<vmem>>, vector<1x40x112xf32>
    %81 = vector.shape_cast %80 : vector<1x40x112xf32> to vector<40x112xf32>
    %cst_84 = arith.constant dense<0.000000e+00> : vector<40x84xf32>
    %82 = tpu.matmul %81, %50, %cst_84 {dimension_numbers = #tpu.dot_dimension_numbers<[1], [0], [0], [1], [0, 0, 1, 1], [], []>} : vector<40x112xf32>, vector<112x84xf32>, vector<40x84xf32> -> vector<40x84xf32>
    %c4_85 = arith.constant 4 : index
    %c0_86 = arith.constant 0 : index
    %c0_87 = arith.constant 0 : index
    %83 = vector.load %arg6[%c4_85, %c0_86, %c0_87] : memref<6x84x80xf32, #tpu.memory_space<vmem>>, vector<1x84x80xf32>
    %84 = vector.shape_cast %83 : vector<1x84x80xf32> to vector<84x80xf32>
    %cst_88 = arith.constant dense<0.000000e+00> : vector<40x80xf32>
    %85 = tpu.matmul %82, %84, %cst_88 {dimension_numbers = #tpu.dot_dimension_numbers<[1], [0], [0], [1], [0, 0, 1, 1], [], []>} : vector<40x84xf32>, vector<84x80xf32>, vector<40x80xf32> -> vector<40x80xf32>
    %86 = arith.addf %79, %85 : vector<40x80xf32>
    %c5_89 = arith.constant 5 : index
    %c0_90 = arith.constant 0 : index
    %c0_91 = arith.constant 0 : index
    %87 = vector.load %arg5[%c5_89, %c0_90, %c0_91] : memref<6x40x112xf32, #tpu.memory_space<vmem>>, vector<1x40x112xf32>
    %88 = vector.shape_cast %87 : vector<1x40x112xf32> to vector<40x112xf32>
    %cst_92 = arith.constant dense<0.000000e+00> : vector<40x84xf32>
    %89 = tpu.matmul %88, %50, %cst_92 {dimension_numbers = #tpu.dot_dimension_numbers<[1], [0], [0], [1], [0, 0, 1, 1], [], []>} : vector<40x112xf32>, vector<112x84xf32>, vector<40x84xf32> -> vector<40x84xf32>
    %c5_93 = arith.constant 5 : index
    %c0_94 = arith.constant 0 : index
    %c0_95 = arith.constant 0 : index
    %90 = vector.load %arg6[%c5_93, %c0_94, %c0_95] : memref<6x84x80xf32, #tpu.memory_space<vmem>>, vector<1x84x80xf32>
    %91 = vector.shape_cast %90 : vector<1x84x80xf32> to vector<84x80xf32>
    %cst_96 = arith.constant dense<0.000000e+00> : vector<40x80xf32>
    %92 = tpu.matmul %89, %91, %cst_96 {dimension_numbers = #tpu.dot_dimension_numbers<[1], [0], [0], [1], [0, 0, 1, 1], [], []>} : vector<40x84xf32>, vector<84x80xf32>, vector<40x80xf32> -> vector<40x80xf32>
    %93 = arith.addf %86, %92 : vector<40x80xf32>
    %cst_97 = arith.constant 2.500000e-01 : f32
    %94 = vector.broadcast %cst_97 : f32 to vector<40x80xf32>
    %95 = arith.mulf %93, %94 : vector<40x80xf32>
    %c0_98 = arith.constant 0 : index
    %c0_99 = arith.constant 0 : index
    %96 = vector.load %arg7[%c0_98, %c0_99] : memref<1x80xf32, #tpu.memory_space<vmem>>, vector<1x80xf32>
    %97 = vector.broadcast %96 : vector<1x80xf32> to vector<40x80xf32>
    %98 = arith.addf %95, %97 : vector<40x80xf32>
    %cst_100 = arith.constant 0.000000e+00 : f32
    %99 = vector.broadcast %cst_100 : f32 to vector<40x80xf32>
    %100 = arith.maximumf %98, %99 : vector<40x80xf32>
    %cst_101 = arith.constant 0.000000e+00 : f32
    %101 = vector.broadcast %cst_101 : f32 to vector<8x128xf32>
    %c0_102 = arith.constant 0 : index
    %c0_103 = arith.constant 0 : index
    %102 = vector.load %arg10[%c0_102, %c0_103] : memref<1x128xf32, #tpu.memory_space<vmem>>, vector<1x128xf32>
    %103 = vector.broadcast %102 : vector<1x128xf32> to vector<8x128xf32>
    %104 = arith.addf %101, %103 : vector<8x128xf32>
    %c0_104 = arith.constant 0 : index
    %c0_105 = arith.constant 0 : index
    %c0_106 = arith.constant 0 : index
    %105 = vector.load %arg8[%c0_104, %c0_105, %c0_106] : memref<5x8x40xf32, #tpu.memory_space<vmem>>, vector<1x8x40xf32>
    %106 = vector.shape_cast %105 : vector<1x8x40xf32> to vector<8x40xf32>
    %cst_107 = arith.constant dense<0.000000e+00> : vector<8x80xf32>
    %107 = tpu.matmul %106, %100, %cst_107 {dimension_numbers = #tpu.dot_dimension_numbers<[1], [0], [0], [1], [0, 0, 1, 1], [], []>} : vector<8x40xf32>, vector<40x80xf32>, vector<8x80xf32> -> vector<8x80xf32>
    %c0_108 = arith.constant 0 : index
    %c0_109 = arith.constant 0 : index
    %c0_110 = arith.constant 0 : index
    %108 = vector.load %arg9[%c0_108, %c0_109, %c0_110] : memref<5x80x128xf32, #tpu.memory_space<vmem>>, vector<1x80x128xf32>
    %109 = vector.shape_cast %108 : vector<1x80x128xf32> to vector<80x128xf32>
    %cst_111 = arith.constant dense<0.000000e+00> : vector<8x128xf32>
    %110 = tpu.matmul %107, %109, %cst_111 {dimension_numbers = #tpu.dot_dimension_numbers<[1], [0], [0], [1], [0, 0, 1, 1], [], []>} : vector<8x80xf32>, vector<80x128xf32>, vector<8x128xf32> -> vector<8x128xf32>
    %111 = arith.addf %104, %110 : vector<8x128xf32>
    %c1_112 = arith.constant 1 : index
    %c0_113 = arith.constant 0 : index
    %c0_114 = arith.constant 0 : index
    %112 = vector.load %arg8[%c1_112, %c0_113, %c0_114] : memref<5x8x40xf32, #tpu.memory_space<vmem>>, vector<1x8x40xf32>
    %113 = vector.shape_cast %112 : vector<1x8x40xf32> to vector<8x40xf32>
    %cst_115 = arith.constant dense<0.000000e+00> : vector<8x80xf32>
    %114 = tpu.matmul %113, %100, %cst_115 {dimension_numbers = #tpu.dot_dimension_numbers<[1], [0], [0], [1], [0, 0, 1, 1], [], []>} : vector<8x40xf32>, vector<40x80xf32>, vector<8x80xf32> -> vector<8x80xf32>
    %c1_116 = arith.constant 1 : index
    %c0_117 = arith.constant 0 : index
    %c0_118 = arith.constant 0 : index
    %115 = vector.load %arg9[%c1_116, %c0_117, %c0_118] : memref<5x80x128xf32, #tpu.memory_space<vmem>>, vector<1x80x128xf32>
    %116 = vector.shape_cast %115 : vector<1x80x128xf32> to vector<80x128xf32>
    %cst_119 = arith.constant dense<0.000000e+00> : vector<8x128xf32>
    %117 = tpu.matmul %114, %116, %cst_119 {dimension_numbers = #tpu.dot_dimension_numbers<[1], [0], [0], [1], [0, 0, 1, 1], [], []>} : vector<8x80xf32>, vector<80x128xf32>, vector<8x128xf32> -> vector<8x128xf32>
    %118 = arith.addf %111, %117 : vector<8x128xf32>
    %c2_120 = arith.constant 2 : index
    %c0_121 = arith.constant 0 : index
    %c0_122 = arith.constant 0 : index
    %119 = vector.load %arg8[%c2_120, %c0_121, %c0_122] : memref<5x8x40xf32, #tpu.memory_space<vmem>>, vector<1x8x40xf32>
    %120 = vector.shape_cast %119 : vector<1x8x40xf32> to vector<8x40xf32>
    %cst_123 = arith.constant dense<0.000000e+00> : vector<8x80xf32>
    %121 = tpu.matmul %120, %100, %cst_123 {dimension_numbers = #tpu.dot_dimension_numbers<[1], [0], [0], [1], [0, 0, 1, 1], [], []>} : vector<8x40xf32>, vector<40x80xf32>, vector<8x80xf32> -> vector<8x80xf32>
    %c2_124 = arith.constant 2 : index
    %c0_125 = arith.constant 0 : index
    %c0_126 = arith.constant 0 : index
    %122 = vector.load %arg9[%c2_124, %c0_125, %c0_126] : memref<5x80x128xf32, #tpu.memory_space<vmem>>, vector<1x80x128xf32>
    %123 = vector.shape_cast %122 : vector<1x80x128xf32> to vector<80x128xf32>
    %cst_127 = arith.constant dense<0.000000e+00> : vector<8x128xf32>
    %124 = tpu.matmul %121, %123, %cst_127 {dimension_numbers = #tpu.dot_dimension_numbers<[1], [0], [0], [1], [0, 0, 1, 1], [], []>} : vector<8x80xf32>, vector<80x128xf32>, vector<8x128xf32> -> vector<8x128xf32>
    %125 = arith.addf %118, %124 : vector<8x128xf32>
    %c3_128 = arith.constant 3 : index
    %c0_129 = arith.constant 0 : index
    %c0_130 = arith.constant 0 : index
    %126 = vector.load %arg8[%c3_128, %c0_129, %c0_130] : memref<5x8x40xf32, #tpu.memory_space<vmem>>, vector<1x8x40xf32>
    %127 = vector.shape_cast %126 : vector<1x8x40xf32> to vector<8x40xf32>
    %cst_131 = arith.constant dense<0.000000e+00> : vector<8x80xf32>
    %128 = tpu.matmul %127, %100, %cst_131 {dimension_numbers = #tpu.dot_dimension_numbers<[1], [0], [0], [1], [0, 0, 1, 1], [], []>} : vector<8x40xf32>, vector<40x80xf32>, vector<8x80xf32> -> vector<8x80xf32>
    %c3_132 = arith.constant 3 : index
    %c0_133 = arith.constant 0 : index
    %c0_134 = arith.constant 0 : index
    %129 = vector.load %arg9[%c3_132, %c0_133, %c0_134] : memref<5x80x128xf32, #tpu.memory_space<vmem>>, vector<1x80x128xf32>
    %130 = vector.shape_cast %129 : vector<1x80x128xf32> to vector<80x128xf32>
    %cst_135 = arith.constant dense<0.000000e+00> : vector<8x128xf32>
    %131 = tpu.matmul %128, %130, %cst_135 {dimension_numbers = #tpu.dot_dimension_numbers<[1], [0], [0], [1], [0, 0, 1, 1], [], []>} : vector<8x80xf32>, vector<80x128xf32>, vector<8x128xf32> -> vector<8x128xf32>
    %132 = arith.addf %125, %131 : vector<8x128xf32>
    %c4_136 = arith.constant 4 : index
    %c0_137 = arith.constant 0 : index
    %c0_138 = arith.constant 0 : index
    %133 = vector.load %arg8[%c4_136, %c0_137, %c0_138] : memref<5x8x40xf32, #tpu.memory_space<vmem>>, vector<1x8x40xf32>
    %134 = vector.shape_cast %133 : vector<1x8x40xf32> to vector<8x40xf32>
    %cst_139 = arith.constant dense<0.000000e+00> : vector<8x80xf32>
    %135 = tpu.matmul %134, %100, %cst_139 {dimension_numbers = #tpu.dot_dimension_numbers<[1], [0], [0], [1], [0, 0, 1, 1], [], []>} : vector<8x40xf32>, vector<40x80xf32>, vector<8x80xf32> -> vector<8x80xf32>
    %c4_140 = arith.constant 4 : index
    %c0_141 = arith.constant 0 : index
    %c0_142 = arith.constant 0 : index
    %136 = vector.load %arg9[%c4_140, %c0_141, %c0_142] : memref<5x80x128xf32, #tpu.memory_space<vmem>>, vector<1x80x128xf32>
    %137 = vector.shape_cast %136 : vector<1x80x128xf32> to vector<80x128xf32>
    %cst_143 = arith.constant dense<0.000000e+00> : vector<8x128xf32>
    %138 = tpu.matmul %135, %137, %cst_143 {dimension_numbers = #tpu.dot_dimension_numbers<[1], [0], [0], [1], [0, 0, 1, 1], [], []>} : vector<8x80xf32>, vector<80x128xf32>, vector<8x128xf32> -> vector<8x128xf32>
    %139 = arith.addf %132, %138 : vector<8x128xf32>
    %c0_144 = arith.constant 0 : index
    %c0_145 = arith.constant 0 : index
    %140 = vector.load %arg11[%c0_144, %c0_145] : memref<128x128xf32, #tpu.memory_space<vmem>>, vector<128x128xf32>
    %cst_146 = arith.constant dense<0.000000e+00> : vector<8x128xf32>
    %141 = tpu.matmul %139, %140, %cst_146 {dimension_numbers = #tpu.dot_dimension_numbers<[1], [0], [0], [1], [0, 0, 1, 1], [], []>} : vector<8x128xf32>, vector<128x128xf32>, vector<8x128xf32> -> vector<8x128xf32>
    %c0_147 = arith.constant 0 : index
    %c0_148 = arith.constant 0 : index
    %142 = vector.load %arg12[%c0_147, %c0_148] : memref<1x128xf32, #tpu.memory_space<vmem>>, vector<1x128xf32>
    %143 = vector.broadcast %142 : vector<1x128xf32> to vector<8x128xf32>
    %144 = arith.addf %141, %143 : vector<8x128xf32>
    %c0_149 = arith.constant 0 : index
    %c0_150 = arith.constant 0 : index
    %145 = vector.load %arg13[%c0_149, %c0_150] : memref<128x128xf32, #tpu.memory_space<vmem>>, vector<128x128xf32>
    %cst_151 = arith.constant dense<0.000000e+00> : vector<8x128xf32>
    %146 = tpu.matmul %144, %145, %cst_151 {dimension_numbers = #tpu.dot_dimension_numbers<[1], [0], [0], [1], [0, 0, 1, 1], [], []>} : vector<8x128xf32>, vector<128x128xf32>, vector<8x128xf32> -> vector<8x128xf32>
    %c0_152 = arith.constant 0 : index
    %c0_153 = arith.constant 0 : index
    %147 = vector.load %arg14[%c0_152, %c0_153] : memref<1x128xf32, #tpu.memory_space<vmem>>, vector<1x128xf32>
    %148 = vector.broadcast %147 : vector<1x128xf32> to vector<8x128xf32>
    %149 = arith.addf %146, %148 : vector<8x128xf32>
    %c0_154 = arith.constant 0 : index
    %c0_155 = arith.constant 0 : index
    %150 = vector.load %arg15[%c0_154, %c0_155] : memref<8x128xf32, #tpu.memory_space<vmem>>, vector<8x128xf32>
    tpu.vector_store %arg15[%c0_154, %c0_155], %149 {strides = array<i32>} : memref<8x128xf32, #tpu.memory_space<vmem>>, vector<8x128xf32>,
    return
  }
  func.func @transform_0(%arg0: i32) -> (i32, i32) {
    %c0_i32 = arith.constant 0 : i32
    %c0_i32_0 = arith.constant 0 : i32
    return %arg0, %c0_i32 : i32, i32
  }
  func.func @transform_1(%arg0: i32) -> (i32, i32, i32) {
    %c0_i32 = arith.constant 0 : i32
    %c0_i32_0 = arith.constant 0 : i32
    %c0_i32_1 = arith.constant 0 : i32
    %c0_i32_2 = arith.constant 0 : i32
    return %c0_i32, %c0_i32_0, %c0_i32_1 : i32, i32, i32
  }
  func.func @transform_2(%arg0: i32) -> (i32, i32, i32) {
    %c0_i32 = arith.constant 0 : i32
    %c0_i32_0 = arith.constant 0 : i32
    %c0_i32_1 = arith.constant 0 : i32
    %c0_i32_2 = arith.constant 0 : i32
    return %c0_i32, %c0_i32_0, %c0_i32_1 : i32, i32, i32
  }
  func.func @transform_3(%arg0: i32) -> (i32, i32) {
    %c0_i32 = arith.constant 0 : i32
    %c0_i32_0 = arith.constant 0 : i32
    %c0_i32_1 = arith.constant 0 : i32
    return %c0_i32, %c0_i32_0 : i32, i32
  }
  func.func @transform_4(%arg0: i32) -> (i32, i32, i32) {
    %c0_i32 = arith.constant 0 : i32
    %c0_i32_0 = arith.constant 0 : i32
    %c0_i32_1 = arith.constant 0 : i32
    %c0_i32_2 = arith.constant 0 : i32
    return %c0_i32, %c0_i32_0, %c0_i32_1 : i32, i32, i32
  }
  func.func @transform_5(%arg0: i32) -> (i32, i32, i32) {
    %c0_i32 = arith.constant 0 : i32
    %c0_i32_0 = arith.constant 0 : i32
    %c0_i32_1 = arith.constant 0 : i32
    %c0_i32_2 = arith.constant 0 : i32
    return %c0_i32, %c0_i32_0, %c0_i32_1 : i32, i32, i32
  }
  func.func @transform_6(%arg0: i32) -> (i32, i32) {
    %c0_i32 = arith.constant 0 : i32
    %c0_i32_0 = arith.constant 0 : i32
    %c0_i32_1 = arith.constant 0 : i32
    return %c0_i32, %c0_i32_0 : i32, i32
  }
  func.func @transform_7(%arg0: i32) -> (i32, i32, i32) {
    %c0_i32 = arith.constant 0 : i32
    %c0_i32_0 = arith.constant 0 : i32
    %c0_i32_1 = arith.constant 0 : i32
    %c0_i32_2 = arith.constant 0 : i32
    return %c0_i32, %c0_i32_0, %c0_i32_1 : i32, i32, i32
  }
  func.func @transform_8(%arg0: i32) -> (i32, i32, i32) {
    %c0_i32 = arith.constant 0 : i32
    %c0_i32_0 = arith.constant 0 : i32
    %c0_i32_1 = arith.constant 0 : i32
    %c0_i32_2 = arith.constant 0 : i32
    return %c0_i32, %c0_i32_0, %c0_i32_1 : i32, i32, i32
  }
  func.func @transform_9(%arg0: i32) -> (i32, i32) {
    %c0_i32 = arith.constant 0 : i32
    %c0_i32_0 = arith.constant 0 : i32
    %c0_i32_1 = arith.constant 0 : i32
    return %c0_i32, %c0_i32_0 : i32, i32
  }
  func.func @transform_10(%arg0: i32) -> (i32, i32) {
    %c0_i32 = arith.constant 0 : i32
    %c0_i32_0 = arith.constant 0 : i32
    %c0_i32_1 = arith.constant 0 : i32
    return %c0_i32, %c0_i32_0 : i32, i32
  }
  func.func @transform_11(%arg0: i32) -> (i32, i32) {
    %c0_i32 = arith.constant 0 : i32
    %c0_i32_0 = arith.constant 0 : i32
    %c0_i32_1 = arith.constant 0 : i32
    return %c0_i32, %c0_i32_0 : i32, i32
  }
  func.func @transform_12(%arg0: i32) -> (i32, i32) {
    %c0_i32 = arith.constant 0 : i32
    %c0_i32_0 = arith.constant 0 : i32
    %c0_i32_1 = arith.constant 0 : i32
    return %c0_i32, %c0_i32_0 : i32, i32
  }
  func.func @transform_13(%arg0: i32) -> (i32, i32) {
    %c0_i32 = arith.constant 0 : i32
    %c0_i32_0 = arith.constant 0 : i32
    %c0_i32_1 = arith.constant 0 : i32
    return %c0_i32, %c0_i32_0 : i32, i32
  }
  func.func @transform_14(%arg0: i32) -> (i32, i32) {
    %c0_i32 = arith.constant 0 : i32
    %c0_i32_0 = arith.constant 0 : i32
    return %arg0, %c0_i32 : i32, i32
  }
}

</mosaic_0001>

<llo_original>
// kernel: lenet_forward.1
$region0: #{lenet_forward.1}
  #allocation0 [shape = 'u32[]', space=smem, size = 0x4, offset = 0x4, fixed_abs, tag = 'smem constant byte address 0x4 - core index']
  #allocation1 [shape = 'u32[144,128]{1,0:T(1,128)}', space=vmem, size = 0x12000, scoped, tag = 'internal scratch']
  %s0 = inlined_call_operand.vmem [shape: f32[256,32], index: 0, kind: input, shape index: {}]
  %s1 = inlined_call_operand.vmem [shape: f32[6,112,256], index: 1, kind: input, shape index: {}]
  %s2 = inlined_call_operand.hbm [shape: f32[6,32,84], index: 2, kind: input, shape index: {}]
  %s3 = inlined_call_operand.vmem [shape: f32[1,84], index: 3, kind: input, shape index: {}]
  %s4 = inlined_call_operand.vmem [shape: f32[6,40,112], index: 4, kind: input, shape index: {}]
  %s5 = inlined_call_operand.vmem [shape: f32[6,84,80], index: 5, kind: input, shape index: {}]
  %s6 = inlined_call_operand.vmem [shape: f32[1,80], index: 6, kind: input, shape index: {}]
  %s7 = inlined_call_operand.hbm [shape: f32[5,8,40], index: 7, kind: input, shape index: {}]
  %s8 = inlined_call_operand.hbm [shape: f32[5,80,128], index: 8, kind: input, shape index: {}]
  %s9 = inlined_call_operand.vmem [shape: f32[1,128], index: 9, kind: input, shape index: {}]
  %s10 = inlined_call_operand.hbm [shape: f32[128,128], index: 10, kind: input, shape index: {}]
  %s11 = inlined_call_operand.vmem [shape: f32[1,128], index: 11, kind: input, shape index: {}]
  %s12 = inlined_call_operand.hbm [shape: f32[128,128], index: 12, kind: input, shape index: {}]
  %s13 = inlined_call_operand.vmem [shape: f32[1,128], index: 13, kind: input, shape index: {}]
  %s14 = inlined_call_operand.vmem [shape: f32[8,128], index: 14, kind: output, shape index: {}]
  %s15 = sld [smem:[#allocation0]]
  $region86: #{lenet_forward.1} parent=0
    _
  %s17 = ssub.s32 1, %s15
  %s18 = scalar_select 0, %s17, %s15
  $region1: #{lenet_forward.1} parent=0
    #allocation2 [shape = 'u8[98304]{0}', space=vmem, size = 0x18000, scoped, tag = 'input window, operand 2, single buffered']
    #allocation3 [shape = 's32[1]{0}', space=sflag, size = 0x4, scoped, tag = 'scoped memory for lenet_forward.1']
    #allocation4 [shape = 'u8[20480]{0}', space=vmem, size = 0x5000, scoped, tag = 'input window, operand 7, single buffered']
    #allocation5 [shape = 's32[1]{0}', space=sflag, size = 0x4, scoped, tag = 'scoped memory for lenet_forward.1']
    #allocation6 [shape = 'u8[204800]{0}', space=vmem, size = 0x32000, scoped, tag = 'input window, operand 8, single buffered']
    #allocation7 [shape = 'u8[65536]{0}', space=vmem, size = 0x10000, scoped, tag = 'input window, operand 10, single buffered']
    #allocation8 [shape = 's32[1]{0}', space=sflag, size = 0x4, scoped, tag = 'scoped memory for lenet_forward.1']
    #allocation9 [shape = 'u8[65536]{0}', space=vmem, size = 0x10000, scoped, tag = 'input window, operand 12, single buffered']
    %19 = vsyncpa [#allocation3], 0
    %20 = vsyncpa [#allocation5], 0
    %21 = vsyncpa [#allocation8], 0
    // Predicated region
    $region2: #{lenet_forward.1} parent=1 // pred_check
      _
    $region3: #{lenet_forward.1} parent=1 // pred_check_branch
      %23 = sbr.rel (0) target = $region5
    $region4: #{lenet_forward.1} parent=1 // pred_region
      _
    $region5: #{lenet_forward.1} parent=1 // pred_fallthru
      _
    // Predicated region
    $region6: #{lenet_forward.1} parent=1 // pred_check
      _
    $region7: #{lenet_forward.1} parent=1 // pred_check_branch
      %25 = sbr.rel (0) target = $region9
    $region8: #{lenet_forward.1} parent=1 // pred_region
      _
    $region9: #{lenet_forward.1} parent=1 // pred_fallthru
      _
    // Predicated region
    $region10: #{lenet_forward.1} parent=1 // pred_check
      _
    $region11: #{lenet_forward.1} parent=1 // pred_check_branch
      %27 = sbr.rel (0) target = $region13
    $region12: #{lenet_forward.1} parent=1 // pred_region
      %s29 = ssub.s32 3072, 3072
      %30 = vsyncadd [#allocation3], %s29
      %s31 = sshll.u32 [#allocation2], 4
      %s32 = int_to_ptr.vmem [resolvable:$true] %s31
      %37 = dma.hbm_to_vmem [thread:$0]  %s2, 3072, %s32, [#allocation3], 128, 128, 8
    $region13: #{lenet_forward.1} parent=1 // pred_fallthru
      _
    // Predicated region
    $region14: #{lenet_forward.1} parent=1 // pred_check
      _
    $region15: #{lenet_forward.1} parent=1 // pred_check_branch
      %39 = sbr.rel (0) target = $region17
    $region16: #{lenet_forward.1} parent=1 // pred_region
      _
    $region17: #{lenet_forward.1} parent=1 // pred_fallthru
      _
    // Predicated region
    $region18: #{lenet_forward.1} parent=1 // pred_check
      _
    $region19: #{lenet_forward.1} parent=1 // pred_check_branch
      %41 = sbr.rel (0) target = $region21
    $region20: #{lenet_forward.1} parent=1 // pred_region
      _
    $region21: #{lenet_forward.1} parent=1 // pred_fallthru
      _
    // Predicated region
    $region22: #{lenet_forward.1} parent=1 // pred_check
      _
    $region23: #{lenet_forward.1} parent=1 // pred_check_branch
      %43 = sbr.rel (0) target = $region25
    $region24: #{lenet_forward.1} parent=1 // pred_region
      _
    $region25: #{lenet_forward.1} parent=1 // pred_fallthru
      _
    // Predicated region
    $region26: #{lenet_forward.1} parent=1 // pred_check
      _
    $region27: #{lenet_forward.1} parent=1 // pred_check_branch
      %45 = sbr.rel (0) target = $region29
    $region28: #{lenet_forward.1} parent=1 // pred_region
      _
    $region29: #{lenet_forward.1} parent=1 // pred_fallthru
      _
    // Predicated region
    $region30: #{lenet_forward.1} parent=1 // pred_check
      _
    $region31: #{lenet_forward.1} parent=1 // pred_check_branch
      %47 = sbr.rel (0) target = $region33
    $region32: #{lenet_forward.1} parent=1 // pred_region
      %s49 = ssub.s32 640, 640
      %50 = vsyncadd [#allocation5], %s49
      %s51 = sshll.u32 [#allocation4], 4
      %s52 = int_to_ptr.vmem [resolvable:$true] %s51
      %57 = dma.hbm_to_vmem [thread:$0]  %s7, 640, %s52, [#allocation5], 128, 128, 8
    $region33: #{lenet_forward.1} parent=1 // pred_fallthru
      _
    // Predicated region
    $region34: #{lenet_forward.1} parent=1 // pred_check
      _
    $region35: #{lenet_forward.1} parent=1 // pred_check_branch
      %59 = sbr.rel (0) target = $region37
    $region36: #{lenet_forward.1} parent=1 // pred_region
      %s61 = ssub.s32 6400, 6400
      %62 = vsyncadd [#allocation5], %s61
      %s63 = sshll.u32 [#allocation6], 4
      %s64 = int_to_ptr.vmem [resolvable:$true] %s63
      %69 = dma.hbm_to_vmem [thread:$0]  %s8, 6400, %s64, [#allocation5], 128, 128, 8
    $region37: #{lenet_forward.1} parent=1 // pred_fallthru
      _
    // Predicated region
    $region38: #{lenet_forward.1} parent=1 // pred_check
      _
    $region39: #{lenet_forward.1} parent=1 // pred_check_branch
      %71 = sbr.rel (0) target = $region41
    $region40: #{lenet_forward.1} parent=1 // pred_region
      _
    $region41: #{lenet_forward.1} parent=1 // pred_fallthru
      _
    // Predicated region
    $region42: #{lenet_forward.1} parent=1 // pred_check
      _
    $region43: #{lenet_forward.1} parent=1 // pred_check_branch
      %73 = sbr.rel (0) target = $region45
    $region44: #{lenet_forward.1} parent=1 // pred_region
      %s75 = ssub.s32 2048, 2048
      %76 = vsyncadd [#allocation8], %s75
      %s77 = sshll.u32 [#allocation7], 4
      %s78 = int_to_ptr.vmem [resolvable:$true] %s77
      %83 = dma.hbm_to_vmem [thread:$0]  %s10, 2048, %s78, [#allocation8], 128, 128, 8
    $region45: #{lenet_forward.1} parent=1 // pred_fallthru
      _
    // Predicated region
    $region46: #{lenet_forward.1} parent=1 // pred_check
      _
    $region47: #{lenet_forward.1} parent=1 // pred_check_branch
      %85 = sbr.rel (0) target = $region49
    $region48: #{lenet_forward.1} parent=1 // pred_region
      _
    $region49: #{lenet_forward.1} parent=1 // pred_fallthru
      _
    // Predicated region
    $region50: #{lenet_forward.1} parent=1 // pred_check
      _
    $region51: #{lenet_forward.1} parent=1 // pred_check_branch
      %87 = sbr.rel (0) target = $region53
    $region52: #{lenet_forward.1} parent=1 // pred_region
      %s89 = ssub.s32 2048, 2048
      %90 = vsyncadd [#allocation8], %s89
      %s91 = sshll.u32 [#allocation9], 4
      %s92 = int_to_ptr.vmem [resolvable:$true] %s91
      %97 = dma.hbm_to_vmem [thread:$0]  %s12, 2048, %s92, [#allocation8], 128, 128, 8
    $region53: #{lenet_forward.1} parent=1 // pred_fallthru
      _
    // Predicated region
    $region54: #{lenet_forward.1} parent=1 // pred_check
      _
    $region55: #{lenet_forward.1} parent=1 // pred_check_branch
      %99 = sbr.rel (0) target = $region57
    $region56: #{lenet_forward.1} parent=1 // pred_region
      _
    $region57: #{lenet_forward.1} parent=1 // pred_fallthru
      _
    // Predicated region
    $region58: #{lenet_forward.1} parent=1 // pred_check
      _
    $region59: #{lenet_forward.1} parent=1 // pred_check_branch
      %101 = sbr.rel (0) target = $region61
    $region60: #{lenet_forward.1} parent=1 // pred_region
      %102 = dma.done [#allocation3], 3072
    $region61: #{lenet_forward.1} parent=1 // pred_fallthru
      _
    // Predicated region
    $region62: #{lenet_forward.1} parent=1 // pred_check
      _
    $region63: #{lenet_forward.1} parent=1 // pred_check_branch
      %104 = sbr.rel (0) target = $region65
    $region64: #{lenet_forward.1} parent=1 // pred_region
      %105 = dma.done [#allocation5], 640
    $region65: #{lenet_forward.1} parent=1 // pred_fallthru
      _
    // Predicated region
    $region66: #{lenet_forward.1} parent=1 // pred_check
      _
    $region67: #{lenet_forward.1} parent=1 // pred_check_branch
      %107 = sbr.rel (0) target = $region69
    $region68: #{lenet_forward.1} parent=1 // pred_region
      %108 = dma.done [#allocation5], 6400
    $region69: #{lenet_forward.1} parent=1 // pred_fallthru
      _
    // Predicated region
    $region70: #{lenet_forward.1} parent=1 // pred_check
      _
    $region71: #{lenet_forward.1} parent=1 // pred_check_branch
      %110 = sbr.rel (0) target = $region73
    $region72: #{lenet_forward.1} parent=1 // pred_region
      %111 = dma.done [#allocation8], 2048
    $region73: #{lenet_forward.1} parent=1 // pred_fallthru
      _
    // Predicated region
    $region74: #{lenet_forward.1} parent=1 // pred_check
      _
    $region75: #{lenet_forward.1} parent=1 // pred_check_branch
      %113 = sbr.rel (0) target = $region77
    $region76: #{lenet_forward.1} parent=1 // pred_region
      %114 = dma.done [#allocation8], 2048
    $region77: #{lenet_forward.1} parent=1 // pred_fallthru
      _
    %v115 = vld [vmem:[%s0] sm:$0xff]
    %v116 = vld [vmem:[%s0 + $0x8] sm:$0xff]
    %v117 = vld [vmem:[%s0 + $0x10] sm:$0xff]
    %v118 = vld [vmem:[%s0 + $0x18] sm:$0xff]
    %v119 = vld [vmem:[%s0 + $0x20] sm:$0xff]
    %v120 = vld [vmem:[%s0 + $0x28] sm:$0xff]
    %v121 = vld [vmem:[%s0 + $0x30] sm:$0xff]
    %v122 = vld [vmem:[%s0 + $0x38] sm:$0xff]
    %v123 = vld [vmem:[%s0 + $0x40] sm:$0xff]
    %v124 = vld [vmem:[%s0 + $0x48] sm:$0xff]
    %v125 = vld [vmem:[%s0 + $0x50] sm:$0xff]
    %v126 = vld [vmem:[%s0 + $0x58] sm:$0xff]
    %v127 = vld [vmem:[%s0 + $0x60] sm:$0xff]
    %v128 = vld [vmem:[%s0 + $0x68] sm:$0xff]
    %v129 = vld [vmem:[%s0 + $0x70] sm:$0xff]
    %v130 = vld [vmem:[%s0 + $0x78] sm:$0xff]
    %v131 = vld [vmem:[%s0 + $0x80] sm:$0xff]
    %v132 = vld [vmem:[%s0 + $0x88] sm:$0xff]
    %v133 = vld [vmem:[%s0 + $0x90] sm:$0xff]
    %v134 = vld [vmem:[%s0 + $0x98] sm:$0xff]
    %v135 = vld [vmem:[%s0 + $0xa0] sm:$0xff]
    %v136 = vld [vmem:[%s0 + $0xa8] sm:$0xff]
    %v137 = vld [vmem:[%s0 + $0xb0] sm:$0xff]
    %v138 = vld [vmem:[%s0 + $0xb8] sm:$0xff]
    %v139 = vld [vmem:[%s0 + $0xc0] sm:$0xff]
    %v140 = vld [vmem:[%s0 + $0xc8] sm:$0xff]
    %v141 = vld [vmem:[%s0 + $0xd0] sm:$0xff]
    %v142 = vld [vmem:[%s0 + $0xd8] sm:$0xff]
    %v143 = vld [vmem:[%s0 + $0xe0] sm:$0xff]
    %v144 = vld [vmem:[%s0 + $0xe8] sm:$0xff]
    %v145 = vld [vmem:[%s0 + $0xf0] sm:$0xff]
    %v146 = vld [vmem:[%s0 + $0xf8] sm:$0xff]
    %v147 = vld [vmem:[%s1] sm:$0xff]
    %v148 = vld [vmem:[%s1 + $0x8] sm:$0xff]
    %v149 = vld [vmem:[%s1 + $0x10] sm:$0xff]
    %v150 = vld [vmem:[%s1 + $0x18] sm:$0xff]
    %v151 = vld [vmem:[%s1 + $0x20] sm:$0xff]
    %v152 = vld [vmem:[%s1 + $0x28] sm:$0xff]
    %v153 = vld [vmem:[%s1 + $0x30] sm:$0xff]
    %v154 = vld [vmem:[%s1 + $0x38] sm:$0xff]
    %v155 = vld [vmem:[%s1 + $0x40] sm:$0xff]
    %v156 = vld [vmem:[%s1 + $0x48] sm:$0xff]
    %v157 = vld [vmem:[%s1 + $0x50] sm:$0xff]
    %v158 = vld [vmem:[%s1 + $0x58] sm:$0xff]
    %v159 = vld [vmem:[%s1 + $0x60] sm:$0xff]
    %v160 = vld [vmem:[%s1 + $0x68] sm:$0xff]
    %v161 = vld [vmem:[%s1 + $0x70] sm:$0xff]
    %v162 = vld [vmem:[%s1 + $0x78] sm:$0xff]
    %v163 = vld [vmem:[%s1 + $0x80] sm:$0xff]
    %v164 = vld [vmem:[%s1 + $0x88] sm:$0xff]
    %v165 = vld [vmem:[%s1 + $0x90] sm:$0xff]
    %v166 = vld [vmem:[%s1 + $0x98] sm:$0xff]
    %v167 = vld [vmem:[%s1 + $0xa0] sm:$0xff]
    %v168 = vld [vmem:[%s1 + $0xa8] sm:$0xff]
    %v169 = vld [vmem:[%s1 + $0xb0] sm:$0xff]
    %v170 = vld [vmem:[%s1 + $0xb8] sm:$0xff]
    %v171 = vld [vmem:[%s1 + $0xc0] sm:$0xff]
    %v172 = vld [vmem:[%s1 + $0xc8] sm:$0xff]
    %v173 = vld [vmem:[%s1 + $0xd0] sm:$0xff]
    %v174 = vld [vmem:[%s1 + $0xd8] sm:$0xff]
    %175 = vmatprep.subr.mxu0 0.0
    %176 = vmatpush1.msra.mxu0 %v115
    %177 = vmatprep.subr.mxu0 0.0
    %178 = vmatpush1.msra.mxu0 %v116
    %179 = vmatprep.subr.mxu0 0.0
    %180 = vmatpush1.msra.mxu0 %v117
    %181 = vmatprep.subr.mxu0 0.0
    %182 = vmatpush1.msra.mxu0 %v118
    %183 = vmatprep.subr.mxu0 0.0
    %184 = vmatpush1.msra.mxu0 %v119
    %185 = vmatprep.subr.mxu0 0.0
    %186 = vmatpush1.msra.mxu0 %v120
    %187 = vmatprep.subr.mxu0 0.0
    %188 = vmatpush1.msra.mxu0 %v121
    %189 = vmatprep.subr.mxu0 0.0
    %190 = vmatpush1.msra.mxu0 %v122
    %191 = vmatprep.subr.mxu0 0.0
    %192 = vmatpush1.msra.mxu0 %v123
    %193 = vmatprep.subr.mxu0 0.0
    %194 = vmatpush1.msra.mxu0 %v124
    %195 = vmatprep.subr.mxu0 0.0
    %196 = vmatpush1.msra.mxu0 %v125
    %197 = vmatprep.subr.mxu0 0.0
    %198 = vmatpush1.msra.mxu0 %v126
    %199 = vmatprep.subr.mxu0 0.0
    %200 = vmatpush1.msra.mxu0 %v127
    %201 = vmatprep.subr.mxu0 0.0
    %202 = vmatpush1.msra.mxu0 %v128
    %203 = vmatprep.subr.mxu0 0.0
    %204 = vmatpush1.msra.mxu0 %v129
    %205 = vmatprep.subr.mxu0 0.0
    %206 = vmatpush1.msra.mxu0 %v130
    %207 = vmatprep.subr.mxu0 0.0
    %208 = vmatpush1.msra.mxu0 %v131
    %209 = vmatprep.subr.mxu0 0.0
    %210 = vmatpush1.msra.mxu0 %v132
    %211 = vmatprep.subr.mxu0 0.0
    %212 = vmatpush1.msra.mxu0 %v133
    %213 = vmatprep.subr.mxu0 0.0
    %214 = vmatpush1.msra.mxu0 %v134
    %215 = vmatprep.subr.mxu0 0.0
    %216 = vmatpush1.msra.mxu0 %v135
    %217 = vmatprep.subr.mxu0 0.0
    %218 = vmatpush1.msra.mxu0 %v136
    %219 = vmatprep.subr.mxu0 0.0
    %220 = vmatpush1.msra.mxu0 %v137
    %221 = vmatprep.subr.mxu0 0.0
    %222 = vmatpush1.msra.mxu0 %v138
    %223 = vmatprep.subr.mxu0 0.0
    %224 = vmatpush1.msra.mxu0 %v139
    %225 = vmatprep.subr.mxu0 0.0
    %226 = vmatpush1.msra.mxu0 %v140
    %227 = vmatprep.subr.mxu0 0.0
    %228 = vmatpush1.msra.mxu0 %v141
    %229 = vmatprep.subr.mxu0 0.0
    %230 = vmatpush1.msra.mxu0 %v142
    %231 = vmatprep.subr.mxu0 0.0
    %232 = vmatpush1.msra.mxu0 %v143
    %233 = vmatprep.subr.mxu0 0.0
    %234 = vmatpush1.msra.mxu0 %v144
    %235 = vmatprep.subr.mxu0 0.0
    %236 = vmatpush1.msra.mxu0 %v145
    %237 = vmatprep.subr.mxu0 0.0
    %238 = vmatpush1.msra.mxu0 %v146
    %239 = vmatprep.mubr.f32.mxu0 %v148
    %240 = vmatmul.mubr.f32.gmra.mrb[0].mxu0 %v147
    %v241 = vpop.f32.mrb[0].mxu0
    %v242 = vadd.f32 0.0, %v241
    %v243 = vpop.f32.mrb[0].mxu0
    %244 = vmatprep.mubr.f32.mxu0 %v150
    %245 = vmatmul.mubr.f32.gmra.mrb[0].mxu0 %v149
    %v246 = vpop.f32.mrb[0].mxu0
    %v247 = vadd.f32 0.0, %v246
    %v248 = vpop.f32.mrb[0].mxu0
    %249 = vmatprep.mubr.f32.mxu0 %v152
    %250 = vmatmul.mubr.f32.gmra.mrb[0].mxu0 %v151
    %v251 = vpop.f32.mrb[0].mxu0
    %v252 = vadd.f32 0.0, %v251
    %v253 = vpop.f32.mrb[0].mxu0
    %254 = vmatprep.mubr.f32.mxu0 %v154
    %255 = vmatmul.mubr.f32.gmra.mrb[0].mxu0 %v153
    %v256 = vpop.f32.mrb[0].mxu0
    %v257 = vadd.f32 0.0, %v256
    %v258 = vpop.f32.mrb[0].mxu0
    %259 = vmatprep.mubr.f32.mxu0 %v156
    %260 = vmatmul.mubr.f32.gmra.mrb[0].mxu0 %v155
    %v261 = vpop.f32.mrb[0].mxu0
    %v262 = vadd.f32 0.0, %v261
    %v263 = vpop.f32.mrb[0].mxu0
    %264 = vmatprep.mubr.f32.mxu0 %v158
    %265 = vmatmul.mubr.f32.gmra.mrb[0].mxu0 %v157
    %v266 = vpop.f32.mrb[0].mxu0
    %v267 = vadd.f32 0.0, %v266
    %v268 = vpop.f32.mrb[0].mxu0
    %269 = vmatprep.mubr.f32.mxu0 %v160
    %270 = vmatmul.mubr.f32.gmra.mrb[0].mxu0 %v159
    %v271 = vpop.f32.mrb[0].mxu0
    %v272 = vadd.f32 0.0, %v271
    %v273 = vpop.f32.mrb[0].mxu0
    %274 = vmatprep.mubr.f32.mxu0 %v162
    %275 = vmatmul.mubr.f32.gmra.mrb[0].mxu0 %v161
    %v276 = vpop.f32.mrb[0].mxu0
    %v277 = vadd.f32 0.0, %v276
    %v278 = vpop.f32.mrb[0].mxu0
    %279 = vmatprep.mubr.f32.mxu0 %v164
    %280 = vmatmul.mubr.f32.gmra.mrb[0].mxu0 %v163
    %v281 = vpop.f32.mrb[0].mxu0
    %v282 = vadd.f32 0.0, %v281
    %v283 = vpop.f32.mrb[0].mxu0
    %284 = vmatprep.mubr.f32.mxu0 %v166
    %285 = vmatmul.mubr.f32.gmra.mrb[0].mxu0 %v165
    %v286 = vpop.f32.mrb[0].mxu0
    %v287 = vadd.f32 0.0, %v286
    %v288 = vpop.f32.mrb[0].mxu0
    %289 = vmatprep.mubr.f32.mxu0 %v168
    %290 = vmatmul.mubr.f32.gmra.mrb[0].mxu0 %v167
    %v291 = vpop.f32.mrb[0].mxu0
    %v292 = vadd.f32 0.0, %v291
    %v293 = vpop.f32.mrb[0].mxu0
    %294 = vmatprep.mubr.f32.mxu0 %v170
    %295 = vmatmul.mubr.f32.gmra.mrb[0].mxu0 %v169
    %v296 = vpop.f32.mrb[0].mxu0
    %v297 = vadd.f32 0.0, %v296
    %v298 = vpop.f32.mrb[0].mxu0
    %299 = vmatprep.mubr.f32.mxu0 %v172
    %300 = vmatmul.mubr.f32.gmra.mrb[0].mxu0 %v171
    %v301 = vpop.f32.mrb[0].mxu0
    %v302 = vadd.f32 0.0, %v301
    %v303 = vpop.f32.mrb[0].mxu0
    %304 = vmatprep.mubr.f32.mxu0 %v174
    %305 = vmatmul.mubr.f32.gmra.mrb[0].mxu0 %v173
    %v306 = vpop.f32.mrb[0].mxu0
    %v307 = vadd.f32 0.0, %v306
    %v308 = vpop.f32.mrb[0].mxu0
    %309 = vdwg.mxu0
    %v310 = vld [vmem:[#allocation2] sm:$0xff]
    %v311 = vld [vmem:[#allocation2 + $0x8] sm:$0xff]
    %v312 = vld [vmem:[#allocation2 + $0x10] sm:$0xff]
    %v313 = vld [vmem:[#allocation2 + $0x18] sm:$0xff]
    %s314 = scalar_lea.vmem %s1, 224
    %v315 = vld [vmem:[%s314] sm:$0xff]
    %v316 = vld [vmem:[%s314 + $0x8] sm:$0xff]
    %v317 = vld [vmem:[%s314 + $0x10] sm:$0xff]
    %v318 = vld [vmem:[%s314 + $0x18] sm:$0xff]
    %v319 = vld [vmem:[%s314 + $0x20] sm:$0xff]
    %v320 = vld [vmem:[%s314 + $0x28] sm:$0xff]
    %v321 = vld [vmem:[%s314 + $0x30] sm:$0xff]
    %v322 = vld [vmem:[%s314 + $0x38] sm:$0xff]
    %v323 = vld [vmem:[%s314 + $0x40] sm:$0xff]
    %v324 = vld [vmem:[%s314 + $0x48] sm:$0xff]
    %v325 = vld [vmem:[%s314 + $0x50] sm:$0xff]
    %v326 = vld [vmem:[%s314 + $0x58] sm:$0xff]
    %v327 = vld [vmem:[%s314 + $0x60] sm:$0xff]
    %v328 = vld [vmem:[%s314 + $0x68] sm:$0xff]
    %v329 = vld [vmem:[%s314 + $0x70] sm:$0xff]
    %v330 = vld [vmem:[%s314 + $0x78] sm:$0xff]
    %v331 = vld [vmem:[%s314 + $0x80] sm:$0xff]
    %v332 = vld [vmem:[%s314 + $0x88] sm:$0xff]
    %v333 = vld [vmem:[%s314 + $0x90] sm:$0xff]
    %v334 = vld [vmem:[%s314 + $0x98] sm:$0xff]
    %v335 = vld [vmem:[%s314 + $0xa0] sm:$0xff]
    %v336 = vld [vmem:[%s314 + $0xa8] sm:$0xff]
    %v337 = vld [vmem:[%s314 + $0xb0] sm:$0xff]
    %v338 = vld [vmem:[%s314 + $0xb8] sm:$0xff]
    %v339 = vld [vmem:[%s314 + $0xc0] sm:$0xff]
    %v340 = vld [vmem:[%s314 + $0xc8] sm:$0xff]
    %v341 = vld [vmem:[%s314 + $0xd0] sm:$0xff]
    %v342 = vld [vmem:[%s314 + $0xd8] sm:$0xff]
    %343 = vmatprep.subr.mxu0 0.0
    %344 = vmatpush1.msra.mxu0 %v115
    %345 = vmatprep.subr.mxu0 0.0
    %346 = vmatpush1.msra.mxu0 %v116
    %347 = vmatprep.subr.mxu0 0.0
    %348 = vmatpush1.msra.mxu0 %v117
    %349 = vmatprep.subr.mxu0 0.0
    %350 = vmatpush1.msra.mxu0 %v118
    %351 = vmatprep.subr.mxu0 0.0
    %352 = vmatpush1.msra.mxu0 %v119
    %353 = vmatprep.subr.mxu0 0.0
    %354 = vmatpush1.msra.mxu0 %v120
    %355 = vmatprep.subr.mxu0 0.0
    %356 = vmatpush1.msra.mxu0 %v121
    %357 = vmatprep.subr.mxu0 0.0
    %358 = vmatpush1.msra.mxu0 %v122
    %359 = vmatprep.subr.mxu0 0.0
    %360 = vmatpush1.msra.mxu0 %v123
    %361 = vmatprep.subr.mxu0 0.0
    %362 = vmatpush1.msra.mxu0 %v124
    %363 = vmatprep.subr.mxu0 0.0
    %364 = vmatpush1.msra.mxu0 %v125
    %365 = vmatprep.subr.mxu0 0.0
    %366 = vmatpush1.msra.mxu0 %v126
    %367 = vmatprep.subr.mxu0 0.0
    %368 = vmatpush1.msra.mxu0 %v127
    %369 = vmatprep.subr.mxu0 0.0
    %370 = vmatpush1.msra.mxu0 %v128
    %371 = vmatprep.subr.mxu0 0.0
    %372 = vmatpush1.msra.mxu0 %v129
    %373 = vmatprep.subr.mxu0 0.0
    %374 = vmatpush1.msra.mxu0 %v130
    %375 = vmatprep.subr.mxu0 0.0
    %376 = vmatpush1.msra.mxu0 %v131
    %377 = vmatprep.subr.mxu0 0.0
    %378 = vmatpush1.msra.mxu0 %v132
    %379 = vmatprep.subr.mxu0 0.0
    %380 = vmatpush1.msra.mxu0 %v133
    %381 = vmatprep.subr.mxu0 0.0
    %382 = vmatpush1.msra.mxu0 %v134
    %383 = vmatprep.subr.mxu0 0.0
    %384 = vmatpush1.msra.mxu0 %v135
    %385 = vmatprep.subr.mxu0 0.0
    %386 = vmatpush1.msra.mxu0 %v136
    %387 = vmatprep.subr.mxu0 0.0
    %388 = vmatpush1.msra.mxu0 %v137
    %389 = vmatprep.subr.mxu0 0.0
    %390 = vmatpush1.msra.mxu0 %v138
    %391 = vmatprep.subr.mxu0 0.0
    %392 = vmatpush1.msra.mxu0 %v139
    %393 = vmatprep.subr.mxu0 0.0
    %394 = vmatpush1.msra.mxu0 %v140
    %395 = vmatprep.subr.mxu0 0.0
    %396 = vmatpush1.msra.mxu0 %v141
    %397 = vmatprep.subr.mxu0 0.0
    %398 = vmatpush1.msra.mxu0 %v142
    %399 = vmatprep.subr.mxu0 0.0
    %400 = vmatpush1.msra.mxu0 %v143
    %401 = vmatprep.subr.mxu0 0.0
    %402 = vmatpush1.msra.mxu0 %v144
    %403 = vmatprep.subr.mxu0 0.0
    %404 = vmatpush1.msra.mxu0 %v145
    %405 = vmatprep.subr.mxu0 0.0
    %406 = vmatpush1.msra.mxu0 %v146
    %407 = vmatprep.mubr.f32.mxu0 %v316
    %408 = vmatmul.mubr.f32.gmra.mrb[0].mxu0 %v315
    %v409 = vpop.f32.mrb[0].mxu0
    %v410 = vadd.f32 0.0, %v409
    %v411 = vpop.f32.mrb[0].mxu0
    %412 = vmatprep.mubr.f32.mxu0 %v318
    %413 = vmatmul.mubr.f32.gmra.mrb[0].mxu0 %v317
    %v414 = vpop.f32.mrb[0].mxu0
    %v415 = vadd.f32 0.0, %v414
    %v416 = vpop.f32.mrb[0].mxu0
    %417 = vmatprep.mubr.f32.mxu0 %v320
    %418 = vmatmul.mubr.f32.gmra.mrb[0].mxu0 %v319
    %v419 = vpop.f32.mrb[0].mxu0
    %v420 = vadd.f32 0.0, %v419
    %v421 = vpop.f32.mrb[0].mxu0
    %422 = vmatprep.mubr.f32.mxu0 %v322
    %423 = vmatmul.mubr.f32.gmra.mrb[0].mxu0 %v321
    %v424 = vpop.f32.mrb[0].mxu0
    %v425 = vadd.f32 0.0, %v424
    %v426 = vpop.f32.mrb[0].mxu0
    %427 = vmatprep.mubr.f32.mxu0 %v324
    %428 = vmatmul.mubr.f32.gmra.mrb[0].mxu0 %v323
    %v429 = vpop.f32.mrb[0].mxu0
    %v430 = vadd.f32 0.0, %v429
    %v431 = vpop.f32.mrb[0].mxu0
    %432 = vmatprep.mubr.f32.mxu0 %v326
    %433 = vmatmul.mubr.f32.gmra.mrb[0].mxu0 %v325
    %v434 = vpop.f32.mrb[0].mxu0
    %v435 = vadd.f32 0.0, %v434
    %v436 = vpop.f32.mrb[0].mxu0
    %437 = vmatprep.mubr.f32.mxu0 %v328
    %438 = vmatmul.mubr.f32.gmra.mrb[0].mxu0 %v327
    %v439 = vpop.f32.mrb[0].mxu0
    %v440 = vadd.f32 0.0, %v439
    %v441 = vpop.f32.mrb[0].mxu0
    %442 = vmatprep.mubr.f32.mxu0 %v330
    %443 = vmatmul.mubr.f32.gmra.mrb[0].mxu0 %v329
    %v444 = vpop.f32.mrb[0].mxu0
    %v445 = vadd.f32 0.0, %v444
    %v446 = vpop.f32.mrb[0].mxu0
    %447 = vmatprep.mubr.f32.mxu0 %v332
    %448 = vmatmul.mubr.f32.gmra.mrb[0].mxu0 %v331
    %v449 = vpop.f32.mrb[0].mxu0
    %v450 = vadd.f32 0.0, %v449
    %v451 = vpop.f32.mrb[0].mxu0
    %452 = vmatprep.mubr.f32.mxu0 %v334
    %453 = vmatmul.mubr.f32.gmra.mrb[0].mxu0 %v333
    %v454 = vpop.f32.mrb[0].mxu0
    %v455 = vadd.f32 0.0, %v454
    %v456 = vpop.f32.mrb[0].mxu0
    %457 = vmatprep.mubr.f32.mxu0 %v336
    %458 = vmatmul.mubr.f32.gmra.mrb[0].mxu0 %v335
    %v459 = vpop.f32.mrb[0].mxu0
    %v460 = vadd.f32 0.0, %v459
    %v461 = vpop.f32.mrb[0].mxu0
    %462 = vmatprep.mubr.f32.mxu0 %v338
    %463 = vmatmul.mubr.f32.gmra.mrb[0].mxu0 %v337
    %v464 = vpop.f32.mrb[0].mxu0
    %v465 = vadd.f32 0.0, %v464
    %v466 = vpop.f32.mrb[0].mxu0
    %467 = vmatprep.mubr.f32.mxu0 %v340
    %468 = vmatmul.mubr.f32.gmra.mrb[0].mxu0 %v339
    %v469 = vpop.f32.mrb[0].mxu0
    %v470 = vadd.f32 0.0, %v469
    %v471 = vpop.f32.mrb[0].mxu0
    %472 = vmatprep.mubr.f32.mxu0 %v342
    %473 = vmatmul.mubr.f32.gmra.mrb[0].mxu0 %v341
    %v474 = vpop.f32.mrb[0].mxu0
    %v475 = vadd.f32 0.0, %v474
    %v476 = vpop.f32.mrb[0].mxu0
    %477 = vdwg.mxu0
    %s478 = scalar_lea.vmem [#allocation2], 32
    %v479 = vld [vmem:[%s478] sm:$0xff]
    %v480 = vld [vmem:[%s478 + $0x8] sm:$0xff]
    %v481 = vld [vmem:[%s478 + $0x10] sm:$0xff]
    %v482 = vld [vmem:[%s478 + $0x18] sm:$0xff]
    %vm483 = vcmask 261120
    %v485 = vsel %vm483, %v410, 0
    %v488 = vsel %vm483, %v415, 0
    %v491 = vsel %vm483, %v420, 0
    %v494 = vsel %vm483, %v425, 0
    %v497 = vsel %vm483, %v430, 0
    %v500 = vsel %vm483, %v435, 0
    %v503 = vsel %vm483, %v440, 0
    %v506 = vsel %vm483, %v445, 0
    %v509 = vsel %vm483, %v450, 0
    %v512 = vsel %vm483, %v455, 0
    %v515 = vsel %vm483, %v460, 0
    %v518 = vsel %vm483, %v465, 0
    %v521 = vsel %vm483, %v470, 0
    %v524 = vsel %vm483, %v475, 0
    %526 = vmatprep.subr.mxu0 0.0
    %527 = vmatpush1.msra.mxu0 %v479
    %528 = vmatprep.subr.mxu0 0.0
    %529 = vmatpush1.msra.mxu0 %v480
    %530 = vmatprep.subr.mxu0 0.0
    %531 = vmatpush1.msra.mxu0 %v481
    %532 = vmatprep.subr.mxu0 0.0
    %533 = vmatpush1.msra.mxu0 %v482
    %534 = vmatprep.subr.mxu0 0.0
    %535 = vmatpush1.msra.mxu0 0.0
    %536 = vmatprep.subr.mxu0 0.0
    %537 = vmatpush1.msra.mxu0 0.0
    %538 = vmatprep.subr.mxu0 0.0
    %539 = vmatpush1.msra.mxu0 0.0
    %540 = vmatprep.subr.mxu0 0.0
    %541 = vmatpush1.msra.mxu0 0.0
    %542 = vmatprep.subr.mxu0 0.0
    %543 = vmatpush1.msra.mxu0 0.0
    %544 = vmatprep.subr.mxu0 0.0
    %545 = vmatpush1.msra.mxu0 0.0
    %546 = vmatprep.subr.mxu0 0.0
    %547 = vmatpush1.msra.mxu0 0.0
    %548 = vmatprep.subr.mxu0 0.0
    %549 = vmatpush1.msra.mxu0 0.0
    %550 = vmatprep.subr.mxu0 0.0
    %551 = vmatpush1.msra.mxu0 0.0
    %552 = vmatprep.subr.mxu0 0.0
    %553 = vmatpush1.msra.mxu0 0.0
    %554 = vmatprep.subr.mxu0 0.0
    %555 = vmatpush1.msra.mxu0 0.0
    %556 = vmatprep.subr.mxu0 0.0
    %557 = vmatpush1.msra.mxu0 0.0
    %558 = vmatprep.subr.mxu0 0.0
    %559 = vmatpush1.msra.mxu0 0.0
    %560 = vmatprep.subr.mxu0 0.0
    %561 = vmatpush1.msra.mxu0 0.0
    %562 = vmatprep.subr.mxu0 0.0
    %563 = vmatpush1.msra.mxu0 0.0
    %564 = vmatprep.subr.mxu0 0.0
    %565 = vmatpush1.msra.mxu0 0.0
    %566 = vmatprep.subr.mxu0 0.0
    %567 = vmatpush1.msra.mxu0 0.0
    %568 = vmatprep.subr.mxu0 0.0
    %569 = vmatpush1.msra.mxu0 0.0
    %570 = vmatprep.subr.mxu0 0.0
    %571 = vmatpush1.msra.mxu0 0.0
    %572 = vmatprep.subr.mxu0 0.0
    %573 = vmatpush1.msra.mxu0 0.0
    %574 = vmatprep.subr.mxu0 0.0
    %575 = vmatpush1.msra.mxu0 0.0
    %576 = vmatprep.subr.mxu0 0.0
    %577 = vmatpush1.msra.mxu0 0.0
    %578 = vmatprep.subr.mxu0 0.0
    %579 = vmatpush1.msra.mxu0 0.0
    %580 = vmatprep.subr.mxu0 0.0
    %581 = vmatpush1.msra.mxu0 0.0
    %582 = vmatprep.subr.mxu0 0.0
    %583 = vmatpush1.msra.mxu0 0.0
    %584 = vmatprep.subr.mxu0 0.0
    %585 = vmatpush1.msra.mxu0 0.0
    %586 = vmatprep.subr.mxu0 0.0
    %587 = vmatpush1.msra.mxu0 0.0
    %588 = vmatprep.subr.mxu0 0.0
    %589 = vmatpush1.msra.mxu0 0.0
    %590 = vmatprep.mubr.f32.mxu0 0.0
    %591 = vmatmul.mubr.f32.gmra.mrb[0].mxu0 %v485
    %v592 = vpop.f32.mrb[0].mxu0
    %v593 = vadd.f32 0.0, %v592
    %v594 = vpop.f32.mrb[0].mxu0
    %595 = vmatprep.mubr.f32.mxu0 0.0
    %596 = vmatmul.mubr.f32.gmra.mrb[0].mxu0 %v488
    %v597 = vpop.f32.mrb[0].mxu0
    %v598 = vadd.f32 0.0, %v597
    %v599 = vpop.f32.mrb[0].mxu0
    %600 = vmatprep.mubr.f32.mxu0 0.0
    %601 = vmatmul.mubr.f32.gmra.mrb[0].mxu0 %v491
    %v602 = vpop.f32.mrb[0].mxu0
    %v603 = vadd.f32 0.0, %v602
    %v604 = vpop.f32.mrb[0].mxu0
    %605 = vmatprep.mubr.f32.mxu0 0.0
    %606 = vmatmul.mubr.f32.gmra.mrb[0].mxu0 %v494
    %v607 = vpop.f32.mrb[0].mxu0
    %v608 = vadd.f32 0.0, %v607
    %v609 = vpop.f32.mrb[0].mxu0
    %610 = vmatprep.mubr.f32.mxu0 0.0
    %611 = vmatmul.mubr.f32.gmra.mrb[0].mxu0 %v497
    %v612 = vpop.f32.mrb[0].mxu0
    %v613 = vadd.f32 0.0, %v612
    %v614 = vpop.f32.mrb[0].mxu0
    %615 = vmatprep.mubr.f32.mxu0 0.0
    %616 = vmatmul.mubr.f32.gmra.mrb[0].mxu0 %v500
    %v617 = vpop.f32.mrb[0].mxu0
    %v618 = vadd.f32 0.0, %v617
    %v619 = vpop.f32.mrb[0].mxu0
    %620 = vmatprep.mubr.f32.mxu0 0.0
    %621 = vmatmul.mubr.f32.gmra.mrb[0].mxu0 %v503
    %v622 = vpop.f32.mrb[0].mxu0
    %v623 = vadd.f32 0.0, %v622
    %v624 = vpop.f32.mrb[0].mxu0
    %625 = vmatprep.mubr.f32.mxu0 0.0
    %626 = vmatmul.mubr.f32.gmra.mrb[0].mxu0 %v506
    %v627 = vpop.f32.mrb[0].mxu0
    %v628 = vadd.f32 0.0, %v627
    %v629 = vpop.f32.mrb[0].mxu0
    %630 = vmatprep.mubr.f32.mxu0 0.0
    %631 = vmatmul.mubr.f32.gmra.mrb[0].mxu0 %v509
    %v632 = vpop.f32.mrb[0].mxu0
    %v633 = vadd.f32 0.0, %v632
    %v634 = vpop.f32.mrb[0].mxu0
    %635 = vmatprep.mubr.f32.mxu0 0.0
    %636 = vmatmul.mubr.f32.gmra.mrb[0].mxu0 %v512
    %v637 = vpop.f32.mrb[0].mxu0
    %v638 = vadd.f32 0.0, %v637
    %v639 = vpop.f32.mrb[0].mxu0
    %640 = vmatprep.mubr.f32.mxu0 0.0
    %641 = vmatmul.mubr.f32.gmra.mrb[0].mxu0 %v515
    %v642 = vpop.f32.mrb[0].mxu0
    %v643 = vadd.f32 0.0, %v642
    %v644 = vpop.f32.mrb[0].mxu0
    %645 = vmatprep.mubr.f32.mxu0 0.0
    %646 = vmatmul.mubr.f32.gmra.mrb[0].mxu0 %v518
    %v647 = vpop.f32.mrb[0].mxu0
    %v648 = vadd.f32 0.0, %v647
    %v649 = vpop.f32.mrb[0].mxu0
    %650 = vmatprep.mubr.f32.mxu0 0.0
    %651 = vmatmul.mubr.f32.gmra.mrb[0].mxu0 %v521
    %v652 = vpop.f32.mrb[0].mxu0
    %v653 = vadd.f32 0.0, %v652
    %v654 = vpop.f32.mrb[0].mxu0
    %655 = vmatprep.mubr.f32.mxu0 0.0
    %656 = vmatmul.mubr.f32.gmra.mrb[0].mxu0 %v524
    %v657 = vpop.f32.mrb[0].mxu0
    %v658 = vadd.f32 0.0, %v657
    %v659 = vpop.f32.mrb[0].mxu0
    %660 = vdwg.mxu0
    %v662 = vsel %vm483, %v242, 0
    %v665 = vsel %vm483, %v247, 0
    %v668 = vsel %vm483, %v252, 0
    %v671 = vsel %vm483, %v257, 0
    %v674 = vsel %vm483, %v262, 0
    %v677 = vsel %vm483, %v267, 0
    %v680 = vsel %vm483, %v272, 0
    %v683 = vsel %vm483, %v277, 0
    %v686 = vsel %vm483, %v282, 0
    %v689 = vsel %vm483, %v287, 0
    %v692 = vsel %vm483, %v292, 0
    %v695 = vsel %vm483, %v297, 0
    %v698 = vsel %vm483, %v302, 0
    %v701 = vsel %vm483, %v307, 0
    %703 = vmatprep.subr.mxu0 0.0
    %704 = vmatpush1.msra.mxu0 %v310
    %705 = vmatprep.subr.mxu0 0.0
    %706 = vmatpush1.msra.mxu0 %v311
    %707 = vmatprep.subr.mxu0 0.0
    %708 = vmatpush1.msra.mxu0 %v312
    %709 = vmatprep.subr.mxu0 0.0
    %710 = vmatpush1.msra.mxu0 %v313
    %711 = vmatprep.subr.mxu0 0.0
    %712 = vmatpush1.msra.mxu0 0.0
    %713 = vmatprep.subr.mxu0 0.0
    %714 = vmatpush1.msra.mxu0 0.0
    %715 = vmatprep.subr.mxu0 0.0
    %716 = vmatpush1.msra.mxu0 0.0
    %717 = vmatprep.subr.mxu0 0.0
    %718 = vmatpush1.msra.mxu0 0.0
    %719 = vmatprep.subr.mxu0 0.0
    %720 = vmatpush1.msra.mxu0 0.0
    %721 = vmatprep.subr.mxu0 0.0
    %722 = vmatpush1.msra.mxu0 0.0
    %723 = vmatprep.subr.mxu0 0.0
    %724 = vmatpush1.msra.mxu0 0.0
    %725 = vmatprep.subr.mxu0 0.0
    %726 = vmatpush1.msra.mxu0 0.0
    %727 = vmatprep.subr.mxu0 0.0
    %728 = vmatpush1.msra.mxu0 0.0
    %729 = vmatprep.subr.mxu0 0.0
    %730 = vmatpush1.msra.mxu0 0.0
    %731 = vmatprep.subr.mxu0 0.0
    %732 = vmatpush1.msra.mxu0 0.0
    %733 = vmatprep.subr.mxu0 0.0
    %734 = vmatpush1.msra.mxu0 0.0
    %735 = vmatprep.subr.mxu0 0.0
    %736 = vmatpush1.msra.mxu0 0.0
    %737 = vmatprep.subr.mxu0 0.0
    %738 = vmatpush1.msra.mxu0 0.0
    %739 = vmatprep.subr.mxu0 0.0
    %740 = vmatpush1.msra.mxu0 0.0
    %741 = vmatprep.subr.mxu0 0.0
    %742 = vmatpush1.msra.mxu0 0.0
    %743 = vmatprep.subr.mxu0 0.0
    %744 = vmatpush1.msra.mxu0 0.0
    %745 = vmatprep.subr.mxu0 0.0
    %746 = vmatpush1.msra.mxu0 0.0
    %747 = vmatprep.subr.mxu0 0.0
    %748 = vmatpush1.msra.mxu0 0.0
    %749 = vmatprep.subr.mxu0 0.0
    %750 = vmatpush1.msra.mxu0 0.0
    %751 = vmatprep.subr.mxu0 0.0
    %752 = vmatpush1.msra.mxu0 0.0
    %753 = vmatprep.subr.mxu0 0.0
    %754 = vmatpush1.msra.mxu0 0.0
    %755 = vmatprep.subr.mxu0 0.0
    %756 = vmatpush1.msra.mxu0 0.0
    %757 = vmatprep.subr.mxu0 0.0
    %758 = vmatpush1.msra.mxu0 0.0
    %759 = vmatprep.subr.mxu0 0.0
    %760 = vmatpush1.msra.mxu0 0.0
    %761 = vmatprep.subr.mxu0 0.0
    %762 = vmatpush1.msra.mxu0 0.0
    %763 = vmatprep.subr.mxu0 0.0
    %764 = vmatpush1.msra.mxu0 0.0
    %765 = vmatprep.subr.mxu0 0.0
    %766 = vmatpush1.msra.mxu0 0.0
    %767 = vmatprep.mubr.f32.mxu0 0.0
    %768 = vmatmul.mubr.f32.gmra.mrb[0].mxu0 %v662
    %v769 = vpop.f32.mrb[0].mxu0
    %v770 = vadd.f32 %v593, %v769
    %v771 = vpop.f32.mrb[0].mxu0
    %772 = vmatprep.mubr.f32.mxu0 0.0
    %773 = vmatmul.mubr.f32.gmra.mrb[0].mxu0 %v665
    %v774 = vpop.f32.mrb[0].mxu0
    %v775 = vadd.f32 %v598, %v774
    %v776 = vpop.f32.mrb[0].mxu0
    %777 = vmatprep.mubr.f32.mxu0 0.0
    %778 = vmatmul.mubr.f32.gmra.mrb[0].mxu0 %v668
    %v779 = vpop.f32.mrb[0].mxu0
    %v780 = vadd.f32 %v603, %v779
    %v781 = vpop.f32.mrb[0].mxu0
    %782 = vmatprep.mubr.f32.mxu0 0.0
    %783 = vmatmul.mubr.f32.gmra.mrb[0].mxu0 %v671
    %v784 = vpop.f32.mrb[0].mxu0
    %v785 = vadd.f32 %v608, %v784
    %v786 = vpop.f32.mrb[0].mxu0
    %787 = vmatprep.mubr.f32.mxu0 0.0
    %788 = vmatmul.mubr.f32.gmra.mrb[0].mxu0 %v674
    %v789 = vpop.f32.mrb[0].mxu0
    %v790 = vadd.f32 %v613, %v789
    %v791 = vpop.f32.mrb[0].mxu0
    %792 = vmatprep.mubr.f32.mxu0 0.0
    %793 = vmatmul.mubr.f32.gmra.mrb[0].mxu0 %v677
    %v794 = vpop.f32.mrb[0].mxu0
    %v795 = vadd.f32 %v618, %v794
    %v796 = vpop.f32.mrb[0].mxu0
    %797 = vmatprep.mubr.f32.mxu0 0.0
    %798 = vmatmul.mubr.f32.gmra.mrb[0].mxu0 %v680
    %v799 = vpop.f32.mrb[0].mxu0
    %v800 = vadd.f32 %v623, %v799
    %v801 = vpop.f32.mrb[0].mxu0
    %802 = vmatprep.mubr.f32.mxu0 0.0
    %803 = vmatmul.mubr.f32.gmra.mrb[0].mxu0 %v683
    %v804 = vpop.f32.mrb[0].mxu0
    %v805 = vadd.f32 %v628, %v804
    %v806 = vpop.f32.mrb[0].mxu0
    %807 = vmatprep.mubr.f32.mxu0 0.0
    %808 = vmatmul.mubr.f32.gmra.mrb[0].mxu0 %v686
    %v809 = vpop.f32.mrb[0].mxu0
    %v810 = vadd.f32 %v633, %v809
    %v811 = vpop.f32.mrb[0].mxu0
    %812 = vmatprep.mubr.f32.mxu0 0.0
    %813 = vmatmul.mubr.f32.gmra.mrb[0].mxu0 %v689
    %v814 = vpop.f32.mrb[0].mxu0
    %v815 = vadd.f32 %v638, %v814
    %v816 = vpop.f32.mrb[0].mxu0
    %817 = vmatprep.mubr.f32.mxu0 0.0
    %818 = vmatmul.mubr.f32.gmra.mrb[0].mxu0 %v692
    %v819 = vpop.f32.mrb[0].mxu0
    %v820 = vadd.f32 %v643, %v819
    %v821 = vpop.f32.mrb[0].mxu0
    %822 = vmatprep.mubr.f32.mxu0 0.0
    %823 = vmatmul.mubr.f32.gmra.mrb[0].mxu0 %v695
    %v824 = vpop.f32.mrb[0].mxu0
    %v825 = vadd.f32 %v648, %v824
    %v826 = vpop.f32.mrb[0].mxu0
    %827 = vmatprep.mubr.f32.mxu0 0.0
    %828 = vmatmul.mubr.f32.gmra.mrb[0].mxu0 %v698
    %v829 = vpop.f32.mrb[0].mxu0
    %v830 = vadd.f32 %v653, %v829
    %v831 = vpop.f32.mrb[0].mxu0
    %832 = vmatprep.mubr.f32.mxu0 0.0
    %833 = vmatmul.mubr.f32.gmra.mrb[0].mxu0 %v701
    %v834 = vpop.f32.mrb[0].mxu0
    %v835 = vadd.f32 %v658, %v834
    %v836 = vpop.f32.mrb[0].mxu0
    %837 = vdwg.mxu0
    %s838 = scalar_lea.vmem %s1, 448
    %v839 = vld [vmem:[%s838] sm:$0xff]
    %v840 = vld [vmem:[%s838 + $0x8] sm:$0xff]
    %v841 = vld [vmem:[%s838 + $0x10] sm:$0xff]
    %v842 = vld [vmem:[%s838 + $0x18] sm:$0xff]
    %v843 = vld [vmem:[%s838 + $0x20] sm:$0xff]
    %v844 = vld [vmem:[%s838 + $0x28] sm:$0xff]
    %v845 = vld [vmem:[%s838 + $0x30] sm:$0xff]
    %v846 = vld [vmem:[%s838 + $0x38] sm:$0xff]
    %v847 = vld [vmem:[%s838 + $0x40] sm:$0xff]
    %v848 = vld [vmem:[%s838 + $0x48] sm:$0xff]
    %v849 = vld [vmem:[%s838 + $0x50] sm:$0xff]
    %v850 = vld [vmem:[%s838 + $0x58] sm:$0xff]
    %v851 = vld [vmem:[%s838 + $0x60] sm:$0xff]
    %v852 = vld [vmem:[%s838 + $0x68] sm:$0xff]
    %v853 = vld [vmem:[%s838 + $0x70] sm:$0xff]
    %v854 = vld [vmem:[%s838 + $0x78] sm:$0xff]
    %v855 = vld [vmem:[%s838 + $0x80] sm:$0xff]
    %v856 = vld [vmem:[%s838 + $0x88] sm:$0xff]
    %v857 = vld [vmem:[%s838 + $0x90] sm:$0xff]
    %v858 = vld [vmem:[%s838 + $0x98] sm:$0xff]
    %v859 = vld [vmem:[%s838 + $0xa0] sm:$0xff]
    %v860 = vld [vmem:[%s838 + $0xa8] sm:$0xff]
    %v861 = vld [vmem:[%s838 + $0xb0] sm:$0xff]
    %v862 = vld [vmem:[%s838 + $0xb8] sm:$0xff]
    %v863 = vld [vmem:[%s838 + $0xc0] sm:$0xff]
    %v864 = vld [vmem:[%s838 + $0xc8] sm:$0xff]
    %v865 = vld [vmem:[%s838 + $0xd0] sm:$0xff]
    %v866 = vld [vmem:[%s838 + $0xd8] sm:$0xff]
    %867 = vmatprep.subr.mxu0 0.0
    %868 = vmatpush1.msra.mxu0 %v115
    %869 = vmatprep.subr.mxu0 0.0
    %870 = vmatpush1.msra.mxu0 %v116
    %871 = vmatprep.subr.mxu0 0.0
    %872 = vmatpush1.msra.mxu0 %v117
    %873 = vmatprep.subr.mxu0 0.0
    %874 = vmatpush1.msra.mxu0 %v118
    %875 = vmatprep.subr.mxu0 0.0
    %876 = vmatpush1.msra.mxu0 %v119
    %877 = vmatprep.subr.mxu0 0.0
    %878 = vmatpush1.msra.mxu0 %v120
    %879 = vmatprep.subr.mxu0 0.0
    %880 = vmatpush1.msra.mxu0 %v121
    %881 = vmatprep.subr.mxu0 0.0
    %882 = vmatpush1.msra.mxu0 %v122
    %883 = vmatprep.subr.mxu0 0.0
    %884 = vmatpush1.msra.mxu0 %v123
    %885 = vmatprep.subr.mxu0 0.0
    %886 = vmatpush1.msra.mxu0 %v124
    %887 = vmatprep.subr.mxu0 0.0
    %888 = vmatpush1.msra.mxu0 %v125
    %889 = vmatprep.subr.mxu0 0.0
    %890 = vmatpush1.msra.mxu0 %v126
    %891 = vmatprep.subr.mxu0 0.0
    %892 = vmatpush1.msra.mxu0 %v127
    %893 = vmatprep.subr.mxu0 0.0
    %894 = vmatpush1.msra.mxu0 %v128
    %895 = vmatprep.subr.mxu0 0.0
    %896 = vmatpush1.msra.mxu0 %v129
    %897 = vmatprep.subr.mxu0 0.0
    %898 = vmatpush1.msra.mxu0 %v130
    %899 = vmatprep.subr.mxu0 0.0
    %900 = vmatpush1.msra.mxu0 %v131
    %901 = vmatprep.subr.mxu0 0.0
    %902 = vmatpush1.msra.mxu0 %v132
    %903 = vmatprep.subr.mxu0 0.0
    %904 = vmatpush1.msra.mxu0 %v133
    %905 = vmatprep.subr.mxu0 0.0
    %906 = vmatpush1.msra.mxu0 %v134
    %907 = vmatprep.subr.mxu0 0.0
    %908 = vmatpush1.msra.mxu0 %v135
    %909 = vmatprep.subr.mxu0 0.0
    %910 = vmatpush1.msra.mxu0 %v136
    %911 = vmatprep.subr.mxu0 0.0
    %912 = vmatpush1.msra.mxu0 %v137
    %913 = vmatprep.subr.mxu0 0.0
    %914 = vmatpush1.msra.mxu0 %v138
    %915 = vmatprep.subr.mxu0 0.0
    %916 = vmatpush1.msra.mxu0 %v139
    %917 = vmatprep.subr.mxu0 0.0
    %918 = vmatpush1.msra.mxu0 %v140
    %919 = vmatprep.subr.mxu0 0.0
    %920 = vmatpush1.msra.mxu0 %v141
    %921 = vmatprep.subr.mxu0 0.0
    %922 = vmatpush1.msra.mxu0 %v142
    %923 = vmatprep.subr.mxu0 0.0
    %924 = vmatpush1.msra.mxu0 %v143
    %925 = vmatprep.subr.mxu0 0.0
    %926 = vmatpush1.msra.mxu0 %v144
    %927 = vmatprep.subr.mxu0 0.0
    %928 = vmatpush1.msra.mxu0 %v145
    %929 = vmatprep.subr.mxu0 0.0
    %930 = vmatpush1.msra.mxu0 %v146
    %931 = vmatprep.mubr.f32.mxu0 %v840
    %932 = vmatmul.mubr.f32.gmra.mrb[0].mxu0 %v839
    %v933 = vpop.f32.mrb[0].mxu0
    %v934 = vadd.f32 0.0, %v933
    %v935 = vpop.f32.mrb[0].mxu0
    %936 = vmatprep.mubr.f32.mxu0 %v842
    %937 = vmatmul.mubr.f32.gmra.mrb[0].mxu0 %v841
    %v938 = vpop.f32.mrb[0].mxu0
    %v939 = vadd.f32 0.0, %v938
    %v940 = vpop.f32.mrb[0].mxu0
    %941 = vmatprep.mubr.f32.mxu0 %v844
    %942 = vmatmul.mubr.f32.gmra.mrb[0].mxu0 %v843
    %v943 = vpop.f32.mrb[0].mxu0
    %v944 = vadd.f32 0.0, %v943
    %v945 = vpop.f32.mrb[0].mxu0
    %946 = vmatprep.mubr.f32.mxu0 %v846
    %947 = vmatmul.mubr.f32.gmra.mrb[0].mxu0 %v845
    %v948 = vpop.f32.mrb[0].mxu0
    %v949 = vadd.f32 0.0, %v948
    %v950 = vpop.f32.mrb[0].mxu0
    %951 = vmatprep.mubr.f32.mxu0 %v848
    %952 = vmatmul.mubr.f32.gmra.mrb[0].mxu0 %v847
    %v953 = vpop.f32.mrb[0].mxu0
    %v954 = vadd.f32 0.0, %v953
    %v955 = vpop.f32.mrb[0].mxu0
    %956 = vmatprep.mubr.f32.mxu0 %v850
    %957 = vmatmul.mubr.f32.gmra.mrb[0].mxu0 %v849
    %v958 = vpop.f32.mrb[0].mxu0
    %v959 = vadd.f32 0.0, %v958
    %v960 = vpop.f32.mrb[0].mxu0
    %961 = vmatprep.mubr.f32.mxu0 %v852
    %962 = vmatmul.mubr.f32.gmra.mrb[0].mxu0 %v851
    %v963 = vpop.f32.mrb[0].mxu0
    %v964 = vadd.f32 0.0, %v963
    %v965 = vpop.f32.mrb[0].mxu0
    %966 = vmatprep.mubr.f32.mxu0 %v854
    %967 = vmatmul.mubr.f32.gmra.mrb[0].mxu0 %v853
    %v968 = vpop.f32.mrb[0].mxu0
    %v969 = vadd.f32 0.0, %v968
    %v970 = vpop.f32.mrb[0].mxu0
    %971 = vmatprep.mubr.f32.mxu0 %v856
    %972 = vmatmul.mubr.f32.gmra.mrb[0].mxu0 %v855
    %v973 = vpop.f32.mrb[0].mxu0
    %v974 = vadd.f32 0.0, %v973
    %v975 = vpop.f32.mrb[0].mxu0
    %976 = vmatprep.mubr.f32.mxu0 %v858
    %977 = vmatmul.mubr.f32.gmra.mrb[0].mxu0 %v857
    %v978 = vpop.f32.mrb[0].mxu0
    %v979 = vadd.f32 0.0, %v978
    %v980 = vpop.f32.mrb[0].mxu0
    %981 = vmatprep.mubr.f32.mxu0 %v860
    %982 = vmatmul.mubr.f32.gmra.mrb[0].mxu0 %v859
    %v983 = vpop.f32.mrb[0].mxu0
    %v984 = vadd.f32 0.0, %v983
    %v985 = vpop.f32.mrb[0].mxu0
    %986 = vmatprep.mubr.f32.mxu0 %v862
    %987 = vmatmul.mubr.f32.gmra.mrb[0].mxu0 %v861
    %v988 = vpop.f32.mrb[0].mxu0
    %v989 = vadd.f32 0.0, %v988
    %v990 = vpop.f32.mrb[0].mxu0
    %991 = vmatprep.mubr.f32.mxu0 %v864
    %992 = vmatmul.mubr.f32.gmra.mrb[0].mxu0 %v863
    %v993 = vpop.f32.mrb[0].mxu0
    %v994 = vadd.f32 0.0, %v993
    %v995 = vpop.f32.mrb[0].mxu0
    %996 = vmatprep.mubr.f32.mxu0 %v866
    %997 = vmatmul.mubr.f32.gmra.mrb[0].mxu0 %v865
    %v998 = vpop.f32.mrb[0].mxu0
    %v999 = vadd.f32 0.0, %v998
    %v1000 = vpop.f32.mrb[0].mxu0
    %1001 = vdwg.mxu0
    %s1002 = scalar_lea.vmem [#allocation2], 64
    %v1003 = vld [vmem:[%s1002] sm:$0xff]
    %v1004 = vld [vmem:[%s1002 + $0x8] sm:$0xff]
    %v1005 = vld [vmem:[%s1002 + $0x10] sm:$0xff]
    %v1006 = vld [vmem:[%s1002 + $0x18] sm:$0xff]
    %v1008 = vsel %vm483, %v934, 0
    %v1011 = vsel %vm483, %v939, 0
    %v1014 = vsel %vm483, %v944, 0
    %v1017 = vsel %vm483, %v949, 0
    %v1020 = vsel %vm483, %v954, 0
    %v1023 = vsel %vm483, %v959, 0
    %v1026 = vsel %vm483, %v964, 0
    %v1029 = vsel %vm483, %v969, 0
    %v1032 = vsel %vm483, %v974, 0
    %v1035 = vsel %vm483, %v979, 0
    %v1038 = vsel %vm483, %v984, 0
    %v1041 = vsel %vm483, %v989, 0
    %v1044 = vsel %vm483, %v994, 0
    %v1047 = vsel %vm483, %v999, 0
    %1049 = vmatprep.subr.mxu0 0.0
    %1050 = vmatpush1.msra.mxu0 %v1003
    %1051 = vmatprep.subr.mxu0 0.0
    %1052 = vmatpush1.msra.mxu0 %v1004
    %1053 = vmatprep.subr.mxu0 0.0
    %1054 = vmatpush1.msra.mxu0 %v1005
    %1055 = vmatprep.subr.mxu0 0.0
    %1056 = vmatpush1.msra.mxu0 %v1006
    %1057 = vmatprep.subr.mxu0 0.0
    %1058 = vmatpush1.msra.mxu0 0.0
    %1059 = vmatprep.subr.mxu0 0.0
    %1060 = vmatpush1.msra.mxu0 0.0
    %1061 = vmatprep.subr.mxu0 0.0
    %1062 = vmatpush1.msra.mxu0 0.0
    %1063 = vmatprep.subr.mxu0 0.0
    %1064 = vmatpush1.msra.mxu0 0.0
    %1065 = vmatprep.subr.mxu0 0.0
    %1066 = vmatpush1.msra.mxu0 0.0
    %1067 = vmatprep.subr.mxu0 0.0
    %1068 = vmatpush1.msra.mxu0 0.0
    %1069 = vmatprep.subr.mxu0 0.0
    %1070 = vmatpush1.msra.mxu0 0.0
    %1071 = vmatprep.subr.mxu0 0.0
    %1072 = vmatpush1.msra.mxu0 0.0
    %1073 = vmatprep.subr.mxu0 0.0
    %1074 = vmatpush1.msra.mxu0 0.0
    %1075 = vmatprep.subr.mxu0 0.0
    %1076 = vmatpush1.msra.mxu0 0.0
    %1077 = vmatprep.subr.mxu0 0.0
    %1078 = vmatpush1.msra.mxu0 0.0
    %1079 = vmatprep.subr.mxu0 0.0
    %1080 = vmatpush1.msra.mxu0 0.0
    %1081 = vmatprep.subr.mxu0 0.0
    %1082 = vmatpush1.msra.mxu0 0.0
    %1083 = vmatprep.subr.mxu0 0.0
    %1084 = vmatpush1.msra.mxu0 0.0
    %1085 = vmatprep.subr.mxu0 0.0
    %1086 = vmatpush1.msra.mxu0 0.0
    %1087 = vmatprep.subr.mxu0 0.0
    %1088 = vmatpush1.msra.mxu0 0.0
    %1089 = vmatprep.subr.mxu0 0.0
    %1090 = vmatpush1.msra.mxu0 0.0
    %1091 = vmatprep.subr.mxu0 0.0
    %1092 = vmatpush1.msra.mxu0 0.0
    %1093 = vmatprep.subr.mxu0 0.0
    %1094 = vmatpush1.msra.mxu0 0.0
    %1095 = vmatprep.subr.mxu0 0.0
    %1096 = vmatpush1.msra.mxu0 0.0
    %1097 = vmatprep.subr.mxu0 0.0
    %1098 = vmatpush1.msra.mxu0 0.0
    %1099 = vmatprep.subr.mxu0 0.0
    %1100 = vmatpush1.msra.mxu0 0.0
    %1101 = vmatprep.subr.mxu0 0.0
    %1102 = vmatpush1.msra.mxu0 0.0
    %1103 = vmatprep.subr.mxu0 0.0
    %1104 = vmatpush1.msra.mxu0 0.0
    %1105 = vmatprep.subr.mxu0 0.0
    %1106 = vmatpush1.msra.mxu0 0.0
    %1107 = vmatprep.subr.mxu0 0.0
    %1108 = vmatpush1.msra.mxu0 0.0
    %1109 = vmatprep.subr.mxu0 0.0
    %1110 = vmatpush1.msra.mxu0 0.0
    %1111 = vmatprep.subr.mxu0 0.0
    %1112 = vmatpush1.msra.mxu0 0.0
    %1113 = vmatprep.mubr.f32.mxu0 0.0
    %1114 = vmatmul.mubr.f32.gmra.mrb[0].mxu0 %v1008
    %v1115 = vpop.f32.mrb[0].mxu0
    %v1116 = vadd.f32 0.0, %v1115
    %v1117 = vpop.f32.mrb[0].mxu0
    %1118 = vmatprep.mubr.f32.mxu0 0.0
    %1119 = vmatmul.mubr.f32.gmra.mrb[0].mxu0 %v1011
    %v1120 = vpop.f32.mrb[0].mxu0
    %v1121 = vadd.f32 0.0, %v1120
    %v1122 = vpop.f32.mrb[0].mxu0
    %1123 = vmatprep.mubr.f32.mxu0 0.0
    %1124 = vmatmul.mubr.f32.gmra.mrb[0].mxu0 %v1014
    %v1125 = vpop.f32.mrb[0].mxu0
    %v1126 = vadd.f32 0.0, %v1125
    %v1127 = vpop.f32.mrb[0].mxu0
    %1128 = vmatprep.mubr.f32.mxu0 0.0
    %1129 = vmatmul.mubr.f32.gmra.mrb[0].mxu0 %v1017
    %v1130 = vpop.f32.mrb[0].mxu0
    %v1131 = vadd.f32 0.0, %v1130
    %v1132 = vpop.f32.mrb[0].mxu0
    %1133 = vmatprep.mubr.f32.mxu0 0.0
    %1134 = vmatmul.mubr.f32.gmra.mrb[0].mxu0 %v1020
    %v1135 = vpop.f32.mrb[0].mxu0
    %v1136 = vadd.f32 0.0, %v1135
    %v1137 = vpop.f32.mrb[0].mxu0
    %1138 = vmatprep.mubr.f32.mxu0 0.0
    %1139 = vmatmul.mubr.f32.gmra.mrb[0].mxu0 %v1023
    %v1140 = vpop.f32.mrb[0].mxu0
    %v1141 = vadd.f32 0.0, %v1140
    %v1142 = vpop.f32.mrb[0].mxu0
    %1143 = vmatprep.mubr.f32.mxu0 0.0
    %1144 = vmatmul.mubr.f32.gmra.mrb[0].mxu0 %v1026
    %v1145 = vpop.f32.mrb[0].mxu0
    %v1146 = vadd.f32 0.0, %v1145
    %v1147 = vpop.f32.mrb[0].mxu0
    %1148 = vmatprep.mubr.f32.mxu0 0.0
    %1149 = vmatmul.mubr.f32.gmra.mrb[0].mxu0 %v1029
    %v1150 = vpop.f32.mrb[0].mxu0
    %v1151 = vadd.f32 0.0, %v1150
    %v1152 = vpop.f32.mrb[0].mxu0
    %1153 = vmatprep.mubr.f32.mxu0 0.0
    %1154 = vmatmul.mubr.f32.gmra.mrb[0].mxu0 %v1032
    %v1155 = vpop.f32.mrb[0].mxu0
    %v1156 = vadd.f32 0.0, %v1155
    %v1157 = vpop.f32.mrb[0].mxu0
    %1158 = vmatprep.mubr.f32.mxu0 0.0
    %1159 = vmatmul.mubr.f32.gmra.mrb[0].mxu0 %v1035
    %v1160 = vpop.f32.mrb[0].mxu0
    %v1161 = vadd.f32 0.0, %v1160
    %v1162 = vpop.f32.mrb[0].mxu0
    %1163 = vmatprep.mubr.f32.mxu0 0.0
    %1164 = vmatmul.mubr.f32.gmra.mrb[0].mxu0 %v1038
    %v1165 = vpop.f32.mrb[0].mxu0
    %v1166 = vadd.f32 0.0, %v1165
    %v1167 = vpop.f32.mrb[0].mxu0
    %1168 = vmatprep.mubr.f32.mxu0 0.0
    %1169 = vmatmul.mubr.f32.gmra.mrb[0].mxu0 %v1041
    %v1170 = vpop.f32.mrb[0].mxu0
    %v1171 = vadd.f32 0.0, %v1170
    %v1172 = vpop.f32.mrb[0].mxu0
    %1173 = vmatprep.mubr.f32.mxu0 0.0
    %1174 = vmatmul.mubr.f32.gmra.mrb[0].mxu0 %v1044
    %v1175 = vpop.f32.mrb[0].mxu0
    %v1176 = vadd.f32 0.0, %v1175
    %v1177 = vpop.f32.mrb[0].mxu0
    %1178 = vmatprep.mubr.f32.mxu0 0.0
    %1179 = vmatmul.mubr.f32.gmra.mrb[0].mxu0 %v1047
    %v1180 = vpop.f32.mrb[0].mxu0
    %v1181 = vadd.f32 0.0, %v1180
    %v1182 = vpop.f32.mrb[0].mxu0
    %1183 = vdwg.mxu0
    %v1184 = vadd.f32 %v770, %v1116
    %v1185 = vadd.f32 %v775, %v1121
    %v1186 = vadd.f32 %v780, %v1126
    %v1187 = vadd.f32 %v785, %v1131
    %v1188 = vadd.f32 %v790, %v1136
    %v1189 = vadd.f32 %v795, %v1141
    %v1190 = vadd.f32 %v800, %v1146
    %v1191 = vadd.f32 %v805, %v1151
    %v1192 = vadd.f32 %v810, %v1156
    %v1193 = vadd.f32 %v815, %v1161
    %v1194 = vadd.f32 %v820, %v1166
    %v1195 = vadd.f32 %v825, %v1171
    %v1196 = vadd.f32 %v830, %v1176
    %v1197 = vadd.f32 %v835, %v1181
    %s1198 = scalar_lea.vmem %s1, 672
    %v1199 = vld [vmem:[%s1198] sm:$0xff]
    %v1200 = vld [vmem:[%s1198 + $0x8] sm:$0xff]
    %v1201 = vld [vmem:[%s1198 + $0x10] sm:$0xff]
    %v1202 = vld [vmem:[%s1198 + $0x18] sm:$0xff]
    %v1203 = vld [vmem:[%s1198 + $0x20] sm:$0xff]
    %v1204 = vld [vmem:[%s1198 + $0x28] sm:$0xff]
    %v1205 = vld [vmem:[%s1198 + $0x30] sm:$0xff]
    %v1206 = vld [vmem:[%s1198 + $0x38] sm:$0xff]
    %v1207 = vld [vmem:[%s1198 + $0x40] sm:$0xff]
    %v1208 = vld [vmem:[%s1198 + $0x48] sm:$0xff]
    %v1209 = vld [vmem:[%s1198 + $0x50] sm:$0xff]
    %v1210 = vld [vmem:[%s1198 + $0x58] sm:$0xff]
    %v1211 = vld [vmem:[%s1198 + $0x60] sm:$0xff]
    %v1212 = vld [vmem:[%s1198 + $0x68] sm:$0xff]
    %v1213 = vld [vmem:[%s1198 + $0x70] sm:$0xff]
    %v1214 = vld [vmem:[%s1198 + $0x78] sm:$0xff]
    %v1215 = vld [vmem:[%s1198 + $0x80] sm:$0xff]
    %v1216 = vld [vmem:[%s1198 + $0x88] sm:$0xff]
    %v1217 = vld [vmem:[%s1198 + $0x90] sm:$0xff]
    %v1218 = vld [vmem:[%s1198 + $0x98] sm:$0xff]
    %v1219 = vld [vmem:[%s1198 + $0xa0] sm:$0xff]
    %v1220 = vld [vmem:[%s1198 + $0xa8] sm:$0xff]
    %v1221 = vld [vmem:[%s1198 + $0xb0] sm:$0xff]
    %v1222 = vld [vmem:[%s1198 + $0xb8] sm:$0xff]
    %v1223 = vld [vmem:[%s1198 + $0xc0] sm:$0xff]
    %v1224 = vld [vmem:[%s1198 + $0xc8] sm:$0xff]
    %v1225 = vld [vmem:[%s1198 + $0xd0] sm:$0xff]
    %v1226 = vld [vmem:[%s1198 + $0xd8] sm:$0xff]
    %1227 = vmatprep.subr.mxu0 0.0
    %1228 = vmatpush1.msra.mxu0 %v115
    %1229 = vmatprep.subr.mxu0 0.0
    %1230 = vmatpush1.msra.mxu0 %v116
    %1231 = vmatprep.subr.mxu0 0.0
    %1232 = vmatpush1.msra.mxu0 %v117
    %1233 = vmatprep.subr.mxu0 0.0
    %1234 = vmatpush1.msra.mxu0 %v118
    %1235 = vmatprep.subr.mxu0 0.0
    %1236 = vmatpush1.msra.mxu0 %v119
    %1237 = vmatprep.subr.mxu0 0.0
    %1238 = vmatpush1.msra.mxu0 %v120
    %1239 = vmatprep.subr.mxu0 0.0
    %1240 = vmatpush1.msra.mxu0 %v121
    %1241 = vmatprep.subr.mxu0 0.0
    %1242 = vmatpush1.msra.mxu0 %v122
    %1243 = vmatprep.subr.mxu0 0.0
    %1244 = vmatpush1.msra.mxu0 %v123
    %1245 = vmatprep.subr.mxu0 0.0
    %1246 = vmatpush1.msra.mxu0 %v124
    %1247 = vmatprep.subr.mxu0 0.0
    %1248 = vmatpush1.msra.mxu0 %v125
    %1249 = vmatprep.subr.mxu0 0.0
    %1250 = vmatpush1.msra.mxu0 %v126
    %1251 = vmatprep.subr.mxu0 0.0
    %1252 = vmatpush1.msra.mxu0 %v127
    %1253 = vmatprep.subr.mxu0 0.0
    %1254 = vmatpush1.msra.mxu0 %v128
    %1255 = vmatprep.subr.mxu0 0.0
    %1256 = vmatpush1.msra.mxu0 %v129
    %1257 = vmatprep.subr.mxu0 0.0
    %1258 = vmatpush1.msra.mxu0 %v130
    %1259 = vmatprep.subr.mxu0 0.0
    %1260 = vmatpush1.msra.mxu0 %v131
    %1261 = vmatprep.subr.mxu0 0.0
    %1262 = vmatpush1.msra.mxu0 %v132
    %1263 = vmatprep.subr.mxu0 0.0
    %1264 = vmatpush1.msra.mxu0 %v133
    %1265 = vmatprep.subr.mxu0 0.0
    %1266 = vmatpush1.msra.mxu0 %v134
    %1267 = vmatprep.subr.mxu0 0.0
    %1268 = vmatpush1.msra.mxu0 %v135
    %1269 = vmatprep.subr.mxu0 0.0
    %1270 = vmatpush1.msra.mxu0 %v136
    %1271 = vmatprep.subr.mxu0 0.0
    %1272 = vmatpush1.msra.mxu0 %v137
    %1273 = vmatprep.subr.mxu0 0.0
    %1274 = vmatpush1.msra.mxu0 %v138
    %1275 = vmatprep.subr.mxu0 0.0
    %1276 = vmatpush1.msra.mxu0 %v139
    %1277 = vmatprep.subr.mxu0 0.0
    %1278 = vmatpush1.msra.mxu0 %v140
    %1279 = vmatprep.subr.mxu0 0.0
    %1280 = vmatpush1.msra.mxu0 %v141
    %1281 = vmatprep.subr.mxu0 0.0
    %1282 = vmatpush1.msra.mxu0 %v142
    %1283 = vmatprep.subr.mxu0 0.0
    %1284 = vmatpush1.msra.mxu0 %v143
    %1285 = vmatprep.subr.mxu0 0.0
    %1286 = vmatpush1.msra.mxu0 %v144
    %1287 = vmatprep.subr.mxu0 0.0
    %1288 = vmatpush1.msra.mxu0 %v145
    %1289 = vmatprep.subr.mxu0 0.0
    %1290 = vmatpush1.msra.mxu0 %v146
    %1291 = vmatprep.mubr.f32.mxu0 %v1200
    %1292 = vmatmul.mubr.f32.gmra.mrb[0].mxu0 %v1199
    %v1293 = vpop.f32.mrb[0].mxu0
    %v1294 = vadd.f32 0.0, %v1293
    %v1295 = vpop.f32.mrb[0].mxu0
    %1296 = vmatprep.mubr.f32.mxu0 %v1202
    %1297 = vmatmul.mubr.f32.gmra.mrb[0].mxu0 %v1201
    %v1298 = vpop.f32.mrb[0].mxu0
    %v1299 = vadd.f32 0.0, %v1298
    %v1300 = vpop.f32.mrb[0].mxu0
    %1301 = vmatprep.mubr.f32.mxu0 %v1204
    %1302 = vmatmul.mubr.f32.gmra.mrb[0].mxu0 %v1203
    %v1303 = vpop.f32.mrb[0].mxu0
    %v1304 = vadd.f32 0.0, %v1303
    %v1305 = vpop.f32.mrb[0].mxu0
    %1306 = vmatprep.mubr.f32.mxu0 %v1206
    %1307 = vmatmul.mubr.f32.gmra.mrb[0].mxu0 %v1205
    %v1308 = vpop.f32.mrb[0].mxu0
    %v1309 = vadd.f32 0.0, %v1308
    %v1310 = vpop.f32.mrb[0].mxu0
    %1311 = vmatprep.mubr.f32.mxu0 %v1208
    %1312 = vmatmul.mubr.f32.gmra.mrb[0].mxu0 %v1207
    %v1313 = vpop.f32.mrb[0].mxu0
    %v1314 = vadd.f32 0.0, %v1313
    %v1315 = vpop.f32.mrb[0].mxu0
    %1316 = vmatprep.mubr.f32.mxu0 %v1210
    %1317 = vmatmul.mubr.f32.gmra.mrb[0].mxu0 %v1209
    %v1318 = vpop.f32.mrb[0].mxu0
    %v1319 = vadd.f32 0.0, %v1318
    %v1320 = vpop.f32.mrb[0].mxu0
    %1321 = vmatprep.mubr.f32.mxu0 %v1212
    %1322 = vmatmul.mubr.f32.gmra.mrb[0].mxu0 %v1211
    %v1323 = vpop.f32.mrb[0].mxu0
    %v1324 = vadd.f32 0.0, %v1323
    %v1325 = vpop.f32.mrb[0].mxu0
    %1326 = vmatprep.mubr.f32.mxu0 %v1214
    %1327 = vmatmul.mubr.f32.gmra.mrb[0].mxu0 %v1213
    %v1328 = vpop.f32.mrb[0].mxu0
    %v1329 = vadd.f32 0.0, %v1328
    %v1330 = vpop.f32.mrb[0].mxu0
    %1331 = vmatprep.mubr.f32.mxu0 %v1216
    %1332 = vmatmul.mubr.f32.gmra.mrb[0].mxu0 %v1215
    %v1333 = vpop.f32.mrb[0].mxu0
    %v1334 = vadd.f32 0.0, %v1333
    %v1335 = vpop.f32.mrb[0].mxu0
    %1336 = vmatprep.mubr.f32.mxu0 %v1218
    %1337 = vmatmul.mubr.f32.gmra.mrb[0].mxu0 %v1217
    %v1338 = vpop.f32.mrb[0].mxu0
    %v1339 = vadd.f32 0.0, %v1338
    %v1340 = vpop.f32.mrb[0].mxu0
    %1341 = vmatprep.mubr.f32.mxu0 %v1220
    %1342 = vmatmul.mubr.f32.gmra.mrb[0].mxu0 %v1219
    %v1343 = vpop.f32.mrb[0].mxu0
    %v1344 = vadd.f32 0.0, %v1343
    %v1345 = vpop.f32.mrb[0].mxu0
    %1346 = vmatprep.mubr.f32.mxu0 %v1222
    %1347 = vmatmul.mubr.f32.gmra.mrb[0].mxu0 %v1221
    %v1348 = vpop.f32.mrb[0].mxu0
    %v1349 = vadd.f32 0.0, %v1348
    %v1350 = vpop.f32.mrb[0].mxu0
    %1351 = vmatprep.mubr.f32.mxu0 %v1224
    %1352 = vmatmul.mubr.f32.gmra.mrb[0].mxu0 %v1223
    %v1353 = vpop.f32.mrb[0].mxu0
    %v1354 = vadd.f32 0.0, %v1353
    %v1355 = vpop.f32.mrb[0].mxu0
    %1356 = vmatprep.mubr.f32.mxu0 %v1226
    %1357 = vmatmul.mubr.f32.gmra.mrb[0].mxu0 %v1225
    %v1358 = vpop.f32.mrb[0].mxu0
    %v1359 = vadd.f32 0.0, %v1358
    %v1360 = vpop.f32.mrb[0].mxu0
    %1361 = vdwg.mxu0
    %s1362 = scalar_lea.vmem [#allocation2], 96
    %v1363 = vld [vmem:[%s1362] sm:$0xff]
    %v1364 = vld [vmem:[%s1362 + $0x8] sm:$0xff]
    %v1365 = vld [vmem:[%s1362 + $0x10] sm:$0xff]
    %v1366 = vld [vmem:[%s1362 + $0x18] sm:$0xff]
    %v1368 = vsel %vm483, %v1294, 0
    %v1371 = vsel %vm483, %v1299, 0
    %v1374 = vsel %vm483, %v1304, 0
    %v1377 = vsel %vm483, %v1309, 0
    %v1380 = vsel %vm483, %v1314, 0
    %v1383 = vsel %vm483, %v1319, 0
    %v1386 = vsel %vm483, %v1324, 0
    %v1389 = vsel %vm483, %v1329, 0
    %v1392 = vsel %vm483, %v1334, 0
    %v1395 = vsel %vm483, %v1339, 0
    %v1398 = vsel %vm483, %v1344, 0
    %v1401 = vsel %vm483, %v1349, 0
    %v1404 = vsel %vm483, %v1354, 0
    %v1407 = vsel %vm483, %v1359, 0
    %1409 = vmatprep.subr.mxu0 0.0
    %1410 = vmatpush1.msra.mxu0 %v1363
    %1411 = vmatprep.subr.mxu0 0.0
    %1412 = vmatpush1.msra.mxu0 %v1364
    %1413 = vmatprep.subr.mxu0 0.0
    %1414 = vmatpush1.msra.mxu0 %v1365
    %1415 = vmatprep.subr.mxu0 0.0
    %1416 = vmatpush1.msra.mxu0 %v1366
    %1417 = vmatprep.subr.mxu0 0.0
    %1418 = vmatpush1.msra.mxu0 0.0
    %1419 = vmatprep.subr.mxu0 0.0
    %1420 = vmatpush1.msra.mxu0 0.0
    %1421 = vmatprep.subr.mxu0 0.0
    %1422 = vmatpush1.msra.mxu0 0.0
    %1423 = vmatprep.subr.mxu0 0.0
    %1424 = vmatpush1.msra.mxu0 0.0
    %1425 = vmatprep.subr.mxu0 0.0
    %1426 = vmatpush1.msra.mxu0 0.0
    %1427 = vmatprep.subr.mxu0 0.0
    %1428 = vmatpush1.msra.mxu0 0.0
    %1429 = vmatprep.subr.mxu0 0.0
    %1430 = vmatpush1.msra.mxu0 0.0
    %1431 = vmatprep.subr.mxu0 0.0
    %1432 = vmatpush1.msra.mxu0 0.0
    %1433 = vmatprep.subr.mxu0 0.0
    %1434 = vmatpush1.msra.mxu0 0.0
    %1435 = vmatprep.subr.mxu0 0.0
    %1436 = vmatpush1.msra.mxu0 0.0
    %1437 = vmatprep.subr.mxu0 0.0
    %1438 = vmatpush1.msra.mxu0 0.0
    %1439 = vmatprep.subr.mxu0 0.0
    %1440 = vmatpush1.msra.mxu0 0.0
    %1441 = vmatprep.subr.mxu0 0.0
    %1442 = vmatpush1.msra.mxu0 0.0
    %1443 = vmatprep.subr.mxu0 0.0
    %1444 = vmatpush1.msra.mxu0 0.0
    %1445 = vmatprep.subr.mxu0 0.0
    %1446 = vmatpush1.msra.mxu0 0.0
    %1447 = vmatprep.subr.mxu0 0.0
    %1448 = vmatpush1.msra.mxu0 0.0
    %1449 = vmatprep.subr.mxu0 0.0
    %1450 = vmatpush1.msra.mxu0 0.0
    %1451 = vmatprep.subr.mxu0 0.0
    %1452 = vmatpush1.msra.mxu0 0.0
    %1453 = vmatprep.subr.mxu0 0.0
    %1454 = vmatpush1.msra.mxu0 0.0
    %1455 = vmatprep.subr.mxu0 0.0
    %1456 = vmatpush1.msra.mxu0 0.0
    %1457 = vmatprep.subr.mxu0 0.0
    %1458 = vmatpush1.msra.mxu0 0.0
    %1459 = vmatprep.subr.mxu0 0.0
    %1460 = vmatpush1.msra.mxu0 0.0
    %1461 = vmatprep.subr.mxu0 0.0
    %1462 = vmatpush1.msra.mxu0 0.0
    %1463 = vmatprep.subr.mxu0 0.0
    %1464 = vmatpush1.msra.mxu0 0.0
    %1465 = vmatprep.subr.mxu0 0.0
    %1466 = vmatpush1.msra.mxu0 0.0
    %1467 = vmatprep.subr.mxu0 0.0
    %1468 = vmatpush1.msra.mxu0 0.0
    %1469 = vmatprep.subr.mxu0 0.0
    %1470 = vmatpush1.msra.mxu0 0.0
    %1471 = vmatprep.subr.mxu0 0.0
    %1472 = vmatpush1.msra.mxu0 0.0
    %1473 = vmatprep.mubr.f32.mxu0 0.0
    %1474 = vmatmul.mubr.f32.gmra.mrb[0].mxu0 %v1368
    %v1475 = vpop.f32.mrb[0].mxu0
    %v1476 = vadd.f32 0.0, %v1475
    %v1477 = vpop.f32.mrb[0].mxu0
    %1478 = vmatprep.mubr.f32.mxu0 0.0
    %1479 = vmatmul.mubr.f32.gmra.mrb[0].mxu0 %v1371
    %v1480 = vpop.f32.mrb[0].mxu0
    %v1481 = vadd.f32 0.0, %v1480
    %v1482 = vpop.f32.mrb[0].mxu0
    %1483 = vmatprep.mubr.f32.mxu0 0.0
    %1484 = vmatmul.mubr.f32.gmra.mrb[0].mxu0 %v1374
    %v1485 = vpop.f32.mrb[0].mxu0
    %v1486 = vadd.f32 0.0, %v1485
    %v1487 = vpop.f32.mrb[0].mxu0
    %1488 = vmatprep.mubr.f32.mxu0 0.0
    %1489 = vmatmul.mubr.f32.gmra.mrb[0].mxu0 %v1377
    %v1490 = vpop.f32.mrb[0].mxu0
    %v1491 = vadd.f32 0.0, %v1490
    %v1492 = vpop.f32.mrb[0].mxu0
    %1493 = vmatprep.mubr.f32.mxu0 0.0
    %1494 = vmatmul.mubr.f32.gmra.mrb[0].mxu0 %v1380
    %v1495 = vpop.f32.mrb[0].mxu0
    %v1496 = vadd.f32 0.0, %v1495
    %v1497 = vpop.f32.mrb[0].mxu0
    %1498 = vmatprep.mubr.f32.mxu0 0.0
    %1499 = vmatmul.mubr.f32.gmra.mrb[0].mxu0 %v1383
    %v1500 = vpop.f32.mrb[0].mxu0
    %v1501 = vadd.f32 0.0, %v1500
    %v1502 = vpop.f32.mrb[0].mxu0
    %1503 = vmatprep.mubr.f32.mxu0 0.0
    %1504 = vmatmul.mubr.f32.gmra.mrb[0].mxu0 %v1386
    %v1505 = vpop.f32.mrb[0].mxu0
    %v1506 = vadd.f32 0.0, %v1505
    %v1507 = vpop.f32.mrb[0].mxu0
    %1508 = vmatprep.mubr.f32.mxu0 0.0
    %1509 = vmatmul.mubr.f32.gmra.mrb[0].mxu0 %v1389
    %v1510 = vpop.f32.mrb[0].mxu0
    %v1511 = vadd.f32 0.0, %v1510
    %v1512 = vpop.f32.mrb[0].mxu0
    %1513 = vmatprep.mubr.f32.mxu0 0.0
    %1514 = vmatmul.mubr.f32.gmra.mrb[0].mxu0 %v1392
    %v1515 = vpop.f32.mrb[0].mxu0
    %v1516 = vadd.f32 0.0, %v1515
    %v1517 = vpop.f32.mrb[0].mxu0
    %1518 = vmatprep.mubr.f32.mxu0 0.0
    %1519 = vmatmul.mubr.f32.gmra.mrb[0].mxu0 %v1395
    %v1520 = vpop.f32.mrb[0].mxu0
    %v1521 = vadd.f32 0.0, %v1520
    %v1522 = vpop.f32.mrb[0].mxu0
    %1523 = vmatprep.mubr.f32.mxu0 0.0
    %1524 = vmatmul.mubr.f32.gmra.mrb[0].mxu0 %v1398
    %v1525 = vpop.f32.mrb[0].mxu0
    %v1526 = vadd.f32 0.0, %v1525
    %v1527 = vpop.f32.mrb[0].mxu0
    %1528 = vmatprep.mubr.f32.mxu0 0.0
    %1529 = vmatmul.mubr.f32.gmra.mrb[0].mxu0 %v1401
    %v1530 = vpop.f32.mrb[0].mxu0
    %v1531 = vadd.f32 0.0, %v1530
    %v1532 = vpop.f32.mrb[0].mxu0
    %1533 = vmatprep.mubr.f32.mxu0 0.0
    %1534 = vmatmul.mubr.f32.gmra.mrb[0].mxu0 %v1404
    %v1535 = vpop.f32.mrb[0].mxu0
    %v1536 = vadd.f32 0.0, %v1535
    %v1537 = vpop.f32.mrb[0].mxu0
    %1538 = vmatprep.mubr.f32.mxu0 0.0
    %1539 = vmatmul.mubr.f32.gmra.mrb[0].mxu0 %v1407
    %v1540 = vpop.f32.mrb[0].mxu0
    %v1541 = vadd.f32 0.0, %v1540
    %v1542 = vpop.f32.mrb[0].mxu0
    %1543 = vdwg.mxu0
    %v1544 = vadd.f32 %v1184, %v1476
    %v1545 = vadd.f32 %v1185, %v1481
    %v1546 = vadd.f32 %v1186, %v1486
    %v1547 = vadd.f32 %v1187, %v1491
    %v1548 = vadd.f32 %v1188, %v1496
    %v1549 = vadd.f32 %v1189, %v1501
    %v1550 = vadd.f32 %v1190, %v1506
    %v1551 = vadd.f32 %v1191, %v1511
    %v1552 = vadd.f32 %v1192, %v1516
    %v1553 = vadd.f32 %v1193, %v1521
    %v1554 = vadd.f32 %v1194, %v1526
    %v1555 = vadd.f32 %v1195, %v1531
    %v1556 = vadd.f32 %v1196, %v1536
    %v1557 = vadd.f32 %v1197, %v1541
    %s1558 = scalar_lea.vmem %s1, 896
    %v1559 = vld [vmem:[%s1558] sm:$0xff]
    %v1560 = vld [vmem:[%s1558 + $0x8] sm:$0xff]
    %v1561 = vld [vmem:[%s1558 + $0x10] sm:$0xff]
    %v1562 = vld [vmem:[%s1558 + $0x18] sm:$0xff]
    %v1563 = vld [vmem:[%s1558 + $0x20] sm:$0xff]
    %v1564 = vld [vmem:[%s1558 + $0x28] sm:$0xff]
    %v1565 = vld [vmem:[%s1558 + $0x30] sm:$0xff]
    %v1566 = vld [vmem:[%s1558 + $0x38] sm:$0xff]
    %v1567 = vld [vmem:[%s1558 + $0x40] sm:$0xff]
    %v1568 = vld [vmem:[%s1558 + $0x48] sm:$0xff]
    %v1569 = vld [vmem:[%s1558 + $0x50] sm:$0xff]
    %v1570 = vld [vmem:[%s1558 + $0x58] sm:$0xff]
    %v1571 = vld [vmem:[%s1558 + $0x60] sm:$0xff]
    %v1572 = vld [vmem:[%s1558 + $0x68] sm:$0xff]
    %v1573 = vld [vmem:[%s1558 + $0x70] sm:$0xff]
    %v1574 = vld [vmem:[%s1558 + $0x78] sm:$0xff]
    %v1575 = vld [vmem:[%s1558 + $0x80] sm:$0xff]
    %v1576 = vld [vmem:[%s1558 + $0x88] sm:$0xff]
    %v1577 = vld [vmem:[%s1558 + $0x90] sm:$0xff]
    %v1578 = vld [vmem:[%s1558 + $0x98] sm:$0xff]
    %v1579 = vld [vmem:[%s1558 + $0xa0] sm:$0xff]
    %v1580 = vld [vmem:[%s1558 + $0xa8] sm:$0xff]
    %v1581 = vld [vmem:[%s1558 + $0xb0] sm:$0xff]
    %v1582 = vld [vmem:[%s1558 + $0xb8] sm:$0xff]
    %v1583 = vld [vmem:[%s1558 + $0xc0] sm:$0xff]
    %v1584 = vld [vmem:[%s1558 + $0xc8] sm:$0xff]
    %v1585 = vld [vmem:[%s1558 + $0xd0] sm:$0xff]
    %v1586 = vld [vmem:[%s1558 + $0xd8] sm:$0xff]
    %1587 = vmatprep.subr.mxu0 0.0
    %1588 = vmatpush1.msra.mxu0 %v115
    %1589 = vmatprep.subr.mxu0 0.0
    %1590 = vmatpush1.msra.mxu0 %v116
    %1591 = vmatprep.subr.mxu0 0.0
    %1592 = vmatpush1.msra.mxu0 %v117
    %1593 = vmatprep.subr.mxu0 0.0
    %1594 = vmatpush1.msra.mxu0 %v118
    %1595 = vmatprep.subr.mxu0 0.0
    %1596 = vmatpush1.msra.mxu0 %v119
    %1597 = vmatprep.subr.mxu0 0.0
    %1598 = vmatpush1.msra.mxu0 %v120
    %1599 = vmatprep.subr.mxu0 0.0
    %1600 = vmatpush1.msra.mxu0 %v121
    %1601 = vmatprep.subr.mxu0 0.0
    %1602 = vmatpush1.msra.mxu0 %v122
    %1603 = vmatprep.subr.mxu0 0.0
    %1604 = vmatpush1.msra.mxu0 %v123
    %1605 = vmatprep.subr.mxu0 0.0
    %1606 = vmatpush1.msra.mxu0 %v124
    %1607 = vmatprep.subr.mxu0 0.0
    %1608 = vmatpush1.msra.mxu0 %v125
    %1609 = vmatprep.subr.mxu0 0.0
    %1610 = vmatpush1.msra.mxu0 %v126
    %1611 = vmatprep.subr.mxu0 0.0
    %1612 = vmatpush1.msra.mxu0 %v127
    %1613 = vmatprep.subr.mxu0 0.0
    %1614 = vmatpush1.msra.mxu0 %v128
    %1615 = vmatprep.subr.mxu0 0.0
    %1616 = vmatpush1.msra.mxu0 %v129
    %1617 = vmatprep.subr.mxu0 0.0
    %1618 = vmatpush1.msra.mxu0 %v130
    %1619 = vmatprep.subr.mxu0 0.0
    %1620 = vmatpush1.msra.mxu0 %v131
    %1621 = vmatprep.subr.mxu0 0.0
    %1622 = vmatpush1.msra.mxu0 %v132
    %1623 = vmatprep.subr.mxu0 0.0
    %1624 = vmatpush1.msra.mxu0 %v133
    %1625 = vmatprep.subr.mxu0 0.0
    %1626 = vmatpush1.msra.mxu0 %v134
    %1627 = vmatprep.subr.mxu0 0.0
    %1628 = vmatpush1.msra.mxu0 %v135
    %1629 = vmatprep.subr.mxu0 0.0
    %1630 = vmatpush1.msra.mxu0 %v136
    %1631 = vmatprep.subr.mxu0 0.0
    %1632 = vmatpush1.msra.mxu0 %v137
    %1633 = vmatprep.subr.mxu0 0.0
    %1634 = vmatpush1.msra.mxu0 %v138
    %1635 = vmatprep.subr.mxu0 0.0
    %1636 = vmatpush1.msra.mxu0 %v139
    %1637 = vmatprep.subr.mxu0 0.0
    %1638 = vmatpush1.msra.mxu0 %v140
    %1639 = vmatprep.subr.mxu0 0.0
    %1640 = vmatpush1.msra.mxu0 %v141
    %1641 = vmatprep.subr.mxu0 0.0
    %1642 = vmatpush1.msra.mxu0 %v142
    %1643 = vmatprep.subr.mxu0 0.0
    %1644 = vmatpush1.msra.mxu0 %v143
    %1645 = vmatprep.subr.mxu0 0.0
    %1646 = vmatpush1.msra.mxu0 %v144
    %1647 = vmatprep.subr.mxu0 0.0
    %1648 = vmatpush1.msra.mxu0 %v145
    %1649 = vmatprep.subr.mxu0 0.0
    %1650 = vmatpush1.msra.mxu0 %v146
    %1651 = vmatprep.mubr.f32.mxu0 %v1560
    %1652 = vmatmul.mubr.f32.gmra.mrb[0].mxu0 %v1559
    %v1653 = vpop.f32.mrb[0].mxu0
    %v1654 = vadd.f32 0.0, %v1653
    %v1655 = vpop.f32.mrb[0].mxu0
    %1656 = vmatprep.mubr.f32.mxu0 %v1562
    %1657 = vmatmul.mubr.f32.gmra.mrb[0].mxu0 %v1561
    %v1658 = vpop.f32.mrb[0].mxu0
    %v1659 = vadd.f32 0.0, %v1658
    %v1660 = vpop.f32.mrb[0].mxu0
    %1661 = vmatprep.mubr.f32.mxu0 %v1564
    %1662 = vmatmul.mubr.f32.gmra.mrb[0].mxu0 %v1563
    %v1663 = vpop.f32.mrb[0].mxu0
    %v1664 = vadd.f32 0.0, %v1663
    %v1665 = vpop.f32.mrb[0].mxu0
    %1666 = vmatprep.mubr.f32.mxu0 %v1566
    %1667 = vmatmul.mubr.f32.gmra.mrb[0].mxu0 %v1565
    %v1668 = vpop.f32.mrb[0].mxu0
    %v1669 = vadd.f32 0.0, %v1668
    %v1670 = vpop.f32.mrb[0].mxu0
    %1671 = vmatprep.mubr.f32.mxu0 %v1568
    %1672 = vmatmul.mubr.f32.gmra.mrb[0].mxu0 %v1567
    %v1673 = vpop.f32.mrb[0].mxu0
    %v1674 = vadd.f32 0.0, %v1673
    %v1675 = vpop.f32.mrb[0].mxu0
    %1676 = vmatprep.mubr.f32.mxu0 %v1570
    %1677 = vmatmul.mubr.f32.gmra.mrb[0].mxu0 %v1569
    %v1678 = vpop.f32.mrb[0].mxu0
    %v1679 = vadd.f32 0.0, %v1678
    %v1680 = vpop.f32.mrb[0].mxu0
    %1681 = vmatprep.mubr.f32.mxu0 %v1572
    %1682 = vmatmul.mubr.f32.gmra.mrb[0].mxu0 %v1571
    %v1683 = vpop.f32.mrb[0].mxu0
    %v1684 = vadd.f32 0.0, %v1683
    %v1685 = vpop.f32.mrb[0].mxu0
    %1686 = vmatprep.mubr.f32.mxu0 %v1574
    %1687 = vmatmul.mubr.f32.gmra.mrb[0].mxu0 %v1573
    %v1688 = vpop.f32.mrb[0].mxu0
    %v1689 = vadd.f32 0.0, %v1688
    %v1690 = vpop.f32.mrb[0].mxu0
    %1691 = vmatprep.mubr.f32.mxu0 %v1576
    %1692 = vmatmul.mubr.f32.gmra.mrb[0].mxu0 %v1575
    %v1693 = vpop.f32.mrb[0].mxu0
    %v1694 = vadd.f32 0.0, %v1693
    %v1695 = vpop.f32.mrb[0].mxu0
    %1696 = vmatprep.mubr.f32.mxu0 %v1578
    %1697 = vmatmul.mubr.f32.gmra.mrb[0].mxu0 %v1577
    %v1698 = vpop.f32.mrb[0].mxu0
    %v1699 = vadd.f32 0.0, %v1698
    %v1700 = vpop.f32.mrb[0].mxu0
    %1701 = vmatprep.mubr.f32.mxu0 %v1580
    %1702 = vmatmul.mubr.f32.gmra.mrb[0].mxu0 %v1579
    %v1703 = vpop.f32.mrb[0].mxu0
    %v1704 = vadd.f32 0.0, %v1703
    %v1705 = vpop.f32.mrb[0].mxu0
    %1706 = vmatprep.mubr.f32.mxu0 %v1582
    %1707 = vmatmul.mubr.f32.gmra.mrb[0].mxu0 %v1581
    %v1708 = vpop.f32.mrb[0].mxu0
    %v1709 = vadd.f32 0.0, %v1708
    %v1710 = vpop.f32.mrb[0].mxu0
    %1711 = vmatprep.mubr.f32.mxu0 %v1584
    %1712 = vmatmul.mubr.f32.gmra.mrb[0].mxu0 %v1583
    %v1713 = vpop.f32.mrb[0].mxu0
    %v1714 = vadd.f32 0.0, %v1713
    %v1715 = vpop.f32.mrb[0].mxu0
    %1716 = vmatprep.mubr.f32.mxu0 %v1586
    %1717 = vmatmul.mubr.f32.gmra.mrb[0].mxu0 %v1585
    %v1718 = vpop.f32.mrb[0].mxu0
    %v1719 = vadd.f32 0.0, %v1718
    %v1720 = vpop.f32.mrb[0].mxu0
    %1721 = vdwg.mxu0
    %s1722 = scalar_lea.vmem [#allocation2], 128
    %v1723 = vld [vmem:[%s1722] sm:$0xff]
    %v1724 = vld [vmem:[%s1722 + $0x8] sm:$0xff]
    %v1725 = vld [vmem:[%s1722 + $0x10] sm:$0xff]
    %v1726 = vld [vmem:[%s1722 + $0x18] sm:$0xff]
    %v1728 = vsel %vm483, %v1654, 0
    %v1731 = vsel %vm483, %v1659, 0
    %v1734 = vsel %vm483, %v1664, 0
    %v1737 = vsel %vm483, %v1669, 0
    %v1740 = vsel %vm483, %v1674, 0
    %v1743 = vsel %vm483, %v1679, 0
    %v1746 = vsel %vm483, %v1684, 0
    %v1749 = vsel %vm483, %v1689, 0
    %v1752 = vsel %vm483, %v1694, 0
    %v1755 = vsel %vm483, %v1699, 0
    %v1758 = vsel %vm483, %v1704, 0
    %v1761 = vsel %vm483, %v1709, 0
    %v1764 = vsel %vm483, %v1714, 0
    %v1767 = vsel %vm483, %v1719, 0
    %1769 = vmatprep.subr.mxu0 0.0
    %1770 = vmatpush1.msra.mxu0 %v1723
    %1771 = vmatprep.subr.mxu0 0.0
    %1772 = vmatpush1.msra.mxu0 %v1724
    %1773 = vmatprep.subr.mxu0 0.0
    %1774 = vmatpush1.msra.mxu0 %v1725
    %1775 = vmatprep.subr.mxu0 0.0
    %1776 = vmatpush1.msra.mxu0 %v1726
    %1777 = vmatprep.subr.mxu0 0.0
    %1778 = vmatpush1.msra.mxu0 0.0
    %1779 = vmatprep.subr.mxu0 0.0
    %1780 = vmatpush1.msra.mxu0 0.0
    %1781 = vmatprep.subr.mxu0 0.0
    %1782 = vmatpush1.msra.mxu0 0.0
    %1783 = vmatprep.subr.mxu0 0.0
    %1784 = vmatpush1.msra.mxu0 0.0
    %1785 = vmatprep.subr.mxu0 0.0
    %1786 = vmatpush1.msra.mxu0 0.0
    %1787 = vmatprep.subr.mxu0 0.0
    %1788 = vmatpush1.msra.mxu0 0.0
    %1789 = vmatprep.subr.mxu0 0.0
    %1790 = vmatpush1.msra.mxu0 0.0
    %1791 = vmatprep.subr.mxu0 0.0
    %1792 = vmatpush1.msra.mxu0 0.0
    %1793 = vmatprep.subr.mxu0 0.0
    %1794 = vmatpush1.msra.mxu0 0.0
    %1795 = vmatprep.subr.mxu0 0.0
    %1796 = vmatpush1.msra.mxu0 0.0
    %1797 = vmatprep.subr.mxu0 0.0
    %1798 = vmatpush1.msra.mxu0 0.0
    %1799 = vmatprep.subr.mxu0 0.0
    %1800 = vmatpush1.msra.mxu0 0.0
    %1801 = vmatprep.subr.mxu0 0.0
    %1802 = vmatpush1.msra.mxu0 0.0
    %1803 = vmatprep.subr.mxu0 0.0
    %1804 = vmatpush1.msra.mxu0 0.0
    %1805 = vmatprep.subr.mxu0 0.0
    %1806 = vmatpush1.msra.mxu0 0.0
    %1807 = vmatprep.subr.mxu0 0.0
    %1808 = vmatpush1.msra.mxu0 0.0
    %1809 = vmatprep.subr.mxu0 0.0
    %1810 = vmatpush1.msra.mxu0 0.0
    %1811 = vmatprep.subr.mxu0 0.0
    %1812 = vmatpush1.msra.mxu0 0.0
    %1813 = vmatprep.subr.mxu0 0.0
    %1814 = vmatpush1.msra.mxu0 0.0
    %1815 = vmatprep.subr.mxu0 0.0
    %1816 = vmatpush1.msra.mxu0 0.0
    %1817 = vmatprep.subr.mxu0 0.0
    %1818 = vmatpush1.msra.mxu0 0.0
    %1819 = vmatprep.subr.mxu0 0.0
    %1820 = vmatpush1.msra.mxu0 0.0
    %1821 = vmatprep.subr.mxu0 0.0
    %1822 = vmatpush1.msra.mxu0 0.0
    %1823 = vmatprep.subr.mxu0 0.0
    %1824 = vmatpush1.msra.mxu0 0.0
    %1825 = vmatprep.subr.mxu0 0.0
    %1826 = vmatpush1.msra.mxu0 0.0
    %1827 = vmatprep.subr.mxu0 0.0
    %1828 = vmatpush1.msra.mxu0 0.0
    %1829 = vmatprep.subr.mxu0 0.0
    %1830 = vmatpush1.msra.mxu0 0.0
    %1831 = vmatprep.subr.mxu0 0.0
    %1832 = vmatpush1.msra.mxu0 0.0
    %1833 = vmatprep.mubr.f32.mxu0 0.0
    %1834 = vmatmul.mubr.f32.gmra.mrb[0].mxu0 %v1728
    %v1835 = vpop.f32.mrb[0].mxu0
    %v1836 = vadd.f32 0.0, %v1835
    %v1837 = vpop.f32.mrb[0].mxu0
    %1838 = vmatprep.mubr.f32.mxu0 0.0
    %1839 = vmatmul.mubr.f32.gmra.mrb[0].mxu0 %v1731
    %v1840 = vpop.f32.mrb[0].mxu0
    %v1841 = vadd.f32 0.0, %v1840
    %v1842 = vpop.f32.mrb[0].mxu0
    %1843 = vmatprep.mubr.f32.mxu0 0.0
    %1844 = vmatmul.mubr.f32.gmra.mrb[0].mxu0 %v1734
    %v1845 = vpop.f32.mrb[0].mxu0
    %v1846 = vadd.f32 0.0, %v1845
    %v1847 = vpop.f32.mrb[0].mxu0
    %1848 = vmatprep.mubr.f32.mxu0 0.0
    %1849 = vmatmul.mubr.f32.gmra.mrb[0].mxu0 %v1737
    %v1850 = vpop.f32.mrb[0].mxu0
    %v1851 = vadd.f32 0.0, %v1850
    %v1852 = vpop.f32.mrb[0].mxu0
    %1853 = vmatprep.mubr.f32.mxu0 0.0
    %1854 = vmatmul.mubr.f32.gmra.mrb[0].mxu0 %v1740
    %v1855 = vpop.f32.mrb[0].mxu0
    %v1856 = vadd.f32 0.0, %v1855
    %v1857 = vpop.f32.mrb[0].mxu0
    %1858 = vmatprep.mubr.f32.mxu0 0.0
    %1859 = vmatmul.mubr.f32.gmra.mrb[0].mxu0 %v1743
    %v1860 = vpop.f32.mrb[0].mxu0
    %v1861 = vadd.f32 0.0, %v1860
    %v1862 = vpop.f32.mrb[0].mxu0
    %1863 = vmatprep.mubr.f32.mxu0 0.0
    %1864 = vmatmul.mubr.f32.gmra.mrb[0].mxu0 %v1746
    %v1865 = vpop.f32.mrb[0].mxu0
    %v1866 = vadd.f32 0.0, %v1865
    %v1867 = vpop.f32.mrb[0].mxu0
    %1868 = vmatprep.mubr.f32.mxu0 0.0
    %1869 = vmatmul.mubr.f32.gmra.mrb[0].mxu0 %v1749
    %v1870 = vpop.f32.mrb[0].mxu0
    %v1871 = vadd.f32 0.0, %v1870
    %v1872 = vpop.f32.mrb[0].mxu0
    %1873 = vmatprep.mubr.f32.mxu0 0.0
    %1874 = vmatmul.mubr.f32.gmra.mrb[0].mxu0 %v1752
    %v1875 = vpop.f32.mrb[0].mxu0
    %v1876 = vadd.f32 0.0, %v1875
    %v1877 = vpop.f32.mrb[0].mxu0
    %1878 = vmatprep.mubr.f32.mxu0 0.0
    %1879 = vmatmul.mubr.f32.gmra.mrb[0].mxu0 %v1755
    %v1880 = vpop.f32.mrb[0].mxu0
    %v1881 = vadd.f32 0.0, %v1880
    %v1882 = vpop.f32.mrb[0].mxu0
    %1883 = vmatprep.mubr.f32.mxu0 0.0
    %1884 = vmatmul.mubr.f32.gmra.mrb[0].mxu0 %v1758
    %v1885 = vpop.f32.mrb[0].mxu0
    %v1886 = vadd.f32 0.0, %v1885
    %v1887 = vpop.f32.mrb[0].mxu0
    %1888 = vmatprep.mubr.f32.mxu0 0.0
    %1889 = vmatmul.mubr.f32.gmra.mrb[0].mxu0 %v1761
    %v1890 = vpop.f32.mrb[0].mxu0
    %v1891 = vadd.f32 0.0, %v1890
    %v1892 = vpop.f32.mrb[0].mxu0
    %1893 = vmatprep.mubr.f32.mxu0 0.0
    %1894 = vmatmul.mubr.f32.gmra.mrb[0].mxu0 %v1764
    %v1895 = vpop.f32.mrb[0].mxu0
    %v1896 = vadd.f32 0.0, %v1895
    %v1897 = vpop.f32.mrb[0].mxu0
    %1898 = vmatprep.mubr.f32.mxu0 0.0
    %1899 = vmatmul.mubr.f32.gmra.mrb[0].mxu0 %v1767
    %v1900 = vpop.f32.mrb[0].mxu0
    %v1901 = vadd.f32 0.0, %v1900
    %v1902 = vpop.f32.mrb[0].mxu0
    %1903 = vdwg.mxu0
    %v1904 = vadd.f32 %v1544, %v1836
    %v1905 = vadd.f32 %v1545, %v1841
    %v1906 = vadd.f32 %v1546, %v1846
    %v1907 = vadd.f32 %v1547, %v1851
    %v1908 = vadd.f32 %v1548, %v1856
    %v1909 = vadd.f32 %v1549, %v1861
    %v1910 = vadd.f32 %v1550, %v1866
    %v1911 = vadd.f32 %v1551, %v1871
    %v1912 = vadd.f32 %v1552, %v1876
    %v1913 = vadd.f32 %v1553, %v1881
    %v1914 = vadd.f32 %v1554, %v1886
    %v1915 = vadd.f32 %v1555, %v1891
    %v1916 = vadd.f32 %v1556, %v1896
    %v1917 = vadd.f32 %v1557, %v1901
    %s1918 = scalar_lea.vmem %s1, 1120
    %v1919 = vld [vmem:[%s1918] sm:$0xff]
    %v1920 = vld [vmem:[%s1918 + $0x8] sm:$0xff]
    %v1921 = vld [vmem:[%s1918 + $0x10] sm:$0xff]
    %v1922 = vld [vmem:[%s1918 + $0x18] sm:$0xff]
    %v1923 = vld [vmem:[%s1918 + $0x20] sm:$0xff]
    %v1924 = vld [vmem:[%s1918 + $0x28] sm:$0xff]
    %v1925 = vld [vmem:[%s1918 + $0x30] sm:$0xff]
    %v1926 = vld [vmem:[%s1918 + $0x38] sm:$0xff]
    %v1927 = vld [vmem:[%s1918 + $0x40] sm:$0xff]
    %v1928 = vld [vmem:[%s1918 + $0x48] sm:$0xff]
    %v1929 = vld [vmem:[%s1918 + $0x50] sm:$0xff]
    %v1930 = vld [vmem:[%s1918 + $0x58] sm:$0xff]
    %v1931 = vld [vmem:[%s1918 + $0x60] sm:$0xff]
    %v1932 = vld [vmem:[%s1918 + $0x68] sm:$0xff]
    %v1933 = vld [vmem:[%s1918 + $0x70] sm:$0xff]
    %v1934 = vld [vmem:[%s1918 + $0x78] sm:$0xff]
    %v1935 = vld [vmem:[%s1918 + $0x80] sm:$0xff]
    %v1936 = vld [vmem:[%s1918 + $0x88] sm:$0xff]
    %v1937 = vld [vmem:[%s1918 + $0x90] sm:$0xff]
    %v1938 = vld [vmem:[%s1918 + $0x98] sm:$0xff]
    %v1939 = vld [vmem:[%s1918 + $0xa0] sm:$0xff]
    %v1940 = vld [vmem:[%s1918 + $0xa8] sm:$0xff]
    %v1941 = vld [vmem:[%s1918 + $0xb0] sm:$0xff]
    %v1942 = vld [vmem:[%s1918 + $0xb8] sm:$0xff]
    %v1943 = vld [vmem:[%s1918 + $0xc0] sm:$0xff]
    %v1944 = vld [vmem:[%s1918 + $0xc8] sm:$0xff]
    %v1945 = vld [vmem:[%s1918 + $0xd0] sm:$0xff]
    %v1946 = vld [vmem:[%s1918 + $0xd8] sm:$0xff]
    %1947 = vmatprep.subr.mxu0 0.0
    %1948 = vmatpush1.msra.mxu0 %v115
    %1949 = vmatprep.subr.mxu0 0.0
    %1950 = vmatpush1.msra.mxu0 %v116
    %1951 = vmatprep.subr.mxu0 0.0
    %1952 = vmatpush1.msra.mxu0 %v117
    %1953 = vmatprep.subr.mxu0 0.0
    %1954 = vmatpush1.msra.mxu0 %v118
    %1955 = vmatprep.subr.mxu0 0.0
    %1956 = vmatpush1.msra.mxu0 %v119
    %1957 = vmatprep.subr.mxu0 0.0
    %1958 = vmatpush1.msra.mxu0 %v120
    %1959 = vmatprep.subr.mxu0 0.0
    %1960 = vmatpush1.msra.mxu0 %v121
    %1961 = vmatprep.subr.mxu0 0.0
    %1962 = vmatpush1.msra.mxu0 %v122
    %1963 = vmatprep.subr.mxu0 0.0
    %1964 = vmatpush1.msra.mxu0 %v123
    %1965 = vmatprep.subr.mxu0 0.0
    %1966 = vmatpush1.msra.mxu0 %v124
    %1967 = vmatprep.subr.mxu0 0.0
    %1968 = vmatpush1.msra.mxu0 %v125
    %1969 = vmatprep.subr.mxu0 0.0
    %1970 = vmatpush1.msra.mxu0 %v126
    %1971 = vmatprep.subr.mxu0 0.0
    %1972 = vmatpush1.msra.mxu0 %v127
    %1973 = vmatprep.subr.mxu0 0.0
    %1974 = vmatpush1.msra.mxu0 %v128
    %1975 = vmatprep.subr.mxu0 0.0
    %1976 = vmatpush1.msra.mxu0 %v129
    %1977 = vmatprep.subr.mxu0 0.0
    %1978 = vmatpush1.msra.mxu0 %v130
    %1979 = vmatprep.subr.mxu0 0.0
    %1980 = vmatpush1.msra.mxu0 %v131
    %1981 = vmatprep.subr.mxu0 0.0
    %1982 = vmatpush1.msra.mxu0 %v132
    %1983 = vmatprep.subr.mxu0 0.0
    %1984 = vmatpush1.msra.mxu0 %v133
    %1985 = vmatprep.subr.mxu0 0.0
    %1986 = vmatpush1.msra.mxu0 %v134
    %1987 = vmatprep.subr.mxu0 0.0
    %1988 = vmatpush1.msra.mxu0 %v135
    %1989 = vmatprep.subr.mxu0 0.0
    %1990 = vmatpush1.msra.mxu0 %v136
    %1991 = vmatprep.subr.mxu0 0.0
    %1992 = vmatpush1.msra.mxu0 %v137
    %1993 = vmatprep.subr.mxu0 0.0
    %1994 = vmatpush1.msra.mxu0 %v138
    %1995 = vmatprep.subr.mxu0 0.0
    %1996 = vmatpush1.msra.mxu0 %v139
    %1997 = vmatprep.subr.mxu0 0.0
    %1998 = vmatpush1.msra.mxu0 %v140
    %1999 = vmatprep.subr.mxu0 0.0
    %2000 = vmatpush1.msra.mxu0 %v141
    %2001 = vmatprep.subr.mxu0 0.0
    %2002 = vmatpush1.msra.mxu0 %v142
    %2003 = vmatprep.subr.mxu0 0.0
    %2004 = vmatpush1.msra.mxu0 %v143
    %2005 = vmatprep.subr.mxu0 0.0
    %2006 = vmatpush1.msra.mxu0 %v144
    %2007 = vmatprep.subr.mxu0 0.0
    %2008 = vmatpush1.msra.mxu0 %v145
    %2009 = vmatprep.subr.mxu0 0.0
    %2010 = vmatpush1.msra.mxu0 %v146
    %2011 = vmatprep.mubr.f32.mxu0 %v1920
    %2012 = vmatmul.mubr.f32.gmra.mrb[0].mxu0 %v1919
    %v2013 = vpop.f32.mrb[0].mxu0
    %v2014 = vadd.f32 0.0, %v2013
    %v2015 = vpop.f32.mrb[0].mxu0
    %2016 = vmatprep.mubr.f32.mxu0 %v1922
    %2017 = vmatmul.mubr.f32.gmra.mrb[0].mxu0 %v1921
    %v2018 = vpop.f32.mrb[0].mxu0
    %v2019 = vadd.f32 0.0, %v2018
    %v2020 = vpop.f32.mrb[0].mxu0
    %2021 = vmatprep.mubr.f32.mxu0 %v1924
    %2022 = vmatmul.mubr.f32.gmra.mrb[0].mxu0 %v1923
    %v2023 = vpop.f32.mrb[0].mxu0
    %v2024 = vadd.f32 0.0, %v2023
    %v2025 = vpop.f32.mrb[0].mxu0
    %2026 = vmatprep.mubr.f32.mxu0 %v1926
    %2027 = vmatmul.mubr.f32.gmra.mrb[0].mxu0 %v1925
    %v2028 = vpop.f32.mrb[0].mxu0
    %v2029 = vadd.f32 0.0, %v2028
    %v2030 = vpop.f32.mrb[0].mxu0
    %2031 = vmatprep.mubr.f32.mxu0 %v1928
    %2032 = vmatmul.mubr.f32.gmra.mrb[0].mxu0 %v1927
    %v2033 = vpop.f32.mrb[0].mxu0
    %v2034 = vadd.f32 0.0, %v2033
    %v2035 = vpop.f32.mrb[0].mxu0
    %2036 = vmatprep.mubr.f32.mxu0 %v1930
    %2037 = vmatmul.mubr.f32.gmra.mrb[0].mxu0 %v1929
    %v2038 = vpop.f32.mrb[0].mxu0
    %v2039 = vadd.f32 0.0, %v2038
    %v2040 = vpop.f32.mrb[0].mxu0
    %2041 = vmatprep.mubr.f32.mxu0 %v1932
    %2042 = vmatmul.mubr.f32.gmra.mrb[0].mxu0 %v1931
    %v2043 = vpop.f32.mrb[0].mxu0
    %v2044 = vadd.f32 0.0, %v2043
    %v2045 = vpop.f32.mrb[0].mxu0
    %2046 = vmatprep.mubr.f32.mxu0 %v1934
    %2047 = vmatmul.mubr.f32.gmra.mrb[0].mxu0 %v1933
    %v2048 = vpop.f32.mrb[0].mxu0
    %v2049 = vadd.f32 0.0, %v2048
    %v2050 = vpop.f32.mrb[0].mxu0
    %2051 = vmatprep.mubr.f32.mxu0 %v1936
    %2052 = vmatmul.mubr.f32.gmra.mrb[0].mxu0 %v1935
    %v2053 = vpop.f32.mrb[0].mxu0
    %v2054 = vadd.f32 0.0, %v2053
    %v2055 = vpop.f32.mrb[0].mxu0
    %2056 = vmatprep.mubr.f32.mxu0 %v1938
    %2057 = vmatmul.mubr.f32.gmra.mrb[0].mxu0 %v1937
    %v2058 = vpop.f32.mrb[0].mxu0
    %v2059 = vadd.f32 0.0, %v2058
    %v2060 = vpop.f32.mrb[0].mxu0
    %2061 = vmatprep.mubr.f32.mxu0 %v1940
    %2062 = vmatmul.mubr.f32.gmra.mrb[0].mxu0 %v1939
    %v2063 = vpop.f32.mrb[0].mxu0
    %v2064 = vadd.f32 0.0, %v2063
    %v2065 = vpop.f32.mrb[0].mxu0
    %2066 = vmatprep.mubr.f32.mxu0 %v1942
    %2067 = vmatmul.mubr.f32.gmra.mrb[0].mxu0 %v1941
    %v2068 = vpop.f32.mrb[0].mxu0
    %v2069 = vadd.f32 0.0, %v2068
    %v2070 = vpop.f32.mrb[0].mxu0
    %2071 = vmatprep.mubr.f32.mxu0 %v1944
    %2072 = vmatmul.mubr.f32.gmra.mrb[0].mxu0 %v1943
    %v2073 = vpop.f32.mrb[0].mxu0
    %v2074 = vadd.f32 0.0, %v2073
    %v2075 = vpop.f32.mrb[0].mxu0
    %2076 = vmatprep.mubr.f32.mxu0 %v1946
    %2077 = vmatmul.mubr.f32.gmra.mrb[0].mxu0 %v1945
    %v2078 = vpop.f32.mrb[0].mxu0
    %v2079 = vadd.f32 0.0, %v2078
    %v2080 = vpop.f32.mrb[0].mxu0
    %2081 = vdwg.mxu0
    %s2082 = scalar_lea.vmem [#allocation2], 160
    %v2083 = vld [vmem:[%s2082] sm:$0xff]
    %v2084 = vld [vmem:[%s2082 + $0x8] sm:$0xff]
    %v2085 = vld [vmem:[%s2082 + $0x10] sm:$0xff]
    %v2086 = vld [vmem:[%s2082 + $0x18] sm:$0xff]
    %v2088 = vsel %vm483, %v2014, 0
    %v2091 = vsel %vm483, %v2019, 0
    %v2094 = vsel %vm483, %v2024, 0
    %v2097 = vsel %vm483, %v2029, 0
    %v2100 = vsel %vm483, %v2034, 0
    %v2103 = vsel %vm483, %v2039, 0
    %v2106 = vsel %vm483, %v2044, 0
    %v2109 = vsel %vm483, %v2049, 0
    %v2112 = vsel %vm483, %v2054, 0
    %v2115 = vsel %vm483, %v2059, 0
    %v2118 = vsel %vm483, %v2064, 0
    %v2121 = vsel %vm483, %v2069, 0
    %v2124 = vsel %vm483, %v2074, 0
    %v2127 = vsel %vm483, %v2079, 0
    %2129 = vmatprep.subr.mxu0 0.0
    %2130 = vmatpush1.msra.mxu0 %v2083
    %2131 = vmatprep.subr.mxu0 0.0
    %2132 = vmatpush1.msra.mxu0 %v2084
    %2133 = vmatprep.subr.mxu0 0.0
    %2134 = vmatpush1.msra.mxu0 %v2085
    %2135 = vmatprep.subr.mxu0 0.0
    %2136 = vmatpush1.msra.mxu0 %v2086
    %2137 = vmatprep.subr.mxu0 0.0
    %2138 = vmatpush1.msra.mxu0 0.0
    %2139 = vmatprep.subr.mxu0 0.0
    %2140 = vmatpush1.msra.mxu0 0.0
    %2141 = vmatprep.subr.mxu0 0.0
    %2142 = vmatpush1.msra.mxu0 0.0
    %2143 = vmatprep.subr.mxu0 0.0
    %2144 = vmatpush1.msra.mxu0 0.0
    %2145 = vmatprep.subr.mxu0 0.0
    %2146 = vmatpush1.msra.mxu0 0.0
    %2147 = vmatprep.subr.mxu0 0.0
    %2148 = vmatpush1.msra.mxu0 0.0
    %2149 = vmatprep.subr.mxu0 0.0
    %2150 = vmatpush1.msra.mxu0 0.0
    %2151 = vmatprep.subr.mxu0 0.0
    %2152 = vmatpush1.msra.mxu0 0.0
    %2153 = vmatprep.subr.mxu0 0.0
    %2154 = vmatpush1.msra.mxu0 0.0
    %2155 = vmatprep.subr.mxu0 0.0
    %2156 = vmatpush1.msra.mxu0 0.0
    %2157 = vmatprep.subr.mxu0 0.0
    %2158 = vmatpush1.msra.mxu0 0.0
    %2159 = vmatprep.subr.mxu0 0.0
    %2160 = vmatpush1.msra.mxu0 0.0
    %2161 = vmatprep.subr.mxu0 0.0
    %2162 = vmatpush1.msra.mxu0 0.0
    %2163 = vmatprep.subr.mxu0 0.0
    %2164 = vmatpush1.msra.mxu0 0.0
    %2165 = vmatprep.subr.mxu0 0.0
    %2166 = vmatpush1.msra.mxu0 0.0
    %2167 = vmatprep.subr.mxu0 0.0
    %2168 = vmatpush1.msra.mxu0 0.0
    %2169 = vmatprep.subr.mxu0 0.0
    %2170 = vmatpush1.msra.mxu0 0.0
    %2171 = vmatprep.subr.mxu0 0.0
    %2172 = vmatpush1.msra.mxu0 0.0
    %2173 = vmatprep.subr.mxu0 0.0
    %2174 = vmatpush1.msra.mxu0 0.0
    %2175 = vmatprep.subr.mxu0 0.0
    %2176 = vmatpush1.msra.mxu0 0.0
    %2177 = vmatprep.subr.mxu0 0.0
    %2178 = vmatpush1.msra.mxu0 0.0
    %2179 = vmatprep.subr.mxu0 0.0
    %2180 = vmatpush1.msra.mxu0 0.0
    %2181 = vmatprep.subr.mxu0 0.0
    %2182 = vmatpush1.msra.mxu0 0.0
    %2183 = vmatprep.subr.mxu0 0.0
    %2184 = vmatpush1.msra.mxu0 0.0
    %2185 = vmatprep.subr.mxu0 0.0
    %2186 = vmatpush1.msra.mxu0 0.0
    %2187 = vmatprep.subr.mxu0 0.0
    %2188 = vmatpush1.msra.mxu0 0.0
    %2189 = vmatprep.subr.mxu0 0.0
    %2190 = vmatpush1.msra.mxu0 0.0
    %2191 = vmatprep.subr.mxu0 0.0
    %2192 = vmatpush1.msra.mxu0 0.0
    %2193 = vmatprep.mubr.f32.mxu0 0.0
    %2194 = vmatmul.mubr.f32.gmra.mrb[0].mxu0 %v2088
    %v2195 = vpop.f32.mrb[0].mxu0
    %v2196 = vadd.f32 0.0, %v2195
    %v2197 = vpop.f32.mrb[0].mxu0
    %2198 = vmatprep.mubr.f32.mxu0 0.0
    %2199 = vmatmul.mubr.f32.gmra.mrb[0].mxu0 %v2091
    %v2200 = vpop.f32.mrb[0].mxu0
    %v2201 = vadd.f32 0.0, %v2200
    %v2202 = vpop.f32.mrb[0].mxu0
    %2203 = vmatprep.mubr.f32.mxu0 0.0
    %2204 = vmatmul.mubr.f32.gmra.mrb[0].mxu0 %v2094
    %v2205 = vpop.f32.mrb[0].mxu0
    %v2206 = vadd.f32 0.0, %v2205
    %v2207 = vpop.f32.mrb[0].mxu0
    %2208 = vmatprep.mubr.f32.mxu0 0.0
    %2209 = vmatmul.mubr.f32.gmra.mrb[0].mxu0 %v2097
    %v2210 = vpop.f32.mrb[0].mxu0
    %v2211 = vadd.f32 0.0, %v2210
    %v2212 = vpop.f32.mrb[0].mxu0
    %2213 = vmatprep.mubr.f32.mxu0 0.0
    %2214 = vmatmul.mubr.f32.gmra.mrb[0].mxu0 %v2100
    %v2215 = vpop.f32.mrb[0].mxu0
    %v2216 = vadd.f32 0.0, %v2215
    %v2217 = vpop.f32.mrb[0].mxu0
    %2218 = vmatprep.mubr.f32.mxu0 0.0
    %2219 = vmatmul.mubr.f32.gmra.mrb[0].mxu0 %v2103
    %v2220 = vpop.f32.mrb[0].mxu0
    %v2221 = vadd.f32 0.0, %v2220
    %v2222 = vpop.f32.mrb[0].mxu0
    %2223 = vmatprep.mubr.f32.mxu0 0.0
    %2224 = vmatmul.mubr.f32.gmra.mrb[0].mxu0 %v2106
    %v2225 = vpop.f32.mrb[0].mxu0
    %v2226 = vadd.f32 0.0, %v2225
    %v2227 = vpop.f32.mrb[0].mxu0
    %2228 = vmatprep.mubr.f32.mxu0 0.0
    %2229 = vmatmul.mubr.f32.gmra.mrb[0].mxu0 %v2109
    %v2230 = vpop.f32.mrb[0].mxu0
    %v2231 = vadd.f32 0.0, %v2230
    %v2232 = vpop.f32.mrb[0].mxu0
    %2233 = vmatprep.mubr.f32.mxu0 0.0
    %2234 = vmatmul.mubr.f32.gmra.mrb[0].mxu0 %v2112
    %v2235 = vpop.f32.mrb[0].mxu0
    %v2236 = vadd.f32 0.0, %v2235
    %v2237 = vpop.f32.mrb[0].mxu0
    %2238 = vmatprep.mubr.f32.mxu0 0.0
    %2239 = vmatmul.mubr.f32.gmra.mrb[0].mxu0 %v2115
    %v2240 = vpop.f32.mrb[0].mxu0
    %v2241 = vadd.f32 0.0, %v2240
    %v2242 = vpop.f32.mrb[0].mxu0
    %2243 = vmatprep.mubr.f32.mxu0 0.0
    %2244 = vmatmul.mubr.f32.gmra.mrb[0].mxu0 %v2118
    %v2245 = vpop.f32.mrb[0].mxu0
    %v2246 = vadd.f32 0.0, %v2245
    %v2247 = vpop.f32.mrb[0].mxu0
    %2248 = vmatprep.mubr.f32.mxu0 0.0
    %2249 = vmatmul.mubr.f32.gmra.mrb[0].mxu0 %v2121
    %v2250 = vpop.f32.mrb[0].mxu0
    %v2251 = vadd.f32 0.0, %v2250
    %v2252 = vpop.f32.mrb[0].mxu0
    %2253 = vmatprep.mubr.f32.mxu0 0.0
    %2254 = vmatmul.mubr.f32.gmra.mrb[0].mxu0 %v2124
    %v2255 = vpop.f32.mrb[0].mxu0
    %v2256 = vadd.f32 0.0, %v2255
    %v2257 = vpop.f32.mrb[0].mxu0
    %2258 = vmatprep.mubr.f32.mxu0 0.0
    %2259 = vmatmul.mubr.f32.gmra.mrb[0].mxu0 %v2127
    %v2260 = vpop.f32.mrb[0].mxu0
    %v2261 = vadd.f32 0.0, %v2260
    %v2262 = vpop.f32.mrb[0].mxu0
    %2263 = vdwg.mxu0
    %v2264 = vadd.f32 %v1904, %v2196
    %v2265 = vadd.f32 %v1905, %v2201
    %v2266 = vadd.f32 %v1906, %v2206
    %v2267 = vadd.f32 %v1907, %v2211
    %v2268 = vadd.f32 %v1908, %v2216
    %v2269 = vadd.f32 %v1909, %v2221
    %v2270 = vadd.f32 %v1910, %v2226
    %v2271 = vadd.f32 %v1911, %v2231
    %v2272 = vadd.f32 %v1912, %v2236
    %v2273 = vadd.f32 %v1913, %v2241
    %v2274 = vadd.f32 %v1914, %v2246
    %v2275 = vadd.f32 %v1915, %v2251
    %v2276 = vadd.f32 %v1916, %v2256
    %v2277 = vadd.f32 %v1917, %v2261
    %v2278 = vmul.f32 %v2264, 0.25
    %v2279 = vmul.f32 %v2265, 0.25
    %v2280 = vmul.f32 %v2266, 0.25
    %v2281 = vmul.f32 %v2267, 0.25
    %v2282 = vmul.f32 %v2268, 0.25
    %v2283 = vmul.f32 %v2269, 0.25
    %v2284 = vmul.f32 %v2270, 0.25
    %v2285 = vmul.f32 %v2271, 0.25
    %v2286 = vmul.f32 %v2272, 0.25
    %v2287 = vmul.f32 %v2273, 0.25
    %v2288 = vmul.f32 %v2274, 0.25
    %v2289 = vmul.f32 %v2275, 0.25
    %v2290 = vmul.f32 %v2276, 0.25
    %v2291 = vmul.f32 %v2277, 0.25
    %v2292 = vld [vmem:[%s3] sm:$0x1]
    %v2294 = vlaneseq
    %v2295 = vshrl.u32 %v2294, 7
    %v2296 = vsub.s32 0, %v2295
    %v2297 = vrot.slane %v2292, %v2296
    %v2299 = vadd.f32 %v2278, %v2297
    %v2300 = vadd.f32 %v2279, %v2297
    %v2301 = vadd.f32 %v2280, %v2297
    %v2302 = vadd.f32 %v2281, %v2297
    %v2303 = vadd.f32 %v2282, %v2297
    %v2304 = vadd.f32 %v2283, %v2297
    %v2305 = vadd.f32 %v2284, %v2297
    %v2306 = vadd.f32 %v2285, %v2297
    %v2307 = vadd.f32 %v2286, %v2297
    %v2308 = vadd.f32 %v2287, %v2297
    %v2309 = vadd.f32 %v2288, %v2297
    %v2310 = vadd.f32 %v2289, %v2297
    %v2311 = vadd.f32 %v2290, %v2297
    %v2312 = vadd.f32 %v2291, %v2297
    %v2313 = vmax.f32 %v2299, 0.0
    %v2314 = vmax.f32 %v2300, 0.0
    %v2315 = vmax.f32 %v2301, 0.0
    %v2316 = vmax.f32 %v2302, 0.0
    %v2317 = vmax.f32 %v2303, 0.0
    %v2318 = vmax.f32 %v2304, 0.0
    %v2319 = vmax.f32 %v2305, 0.0
    %v2320 = vmax.f32 %v2306, 0.0
    %v2321 = vmax.f32 %v2307, 0.0
    %v2322 = vmax.f32 %v2308, 0.0
    %v2323 = vmax.f32 %v2309, 0.0
    %v2324 = vmax.f32 %v2310, 0.0
    %v2325 = vmax.f32 %v2311, 0.0
    %v2326 = vmax.f32 %v2312, 0.0
    %v2327 = vld [vmem:[%s4] sm:$0xff]
    %v2328 = vld [vmem:[%s4 + $0x8] sm:$0xff]
    %v2329 = vld [vmem:[%s4 + $0x10] sm:$0xff]
    %v2330 = vld [vmem:[%s4 + $0x18] sm:$0xff]
    %v2331 = vld [vmem:[%s4 + $0x20] sm:$0xff]
    %vm2332 = vcmask 916480
    %v2334 = vsel %vm2332, %v2327, 0
    %v2337 = vsel %vm2332, %v2328, 0
    %v2340 = vsel %vm2332, %v2329, 0
    %v2343 = vsel %vm2332, %v2330, 0
    %v2346 = vsel %vm2332, %v2331, 0
    %2348 = vmatprep.subr.mxu0 0.0
    %2349 = vmatpush1.msra.mxu0 %v2313
    %2350 = vmatprep.subr.mxu0 0.0
    %2351 = vmatpush1.msra.mxu0 %v2314
    %2352 = vmatprep.subr.mxu0 0.0
    %2353 = vmatpush1.msra.mxu0 %v2315
    %2354 = vmatprep.subr.mxu0 0.0
    %2355 = vmatpush1.msra.mxu0 %v2316
    %2356 = vmatprep.subr.mxu0 0.0
    %2357 = vmatpush1.msra.mxu0 %v2317
    %2358 = vmatprep.subr.mxu0 0.0
    %2359 = vmatpush1.msra.mxu0 %v2318
    %2360 = vmatprep.subr.mxu0 0.0
    %2361 = vmatpush1.msra.mxu0 %v2319
    %2362 = vmatprep.subr.mxu0 0.0
    %2363 = vmatpush1.msra.mxu0 %v2320
    %2364 = vmatprep.subr.mxu0 0.0
    %2365 = vmatpush1.msra.mxu0 %v2321
    %2366 = vmatprep.subr.mxu0 0.0
    %2367 = vmatpush1.msra.mxu0 %v2322
    %2368 = vmatprep.subr.mxu0 0.0
    %2369 = vmatpush1.msra.mxu0 %v2323
    %2370 = vmatprep.subr.mxu0 0.0
    %2371 = vmatpush1.msra.mxu0 %v2324
    %2372 = vmatprep.subr.mxu0 0.0
    %2373 = vmatpush1.msra.mxu0 %v2325
    %2374 = vmatprep.subr.mxu0 0.0
    %2375 = vmatpush1.msra.mxu0 %v2326
    %2376 = vmatprep.subr.mxu0 0.0
    %2377 = vmatpush1.msra.mxu0 0.0
    %2378 = vmatprep.subr.mxu0 0.0
    %2379 = vmatpush1.msra.mxu0 0.0
    %2380 = vmatprep.subr.mxu0 0.0
    %2381 = vmatpush1.msra.mxu0 0.0
    %2382 = vmatprep.subr.mxu0 0.0
    %2383 = vmatpush1.msra.mxu0 0.0
    %2384 = vmatprep.subr.mxu0 0.0
    %2385 = vmatpush1.msra.mxu0 0.0
    %2386 = vmatprep.subr.mxu0 0.0
    %2387 = vmatpush1.msra.mxu0 0.0
    %2388 = vmatprep.subr.mxu0 0.0
    %2389 = vmatpush1.msra.mxu0 0.0
    %2390 = vmatprep.subr.mxu0 0.0
    %2391 = vmatpush1.msra.mxu0 0.0
    %2392 = vmatprep.subr.mxu0 0.0
    %2393 = vmatpush1.msra.mxu0 0.0
    %2394 = vmatprep.subr.mxu0 0.0
    %2395 = vmatpush1.msra.mxu0 0.0
    %2396 = vmatprep.subr.mxu0 0.0
    %2397 = vmatpush1.msra.mxu0 0.0
    %2398 = vmatprep.subr.mxu0 0.0
    %2399 = vmatpush1.msra.mxu0 0.0
    %2400 = vmatprep.subr.mxu0 0.0
    %2401 = vmatpush1.msra.mxu0 0.0
    %2402 = vmatprep.subr.mxu0 0.0
    %2403 = vmatpush1.msra.mxu0 0.0
    %2404 = vmatprep.subr.mxu0 0.0
    %2405 = vmatpush1.msra.mxu0 0.0
    %2406 = vmatprep.subr.mxu0 0.0
    %2407 = vmatpush1.msra.mxu0 0.0
    %2408 = vmatprep.subr.mxu0 0.0
    %2409 = vmatpush1.msra.mxu0 0.0
    %2410 = vmatprep.subr.mxu0 0.0
    %2411 = vmatpush1.msra.mxu0 0.0
    %2412 = vmatprep.mubr.f32.mxu0 0.0
    %2413 = vmatmul.mubr.f32.gmra.mrb[0].mxu0 %v2334
    %v2414 = vpop.f32.mrb[0].mxu0
    %v2415 = vadd.f32 0.0, %v2414
    %v2416 = vpop.f32.mrb[0].mxu0
    %2417 = vmatprep.mubr.f32.mxu0 0.0
    %2418 = vmatmul.mubr.f32.gmra.mrb[0].mxu0 %v2337
    %v2419 = vpop.f32.mrb[0].mxu0
    %v2420 = vadd.f32 0.0, %v2419
    %v2421 = vpop.f32.mrb[0].mxu0
    %2422 = vmatprep.mubr.f32.mxu0 0.0
    %2423 = vmatmul.mubr.f32.gmra.mrb[0].mxu0 %v2340
    %v2424 = vpop.f32.mrb[0].mxu0
    %v2425 = vadd.f32 0.0, %v2424
    %v2426 = vpop.f32.mrb[0].mxu0
    %2427 = vmatprep.mubr.f32.mxu0 0.0
    %2428 = vmatmul.mubr.f32.gmra.mrb[0].mxu0 %v2343
    %v2429 = vpop.f32.mrb[0].mxu0
    %v2430 = vadd.f32 0.0, %v2429
    %v2431 = vpop.f32.mrb[0].mxu0
    %2432 = vmatprep.mubr.f32.mxu0 0.0
    %2433 = vmatmul.mubr.f32.gmra.mrb[0].mxu0 %v2346
    %v2434 = vpop.f32.mrb[0].mxu0
    %v2435 = vadd.f32 0.0, %v2434
    %v2436 = vpop.f32.mrb[0].mxu0
    %2437 = vdwg.mxu0
    %v2438 = vld [vmem:[%s5] sm:$0xff]
    %v2439 = vld [vmem:[%s5 + $0x8] sm:$0xff]
    %v2440 = vld [vmem:[%s5 + $0x10] sm:$0xff]
    %v2441 = vld [vmem:[%s5 + $0x18] sm:$0xff]
    %v2442 = vld [vmem:[%s5 + $0x20] sm:$0xff]
    %v2443 = vld [vmem:[%s5 + $0x28] sm:$0xff]
    %v2444 = vld [vmem:[%s5 + $0x30] sm:$0xff]
    %v2445 = vld [vmem:[%s5 + $0x38] sm:$0xff]
    %v2446 = vld [vmem:[%s5 + $0x40] sm:$0xff]
    %v2447 = vld [vmem:[%s5 + $0x48] sm:$0xff]
    %v2448 = vld [vmem:[%s5 + $0x50] sm:$0xf]
    %s2449 = scalar_lea.vmem %s4, 40
    %v2450 = vld [vmem:[%s2449] sm:$0xff]
    %v2451 = vld [vmem:[%s2449 + $0x8] sm:$0xff]
    %v2452 = vld [vmem:[%s2449 + $0x10] sm:$0xff]
    %v2453 = vld [vmem:[%s2449 + $0x18] sm:$0xff]
    %v2454 = vld [vmem:[%s2449 + $0x20] sm:$0xff]
    %v2456 = vsel %vm2332, %v2450, 0
    %v2459 = vsel %vm2332, %v2451, 0
    %v2462 = vsel %vm2332, %v2452, 0
    %v2465 = vsel %vm2332, %v2453, 0
    %v2468 = vsel %vm2332, %v2454, 0
    %2470 = vmatprep.subr.mxu0 0.0
    %2471 = vmatpush1.msra.mxu0 %v2313
    %2472 = vmatprep.subr.mxu0 0.0
    %2473 = vmatpush1.msra.mxu0 %v2314
    %2474 = vmatprep.subr.mxu0 0.0
    %2475 = vmatpush1.msra.mxu0 %v2315
    %2476 = vmatprep.subr.mxu0 0.0
    %2477 = vmatpush1.msra.mxu0 %v2316
    %2478 = vmatprep.subr.mxu0 0.0
    %2479 = vmatpush1.msra.mxu0 %v2317
    %2480 = vmatprep.subr.mxu0 0.0
    %2481 = vmatpush1.msra.mxu0 %v2318
    %2482 = vmatprep.subr.mxu0 0.0
    %2483 = vmatpush1.msra.mxu0 %v2319
    %2484 = vmatprep.subr.mxu0 0.0
    %2485 = vmatpush1.msra.mxu0 %v2320
    %2486 = vmatprep.subr.mxu0 0.0
    %2487 = vmatpush1.msra.mxu0 %v2321
    %2488 = vmatprep.subr.mxu0 0.0
    %2489 = vmatpush1.msra.mxu0 %v2322
    %2490 = vmatprep.subr.mxu0 0.0
    %2491 = vmatpush1.msra.mxu0 %v2323
    %2492 = vmatprep.subr.mxu0 0.0
    %2493 = vmatpush1.msra.mxu0 %v2324
    %2494 = vmatprep.subr.mxu0 0.0
    %2495 = vmatpush1.msra.mxu0 %v2325
    %2496 = vmatprep.subr.mxu0 0.0
    %2497 = vmatpush1.msra.mxu0 %v2326
    %2498 = vmatprep.subr.mxu0 0.0
    %2499 = vmatpush1.msra.mxu0 0.0
    %2500 = vmatprep.subr.mxu0 0.0
    %2501 = vmatpush1.msra.mxu0 0.0
    %2502 = vmatprep.subr.mxu0 0.0
    %2503 = vmatpush1.msra.mxu0 0.0
    %2504 = vmatprep.subr.mxu0 0.0
    %2505 = vmatpush1.msra.mxu0 0.0
    %2506 = vmatprep.subr.mxu0 0.0
    %2507 = vmatpush1.msra.mxu0 0.0
    %2508 = vmatprep.subr.mxu0 0.0
    %2509 = vmatpush1.msra.mxu0 0.0
    %2510 = vmatprep.subr.mxu0 0.0
    %2511 = vmatpush1.msra.mxu0 0.0
    %2512 = vmatprep.subr.mxu0 0.0
    %2513 = vmatpush1.msra.mxu0 0.0
    %2514 = vmatprep.subr.mxu0 0.0
    %2515 = vmatpush1.msra.mxu0 0.0
    %2516 = vmatprep.subr.mxu0 0.0
    %2517 = vmatpush1.msra.mxu0 0.0
    %2518 = vmatprep.subr.mxu0 0.0
    %2519 = vmatpush1.msra.mxu0 0.0
    %2520 = vmatprep.subr.mxu0 0.0
    %2521 = vmatpush1.msra.mxu0 0.0
    %2522 = vmatprep.subr.mxu0 0.0
    %2523 = vmatpush1.msra.mxu0 0.0
    %2524 = vmatprep.subr.mxu0 0.0
    %2525 = vmatpush1.msra.mxu0 0.0
    %2526 = vmatprep.subr.mxu0 0.0
    %2527 = vmatpush1.msra.mxu0 0.0
    %2528 = vmatprep.subr.mxu0 0.0
    %2529 = vmatpush1.msra.mxu0 0.0
    %2530 = vmatprep.subr.mxu0 0.0
    %2531 = vmatpush1.msra.mxu0 0.0
    %2532 = vmatprep.subr.mxu0 0.0
    %2533 = vmatpush1.msra.mxu0 0.0
    %2534 = vmatprep.mubr.f32.mxu0 0.0
    %2535 = vmatmul.mubr.f32.gmra.mrb[0].mxu0 %v2456
    %v2536 = vpop.f32.mrb[0].mxu0
    %v2537 = vadd.f32 0.0, %v2536
    %v2538 = vpop.f32.mrb[0].mxu0
    %2539 = vmatprep.mubr.f32.mxu0 0.0
    %2540 = vmatmul.mubr.f32.gmra.mrb[0].mxu0 %v2459
    %v2541 = vpop.f32.mrb[0].mxu0
    %v2542 = vadd.f32 0.0, %v2541
    %v2543 = vpop.f32.mrb[0].mxu0
    %2544 = vmatprep.mubr.f32.mxu0 0.0
    %2545 = vmatmul.mubr.f32.gmra.mrb[0].mxu0 %v2462
    %v2546 = vpop.f32.mrb[0].mxu0
    %v2547 = vadd.f32 0.0, %v2546
    %v2548 = vpop.f32.mrb[0].mxu0
    %2549 = vmatprep.mubr.f32.mxu0 0.0
    %2550 = vmatmul.mubr.f32.gmra.mrb[0].mxu0 %v2465
    %v2551 = vpop.f32.mrb[0].mxu0
    %v2552 = vadd.f32 0.0, %v2551
    %v2553 = vpop.f32.mrb[0].mxu0
    %2554 = vmatprep.mubr.f32.mxu0 0.0
    %2555 = vmatmul.mubr.f32.gmra.mrb[0].mxu0 %v2468
    %v2556 = vpop.f32.mrb[0].mxu0
    %v2557 = vadd.f32 0.0, %v2556
    %v2558 = vpop.f32.mrb[0].mxu0
    %2559 = vdwg.mxu0
    %s2560 = scalar_lea.vmem %s5, 88
    %v2561 = vld [vmem:[%s2560] sm:$0xff]
    %v2562 = vld [vmem:[%s2560 + $0x8] sm:$0xff]
    %v2563 = vld [vmem:[%s2560 + $0x10] sm:$0xff]
    %v2564 = vld [vmem:[%s2560 + $0x18] sm:$0xff]
    %v2565 = vld [vmem:[%s2560 + $0x20] sm:$0xff]
    %v2566 = vld [vmem:[%s2560 + $0x28] sm:$0xff]
    %v2567 = vld [vmem:[%s2560 + $0x30] sm:$0xff]
    %v2568 = vld [vmem:[%s2560 + $0x38] sm:$0xff]
    %v2569 = vld [vmem:[%s2560 + $0x40] sm:$0xff]
    %v2570 = vld [vmem:[%s2560 + $0x48] sm:$0xff]
    %v2571 = vld [vmem:[%s2560 + $0x50] sm:$0xf]
    %vm2572 = vcmask 687104
    %v2574 = vsel %vm2572, %v2537, 0
    %v2577 = vsel %vm2572, %v2542, 0
    %v2580 = vsel %vm2572, %v2547, 0
    %v2583 = vsel %vm2572, %v2552, 0
    %v2586 = vsel %vm2572, %v2557, 0
    %vm2588 = vcmask 1043456
    %v2590 = vsel %vm2588, %v2571, 0
    %2592 = vmatprep.subr.mxu0 0.0
    %2593 = vmatpush1.msra.mxu0 %v2561
    %2594 = vmatprep.subr.mxu0 0.0
    %2595 = vmatpush1.msra.mxu0 %v2562
    %2596 = vmatprep.subr.mxu0 0.0
    %2597 = vmatpush1.msra.mxu0 %v2563
    %2598 = vmatprep.subr.mxu0 0.0
    %2599 = vmatpush1.msra.mxu0 %v2564
    %2600 = vmatprep.subr.mxu0 0.0
    %2601 = vmatpush1.msra.mxu0 %v2565
    %2602 = vmatprep.subr.mxu0 0.0
    %2603 = vmatpush1.msra.mxu0 %v2566
    %2604 = vmatprep.subr.mxu0 0.0
    %2605 = vmatpush1.msra.mxu0 %v2567
    %2606 = vmatprep.subr.mxu0 0.0
    %2607 = vmatpush1.msra.mxu0 %v2568
    %2608 = vmatprep.subr.mxu0 0.0
    %2609 = vmatpush1.msra.mxu0 %v2569
    %2610 = vmatprep.subr.mxu0 0.0
    %2611 = vmatpush1.msra.mxu0 %v2570
    %2612 = vmatprep.subr.mxu0 0.0
    %2613 = vmatpush1.msra.mxu0 %v2590
    %2614 = vmatprep.subr.mxu0 0.0
    %2615 = vmatpush1.msra.mxu0 0.0
    %2616 = vmatprep.subr.mxu0 0.0
    %2617 = vmatpush1.msra.mxu0 0.0
    %2618 = vmatprep.subr.mxu0 0.0
    %2619 = vmatpush1.msra.mxu0 0.0
    %2620 = vmatprep.subr.mxu0 0.0
    %2621 = vmatpush1.msra.mxu0 0.0
    %2622 = vmatprep.subr.mxu0 0.0
    %2623 = vmatpush1.msra.mxu0 0.0
    %2624 = vmatprep.subr.mxu0 0.0
    %2625 = vmatpush1.msra.mxu0 0.0
    %2626 = vmatprep.subr.mxu0 0.0
    %2627 = vmatpush1.msra.mxu0 0.0
    %2628 = vmatprep.subr.mxu0 0.0
    %2629 = vmatpush1.msra.mxu0 0.0
    %2630 = vmatprep.subr.mxu0 0.0
    %2631 = vmatpush1.msra.mxu0 0.0
    %2632 = vmatprep.subr.mxu0 0.0
    %2633 = vmatpush1.msra.mxu0 0.0
    %2634 = vmatprep.subr.mxu0 0.0
    %2635 = vmatpush1.msra.mxu0 0.0
    %2636 = vmatprep.subr.mxu0 0.0
    %2637 = vmatpush1.msra.mxu0 0.0
    %2638 = vmatprep.subr.mxu0 0.0
    %2639 = vmatpush1.msra.mxu0 0.0
    %2640 = vmatprep.subr.mxu0 0.0
    %2641 = vmatpush1.msra.mxu0 0.0
    %2642 = vmatprep.subr.mxu0 0.0
    %2643 = vmatpush1.msra.mxu0 0.0
    %2644 = vmatprep.subr.mxu0 0.0
    %2645 = vmatpush1.msra.mxu0 0.0
    %2646 = vmatprep.subr.mxu0 0.0
    %2647 = vmatpush1.msra.mxu0 0.0
    %2648 = vmatprep.subr.mxu0 0.0
    %2649 = vmatpush1.msra.mxu0 0.0
    %2650 = vmatprep.subr.mxu0 0.0
    %2651 = vmatpush1.msra.mxu0 0.0
    %2652 = vmatprep.subr.mxu0 0.0
    %2653 = vmatpush1.msra.mxu0 0.0
    %2654 = vmatprep.subr.mxu0 0.0
    %2655 = vmatpush1.msra.mxu0 0.0
    %2656 = vmatprep.mubr.f32.mxu0 0.0
    %2657 = vmatmul.mubr.f32.gmra.mrb[0].mxu0 %v2574
    %v2658 = vpop.f32.mrb[0].mxu0
    %v2659 = vadd.f32 0.0, %v2658
    %v2660 = vpop.f32.mrb[0].mxu0
    %2661 = vmatprep.mubr.f32.mxu0 0.0
    %2662 = vmatmul.mubr.f32.gmra.mrb[0].mxu0 %v2577
    %v2663 = vpop.f32.mrb[0].mxu0
    %v2664 = vadd.f32 0.0, %v2663
    %v2665 = vpop.f32.mrb[0].mxu0
    %2666 = vmatprep.mubr.f32.mxu0 0.0
    %2667 = vmatmul.mubr.f32.gmra.mrb[0].mxu0 %v2580
    %v2668 = vpop.f32.mrb[0].mxu0
    %v2669 = vadd.f32 0.0, %v2668
    %v2670 = vpop.f32.mrb[0].mxu0
    %2671 = vmatprep.mubr.f32.mxu0 0.0
    %2672 = vmatmul.mubr.f32.gmra.mrb[0].mxu0 %v2583
    %v2673 = vpop.f32.mrb[0].mxu0
    %v2674 = vadd.f32 0.0, %v2673
    %v2675 = vpop.f32.mrb[0].mxu0
    %2676 = vmatprep.mubr.f32.mxu0 0.0
    %2677 = vmatmul.mubr.f32.gmra.mrb[0].mxu0 %v2586
    %v2678 = vpop.f32.mrb[0].mxu0
    %v2679 = vadd.f32 0.0, %v2678
    %v2680 = vpop.f32.mrb[0].mxu0
    %2681 = vdwg.mxu0
    %v2683 = vsel %vm2572, %v2415, 0
    %v2686 = vsel %vm2572, %v2420, 0
    %v2689 = vsel %vm2572, %v2425, 0
    %v2692 = vsel %vm2572, %v2430, 0
    %v2695 = vsel %vm2572, %v2435, 0
    %v2698 = vsel %vm2588, %v2448, 0
    %2700 = vmatprep.subr.mxu0 0.0
    %2701 = vmatpush1.msra.mxu0 %v2438
    %2702 = vmatprep.subr.mxu0 0.0
    %2703 = vmatpush1.msra.mxu0 %v2439
    %2704 = vmatprep.subr.mxu0 0.0
    %2705 = vmatpush1.msra.mxu0 %v2440
    %2706 = vmatprep.subr.mxu0 0.0
    %2707 = vmatpush1.msra.mxu0 %v2441
    %2708 = vmatprep.subr.mxu0 0.0
    %2709 = vmatpush1.msra.mxu0 %v2442
    %2710 = vmatprep.subr.mxu0 0.0
    %2711 = vmatpush1.msra.mxu0 %v2443
    %2712 = vmatprep.subr.mxu0 0.0
    %2713 = vmatpush1.msra.mxu0 %v2444
    %2714 = vmatprep.subr.mxu0 0.0
    %2715 = vmatpush1.msra.mxu0 %v2445
    %2716 = vmatprep.subr.mxu0 0.0
    %2717 = vmatpush1.msra.mxu0 %v2446
    %2718 = vmatprep.subr.mxu0 0.0
    %2719 = vmatpush1.msra.mxu0 %v2447
    %2720 = vmatprep.subr.mxu0 0.0
    %2721 = vmatpush1.msra.mxu0 %v2698
    %2722 = vmatprep.subr.mxu0 0.0
    %2723 = vmatpush1.msra.mxu0 0.0
    %2724 = vmatprep.subr.mxu0 0.0
    %2725 = vmatpush1.msra.mxu0 0.0
    %2726 = vmatprep.subr.mxu0 0.0
    %2727 = vmatpush1.msra.mxu0 0.0
    %2728 = vmatprep.subr.mxu0 0.0
    %2729 = vmatpush1.msra.mxu0 0.0
    %2730 = vmatprep.subr.mxu0 0.0
    %2731 = vmatpush1.msra.mxu0 0.0
    %2732 = vmatprep.subr.mxu0 0.0
    %2733 = vmatpush1.msra.mxu0 0.0
    %2734 = vmatprep.subr.mxu0 0.0
    %2735 = vmatpush1.msra.mxu0 0.0
    %2736 = vmatprep.subr.mxu0 0.0
    %2737 = vmatpush1.msra.mxu0 0.0
    %2738 = vmatprep.subr.mxu0 0.0
    %2739 = vmatpush1.msra.mxu0 0.0
    %2740 = vmatprep.subr.mxu0 0.0
    %2741 = vmatpush1.msra.mxu0 0.0
    %2742 = vmatprep.subr.mxu0 0.0
    %2743 = vmatpush1.msra.mxu0 0.0
    %2744 = vmatprep.subr.mxu0 0.0
    %2745 = vmatpush1.msra.mxu0 0.0
    %2746 = vmatprep.subr.mxu0 0.0
    %2747 = vmatpush1.msra.mxu0 0.0
    %2748 = vmatprep.subr.mxu0 0.0
    %2749 = vmatpush1.msra.mxu0 0.0
    %2750 = vmatprep.subr.mxu0 0.0
    %2751 = vmatpush1.msra.mxu0 0.0
    %2752 = vmatprep.subr.mxu0 0.0
    %2753 = vmatpush1.msra.mxu0 0.0
    %2754 = vmatprep.subr.mxu0 0.0
    %2755 = vmatpush1.msra.mxu0 0.0
    %2756 = vmatprep.subr.mxu0 0.0
    %2757 = vmatpush1.msra.mxu0 0.0
    %2758 = vmatprep.subr.mxu0 0.0
    %2759 = vmatpush1.msra.mxu0 0.0
    %2760 = vmatprep.subr.mxu0 0.0
    %2761 = vmatpush1.msra.mxu0 0.0
    %2762 = vmatprep.subr.mxu0 0.0
    %2763 = vmatpush1.msra.mxu0 0.0
    %2764 = vmatprep.mubr.f32.mxu0 0.0
    %2765 = vmatmul.mubr.f32.gmra.mrb[0].mxu0 %v2683
    %v2766 = vpop.f32.mrb[0].mxu0
    %v2767 = vadd.f32 %v2659, %v2766
    %v2768 = vpop.f32.mrb[0].mxu0
    %2769 = vmatprep.mubr.f32.mxu0 0.0
    %2770 = vmatmul.mubr.f32.gmra.mrb[0].mxu0 %v2686
    %v2771 = vpop.f32.mrb[0].mxu0
    %v2772 = vadd.f32 %v2664, %v2771
    %v2773 = vpop.f32.mrb[0].mxu0
    %2774 = vmatprep.mubr.f32.mxu0 0.0
    %2775 = vmatmul.mubr.f32.gmra.mrb[0].mxu0 %v2689
    %v2776 = vpop.f32.mrb[0].mxu0
    %v2777 = vadd.f32 %v2669, %v2776
    %v2778 = vpop.f32.mrb[0].mxu0
    %2779 = vmatprep.mubr.f32.mxu0 0.0
    %2780 = vmatmul.mubr.f32.gmra.mrb[0].mxu0 %v2692
    %v2781 = vpop.f32.mrb[0].mxu0
    %v2782 = vadd.f32 %v2674, %v2781
    %v2783 = vpop.f32.mrb[0].mxu0
    %2784 = vmatprep.mubr.f32.mxu0 0.0
    %2785 = vmatmul.mubr.f32.gmra.mrb[0].mxu0 %v2695
    %v2786 = vpop.f32.mrb[0].mxu0
    %v2787 = vadd.f32 %v2679, %v2786
    %v2788 = vpop.f32.mrb[0].mxu0
    %2789 = vdwg.mxu0
    %s2790 = scalar_lea.vmem %s4, 80
    %v2791 = vld [vmem:[%s2790] sm:$0xff]
    %v2792 = vld [vmem:[%s2790 + $0x8] sm:$0xff]
    %v2793 = vld [vmem:[%s2790 + $0x10] sm:$0xff]
    %v2794 = vld [vmem:[%s2790 + $0x18] sm:$0xff]
    %v2795 = vld [vmem:[%s2790 + $0x20] sm:$0xff]
    %v2797 = vsel %vm2332, %v2791, 0
    %v2800 = vsel %vm2332, %v2792, 0
    %v2803 = vsel %vm2332, %v2793, 0
    %v2806 = vsel %vm2332, %v2794, 0
    %v2809 = vsel %vm2332, %v2795, 0
    %2811 = vmatprep.subr.mxu0 0.0
    %2812 = vmatpush1.msra.mxu0 %v2313
    %2813 = vmatprep.subr.mxu0 0.0
    %2814 = vmatpush1.msra.mxu0 %v2314
    %2815 = vmatprep.subr.mxu0 0.0
    %2816 = vmatpush1.msra.mxu0 %v2315
    %2817 = vmatprep.subr.mxu0 0.0
    %2818 = vmatpush1.msra.mxu0 %v2316
    %2819 = vmatprep.subr.mxu0 0.0
    %2820 = vmatpush1.msra.mxu0 %v2317
    %2821 = vmatprep.subr.mxu0 0.0
    %2822 = vmatpush1.msra.mxu0 %v2318
    %2823 = vmatprep.subr.mxu0 0.0
    %2824 = vmatpush1.msra.mxu0 %v2319
    %2825 = vmatprep.subr.mxu0 0.0
    %2826 = vmatpush1.msra.mxu0 %v2320
    %2827 = vmatprep.subr.mxu0 0.0
    %2828 = vmatpush1.msra.mxu0 %v2321
    %2829 = vmatprep.subr.mxu0 0.0
    %2830 = vmatpush1.msra.mxu0 %v2322
    %2831 = vmatprep.subr.mxu0 0.0
    %2832 = vmatpush1.msra.mxu0 %v2323
    %2833 = vmatprep.subr.mxu0 0.0
    %2834 = vmatpush1.msra.mxu0 %v2324
    %2835 = vmatprep.subr.mxu0 0.0
    %2836 = vmatpush1.msra.mxu0 %v2325
    %2837 = vmatprep.subr.mxu0 0.0
    %2838 = vmatpush1.msra.mxu0 %v2326
    %2839 = vmatprep.subr.mxu0 0.0
    %2840 = vmatpush1.msra.mxu0 0.0
    %2841 = vmatprep.subr.mxu0 0.0
    %2842 = vmatpush1.msra.mxu0 0.0
    %2843 = vmatprep.subr.mxu0 0.0
    %2844 = vmatpush1.msra.mxu0 0.0
    %2845 = vmatprep.subr.mxu0 0.0
    %2846 = vmatpush1.msra.mxu0 0.0
    %2847 = vmatprep.subr.mxu0 0.0
    %2848 = vmatpush1.msra.mxu0 0.0
    %2849 = vmatprep.subr.mxu0 0.0
    %2850 = vmatpush1.msra.mxu0 0.0
    %2851 = vmatprep.subr.mxu0 0.0
    %2852 = vmatpush1.msra.mxu0 0.0
    %2853 = vmatprep.subr.mxu0 0.0
    %2854 = vmatpush1.msra.mxu0 0.0
    %2855 = vmatprep.subr.mxu0 0.0
    %2856 = vmatpush1.msra.mxu0 0.0
    %2857 = vmatprep.subr.mxu0 0.0
    %2858 = vmatpush1.msra.mxu0 0.0
    %2859 = vmatprep.subr.mxu0 0.0
    %2860 = vmatpush1.msra.mxu0 0.0
    %2861 = vmatprep.subr.mxu0 0.0
    %2862 = vmatpush1.msra.mxu0 0.0
    %2863 = vmatprep.subr.mxu0 0.0
    %2864 = vmatpush1.msra.mxu0 0.0
    %2865 = vmatprep.subr.mxu0 0.0
    %2866 = vmatpush1.msra.mxu0 0.0
    %2867 = vmatprep.subr.mxu0 0.0
    %2868 = vmatpush1.msra.mxu0 0.0
    %2869 = vmatprep.subr.mxu0 0.0
    %2870 = vmatpush1.msra.mxu0 0.0
    %2871 = vmatprep.subr.mxu0 0.0
    %2872 = vmatpush1.msra.mxu0 0.0
    %2873 = vmatprep.subr.mxu0 0.0
    %2874 = vmatpush1.msra.mxu0 0.0
    %2875 = vmatprep.mubr.f32.mxu0 0.0
    %2876 = vmatmul.mubr.f32.gmra.mrb[0].mxu0 %v2797
    %v2877 = vpop.f32.mrb[0].mxu0
    %v2878 = vadd.f32 0.0, %v2877
    %v2879 = vpop.f32.mrb[0].mxu0
    %2880 = vmatprep.mubr.f32.mxu0 0.0
    %2881 = vmatmul.mubr.f32.gmra.mrb[0].mxu0 %v2800
    %v2882 = vpop.f32.mrb[0].mxu0
    %v2883 = vadd.f32 0.0, %v2882
    %v2884 = vpop.f32.mrb[0].mxu0
    %2885 = vmatprep.mubr.f32.mxu0 0.0
    %2886 = vmatmul.mubr.f32.gmra.mrb[0].mxu0 %v2803
    %v2887 = vpop.f32.mrb[0].mxu0
    %v2888 = vadd.f32 0.0, %v2887
    %v2889 = vpop.f32.mrb[0].mxu0
    %2890 = vmatprep.mubr.f32.mxu0 0.0
    %2891 = vmatmul.mubr.f32.gmra.mrb[0].mxu0 %v2806
    %v2892 = vpop.f32.mrb[0].mxu0
    %v2893 = vadd.f32 0.0, %v2892
    %v2894 = vpop.f32.mrb[0].mxu0
    %2895 = vmatprep.mubr.f32.mxu0 0.0
    %2896 = vmatmul.mubr.f32.gmra.mrb[0].mxu0 %v2809
    %v2897 = vpop.f32.mrb[0].mxu0
    %v2898 = vadd.f32 0.0, %v2897
    %v2899 = vpop.f32.mrb[0].mxu0
    %2900 = vdwg.mxu0
    %s2901 = scalar_lea.vmem %s5, 176
    %v2902 = vld [vmem:[%s2901] sm:$0xff]
    %v2903 = vld [vmem:[%s2901 + $0x8] sm:$0xff]
    %v2904 = vld [vmem:[%s2901 + $0x10] sm:$0xff]
    %v2905 = vld [vmem:[%s2901 + $0x18] sm:$0xff]
    %v2906 = vld [vmem:[%s2901 + $0x20] sm:$0xff]
    %v2907 = vld [vmem:[%s2901 + $0x28] sm:$0xff]
    %v2908 = vld [vmem:[%s2901 + $0x30] sm:$0xff]
    %v2909 = vld [vmem:[%s2901 + $0x38] sm:$0xff]
    %v2910 = vld [vmem:[%s2901 + $0x40] sm:$0xff]
    %v2911 = vld [vmem:[%s2901 + $0x48] sm:$0xff]
    %v2912 = vld [vmem:[%s2901 + $0x50] sm:$0xf]
    %v2914 = vsel %vm2572, %v2878, 0
    %v2917 = vsel %vm2572, %v2883, 0
    %v2920 = vsel %vm2572, %v2888, 0
    %v2923 = vsel %vm2572, %v2893, 0
    %v2926 = vsel %vm2572, %v2898, 0
    %v2929 = vsel %vm2588, %v2912, 0
    %2931 = vmatprep.subr.mxu0 0.0
    %2932 = vmatpush1.msra.mxu0 %v2902
    %2933 = vmatprep.subr.mxu0 0.0
    %2934 = vmatpush1.msra.mxu0 %v2903
    %2935 = vmatprep.subr.mxu0 0.0
    %2936 = vmatpush1.msra.mxu0 %v2904
    %2937 = vmatprep.subr.mxu0 0.0
    %2938 = vmatpush1.msra.mxu0 %v2905
    %2939 = vmatprep.subr.mxu0 0.0
    %2940 = vmatpush1.msra.mxu0 %v2906
    %2941 = vmatprep.subr.mxu0 0.0
    %2942 = vmatpush1.msra.mxu0 %v2907
    %2943 = vmatprep.subr.mxu0 0.0
    %2944 = vmatpush1.msra.mxu0 %v2908
    %2945 = vmatprep.subr.mxu0 0.0
    %2946 = vmatpush1.msra.mxu0 %v2909
    %2947 = vmatprep.subr.mxu0 0.0
    %2948 = vmatpush1.msra.mxu0 %v2910
    %2949 = vmatprep.subr.mxu0 0.0
    %2950 = vmatpush1.msra.mxu0 %v2911
    %2951 = vmatprep.subr.mxu0 0.0
    %2952 = vmatpush1.msra.mxu0 %v2929
    %2953 = vmatprep.subr.mxu0 0.0
    %2954 = vmatpush1.msra.mxu0 0.0
    %2955 = vmatprep.subr.mxu0 0.0
    %2956 = vmatpush1.msra.mxu0 0.0
    %2957 = vmatprep.subr.mxu0 0.0
    %2958 = vmatpush1.msra.mxu0 0.0
    %2959 = vmatprep.subr.mxu0 0.0
    %2960 = vmatpush1.msra.mxu0 0.0
    %2961 = vmatprep.subr.mxu0 0.0
    %2962 = vmatpush1.msra.mxu0 0.0
    %2963 = vmatprep.subr.mxu0 0.0
    %2964 = vmatpush1.msra.mxu0 0.0
    %2965 = vmatprep.subr.mxu0 0.0
    %2966 = vmatpush1.msra.mxu0 0.0
    %2967 = vmatprep.subr.mxu0 0.0
    %2968 = vmatpush1.msra.mxu0 0.0
    %2969 = vmatprep.subr.mxu0 0.0
    %2970 = vmatpush1.msra.mxu0 0.0
    %2971 = vmatprep.subr.mxu0 0.0
    %2972 = vmatpush1.msra.mxu0 0.0
    %2973 = vmatprep.subr.mxu0 0.0
    %2974 = vmatpush1.msra.mxu0 0.0
    %2975 = vmatprep.subr.mxu0 0.0
    %2976 = vmatpush1.msra.mxu0 0.0
    %2977 = vmatprep.subr.mxu0 0.0
    %2978 = vmatpush1.msra.mxu0 0.0
    %2979 = vmatprep.subr.mxu0 0.0
    %2980 = vmatpush1.msra.mxu0 0.0
    %2981 = vmatprep.subr.mxu0 0.0
    %2982 = vmatpush1.msra.mxu0 0.0
    %2983 = vmatprep.subr.mxu0 0.0
    %2984 = vmatpush1.msra.mxu0 0.0
    %2985 = vmatprep.subr.mxu0 0.0
    %2986 = vmatpush1.msra.mxu0 0.0
    %2987 = vmatprep.subr.mxu0 0.0
    %2988 = vmatpush1.msra.mxu0 0.0
    %2989 = vmatprep.subr.mxu0 0.0
    %2990 = vmatpush1.msra.mxu0 0.0
    %2991 = vmatprep.subr.mxu0 0.0
    %2992 = vmatpush1.msra.mxu0 0.0
    %2993 = vmatprep.subr.mxu0 0.0
    %2994 = vmatpush1.msra.mxu0 0.0
    %2995 = vmatprep.mubr.f32.mxu0 0.0
    %2996 = vmatmul.mubr.f32.gmra.mrb[0].mxu0 %v2914
    %v2997 = vpop.f32.mrb[0].mxu0
    %v2998 = vadd.f32 0.0, %v2997
    %v2999 = vpop.f32.mrb[0].mxu0
    %3000 = vmatprep.mubr.f32.mxu0 0.0
    %3001 = vmatmul.mubr.f32.gmra.mrb[0].mxu0 %v2917
    %v3002 = vpop.f32.mrb[0].mxu0
    %v3003 = vadd.f32 0.0, %v3002
    %v3004 = vpop.f32.mrb[0].mxu0
    %3005 = vmatprep.mubr.f32.mxu0 0.0
    %3006 = vmatmul.mubr.f32.gmra.mrb[0].mxu0 %v2920
    %v3007 = vpop.f32.mrb[0].mxu0
    %v3008 = vadd.f32 0.0, %v3007
    %v3009 = vpop.f32.mrb[0].mxu0
    %3010 = vmatprep.mubr.f32.mxu0 0.0
    %3011 = vmatmul.mubr.f32.gmra.mrb[0].mxu0 %v2923
    %v3012 = vpop.f32.mrb[0].mxu0
    %v3013 = vadd.f32 0.0, %v3012
    %v3014 = vpop.f32.mrb[0].mxu0
    %3015 = vmatprep.mubr.f32.mxu0 0.0
    %3016 = vmatmul.mubr.f32.gmra.mrb[0].mxu0 %v2926
    %v3017 = vpop.f32.mrb[0].mxu0
    %v3018 = vadd.f32 0.0, %v3017
    %v3019 = vpop.f32.mrb[0].mxu0
    %3020 = vdwg.mxu0
    %v3021 = vadd.f32 %v2767, %v2998
    %v3022 = vadd.f32 %v2772, %v3003
    %v3023 = vadd.f32 %v2777, %v3008
    %v3024 = vadd.f32 %v2782, %v3013
    %v3025 = vadd.f32 %v2787, %v3018
    %s3026 = scalar_lea.vmem %s4, 120
    %v3027 = vld [vmem:[%s3026] sm:$0xff]
    %v3028 = vld [vmem:[%s3026 + $0x8] sm:$0xff]
    %v3029 = vld [vmem:[%s3026 + $0x10] sm:$0xff]
    %v3030 = vld [vmem:[%s3026 + $0x18] sm:$0xff]
    %v3031 = vld [vmem:[%s3026 + $0x20] sm:$0xff]
    %v3033 = vsel %vm2332, %v3027, 0
    %v3036 = vsel %vm2332, %v3028, 0
    %v3039 = vsel %vm2332, %v3029, 0
    %v3042 = vsel %vm2332, %v3030, 0
    %v3045 = vsel %vm2332, %v3031, 0
    %3047 = vmatprep.subr.mxu0 0.0
    %3048 = vmatpush1.msra.mxu0 %v2313
    %3049 = vmatprep.subr.mxu0 0.0
    %3050 = vmatpush1.msra.mxu0 %v2314
    %3051 = vmatprep.subr.mxu0 0.0
    %3052 = vmatpush1.msra.mxu0 %v2315
    %3053 = vmatprep.subr.mxu0 0.0
    %3054 = vmatpush1.msra.mxu0 %v2316
    %3055 = vmatprep.subr.mxu0 0.0
    %3056 = vmatpush1.msra.mxu0 %v2317
    %3057 = vmatprep.subr.mxu0 0.0
    %3058 = vmatpush1.msra.mxu0 %v2318
    %3059 = vmatprep.subr.mxu0 0.0
    %3060 = vmatpush1.msra.mxu0 %v2319
    %3061 = vmatprep.subr.mxu0 0.0
    %3062 = vmatpush1.msra.mxu0 %v2320
    %3063 = vmatprep.subr.mxu0 0.0
    %3064 = vmatpush1.msra.mxu0 %v2321
    %3065 = vmatprep.subr.mxu0 0.0
    %3066 = vmatpush1.msra.mxu0 %v2322
    %3067 = vmatprep.subr.mxu0 0.0
    %3068 = vmatpush1.msra.mxu0 %v2323
    %3069 = vmatprep.subr.mxu0 0.0
    %3070 = vmatpush1.msra.mxu0 %v2324
    %3071 = vmatprep.subr.mxu0 0.0
    %3072 = vmatpush1.msra.mxu0 %v2325
    %3073 = vmatprep.subr.mxu0 0.0
    %3074 = vmatpush1.msra.mxu0 %v2326
    %3075 = vmatprep.subr.mxu0 0.0
    %3076 = vmatpush1.msra.mxu0 0.0
    %3077 = vmatprep.subr.mxu0 0.0
    %3078 = vmatpush1.msra.mxu0 0.0
    %3079 = vmatprep.subr.mxu0 0.0
    %3080 = vmatpush1.msra.mxu0 0.0
    %3081 = vmatprep.subr.mxu0 0.0
    %3082 = vmatpush1.msra.mxu0 0.0
    %3083 = vmatprep.subr.mxu0 0.0
    %3084 = vmatpush1.msra.mxu0 0.0
    %3085 = vmatprep.subr.mxu0 0.0
    %3086 = vmatpush1.msra.mxu0 0.0
    %3087 = vmatprep.subr.mxu0 0.0
    %3088 = vmatpush1.msra.mxu0 0.0
    %3089 = vmatprep.subr.mxu0 0.0
    %3090 = vmatpush1.msra.mxu0 0.0
    %3091 = vmatprep.subr.mxu0 0.0
    %3092 = vmatpush1.msra.mxu0 0.0
    %3093 = vmatprep.subr.mxu0 0.0
    %3094 = vmatpush1.msra.mxu0 0.0
    %3095 = vmatprep.subr.mxu0 0.0
    %3096 = vmatpush1.msra.mxu0 0.0
    %3097 = vmatprep.subr.mxu0 0.0
    %3098 = vmatpush1.msra.mxu0 0.0
    %3099 = vmatprep.subr.mxu0 0.0
    %3100 = vmatpush1.msra.mxu0 0.0
    %3101 = vmatprep.subr.mxu0 0.0
    %3102 = vmatpush1.msra.mxu0 0.0
    %3103 = vmatprep.subr.mxu0 0.0
    %3104 = vmatpush1.msra.mxu0 0.0
    %3105 = vmatprep.subr.mxu0 0.0
    %3106 = vmatpush1.msra.mxu0 0.0
    %3107 = vmatprep.subr.mxu0 0.0
    %3108 = vmatpush1.msra.mxu0 0.0
    %3109 = vmatprep.subr.mxu0 0.0
    %3110 = vmatpush1.msra.mxu0 0.0
    %3111 = vmatprep.mubr.f32.mxu0 0.0
    %3112 = vmatmul.mubr.f32.gmra.mrb[0].mxu0 %v3033
    %v3113 = vpop.f32.mrb[0].mxu0
    %v3114 = vadd.f32 0.0, %v3113
    %v3115 = vpop.f32.mrb[0].mxu0
    %3116 = vmatprep.mubr.f32.mxu0 0.0
    %3117 = vmatmul.mubr.f32.gmra.mrb[0].mxu0 %v3036
    %v3118 = vpop.f32.mrb[0].mxu0
    %v3119 = vadd.f32 0.0, %v3118
    %v3120 = vpop.f32.mrb[0].mxu0
    %3121 = vmatprep.mubr.f32.mxu0 0.0
    %3122 = vmatmul.mubr.f32.gmra.mrb[0].mxu0 %v3039
    %v3123 = vpop.f32.mrb[0].mxu0
    %v3124 = vadd.f32 0.0, %v3123
    %v3125 = vpop.f32.mrb[0].mxu0
    %3126 = vmatprep.mubr.f32.mxu0 0.0
    %3127 = vmatmul.mubr.f32.gmra.mrb[0].mxu0 %v3042
    %v3128 = vpop.f32.mrb[0].mxu0
    %v3129 = vadd.f32 0.0, %v3128
    %v3130 = vpop.f32.mrb[0].mxu0
    %3131 = vmatprep.mubr.f32.mxu0 0.0
    %3132 = vmatmul.mubr.f32.gmra.mrb[0].mxu0 %v3045
    %v3133 = vpop.f32.mrb[0].mxu0
    %v3134 = vadd.f32 0.0, %v3133
    %v3135 = vpop.f32.mrb[0].mxu0
    %3136 = vdwg.mxu0
    %s3137 = scalar_lea.vmem %s5, 264
    %v3138 = vld [vmem:[%s3137] sm:$0xff]
    %v3139 = vld [vmem:[%s3137 + $0x8] sm:$0xff]
    %v3140 = vld [vmem:[%s3137 + $0x10] sm:$0xff]
    %v3141 = vld [vmem:[%s3137 + $0x18] sm:$0xff]
    %v3142 = vld [vmem:[%s3137 + $0x20] sm:$0xff]
    %v3143 = vld [vmem:[%s3137 + $0x28] sm:$0xff]
    %v3144 = vld [vmem:[%s3137 + $0x30] sm:$0xff]
    %v3145 = vld [vmem:[%s3137 + $0x38] sm:$0xff]
    %v3146 = vld [vmem:[%s3137 + $0x40] sm:$0xff]
    %v3147 = vld [vmem:[%s3137 + $0x48] sm:$0xff]
    %v3148 = vld [vmem:[%s3137 + $0x50] sm:$0xf]
    %v3150 = vsel %vm2572, %v3114, 0
    %v3153 = vsel %vm2572, %v3119, 0
    %v3156 = vsel %vm2572, %v3124, 0
    %v3159 = vsel %vm2572, %v3129, 0
    %v3162 = vsel %vm2572, %v3134, 0
    %v3165 = vsel %vm2588, %v3148, 0
    %3167 = vmatprep.subr.mxu0 0.0
    %3168 = vmatpush1.msra.mxu0 %v3138
    %3169 = vmatprep.subr.mxu0 0.0
    %3170 = vmatpush1.msra.mxu0 %v3139
    %3171 = vmatprep.subr.mxu0 0.0
    %3172 = vmatpush1.msra.mxu0 %v3140
    %3173 = vmatprep.subr.mxu0 0.0
    %3174 = vmatpush1.msra.mxu0 %v3141
    %3175 = vmatprep.subr.mxu0 0.0
    %3176 = vmatpush1.msra.mxu0 %v3142
    %3177 = vmatprep.subr.mxu0 0.0
    %3178 = vmatpush1.msra.mxu0 %v3143
    %3179 = vmatprep.subr.mxu0 0.0
    %3180 = vmatpush1.msra.mxu0 %v3144
    %3181 = vmatprep.subr.mxu0 0.0
    %3182 = vmatpush1.msra.mxu0 %v3145
    %3183 = vmatprep.subr.mxu0 0.0
    %3184 = vmatpush1.msra.mxu0 %v3146
    %3185 = vmatprep.subr.mxu0 0.0
    %3186 = vmatpush1.msra.mxu0 %v3147
    %3187 = vmatprep.subr.mxu0 0.0
    %3188 = vmatpush1.msra.mxu0 %v3165
    %3189 = vmatprep.subr.mxu0 0.0
    %3190 = vmatpush1.msra.mxu0 0.0
    %3191 = vmatprep.subr.mxu0 0.0
    %3192 = vmatpush1.msra.mxu0 0.0
    %3193 = vmatprep.subr.mxu0 0.0
    %3194 = vmatpush1.msra.mxu0 0.0
    %3195 = vmatprep.subr.mxu0 0.0
    %3196 = vmatpush1.msra.mxu0 0.0
    %3197 = vmatprep.subr.mxu0 0.0
    %3198 = vmatpush1.msra.mxu0 0.0
    %3199 = vmatprep.subr.mxu0 0.0
    %3200 = vmatpush1.msra.mxu0 0.0
    %3201 = vmatprep.subr.mxu0 0.0
    %3202 = vmatpush1.msra.mxu0 0.0
    %3203 = vmatprep.subr.mxu0 0.0
    %3204 = vmatpush1.msra.mxu0 0.0
    %3205 = vmatprep.subr.mxu0 0.0
    %3206 = vmatpush1.msra.mxu0 0.0
    %3207 = vmatprep.subr.mxu0 0.0
    %3208 = vmatpush1.msra.mxu0 0.0
    %3209 = vmatprep.subr.mxu0 0.0
    %3210 = vmatpush1.msra.mxu0 0.0
    %3211 = vmatprep.subr.mxu0 0.0
    %3212 = vmatpush1.msra.mxu0 0.0
    %3213 = vmatprep.subr.mxu0 0.0
    %3214 = vmatpush1.msra.mxu0 0.0
    %3215 = vmatprep.subr.mxu0 0.0
    %3216 = vmatpush1.msra.mxu0 0.0
    %3217 = vmatprep.subr.mxu0 0.0
    %3218 = vmatpush1.msra.mxu0 0.0
    %3219 = vmatprep.subr.mxu0 0.0
    %3220 = vmatpush1.msra.mxu0 0.0
    %3221 = vmatprep.subr.mxu0 0.0
    %3222 = vmatpush1.msra.mxu0 0.0
    %3223 = vmatprep.subr.mxu0 0.0
    %3224 = vmatpush1.msra.mxu0 0.0
    %3225 = vmatprep.subr.mxu0 0.0
    %3226 = vmatpush1.msra.mxu0 0.0
    %3227 = vmatprep.subr.mxu0 0.0
    %3228 = vmatpush1.msra.mxu0 0.0
    %3229 = vmatprep.subr.mxu0 0.0
    %3230 = vmatpush1.msra.mxu0 0.0
    %3231 = vmatprep.mubr.f32.mxu0 0.0
    %3232 = vmatmul.mubr.f32.gmra.mrb[0].mxu0 %v3150
    %v3233 = vpop.f32.mrb[0].mxu0
    %v3234 = vadd.f32 0.0, %v3233
    %v3235 = vpop.f32.mrb[0].mxu0
    %3236 = vmatprep.mubr.f32.mxu0 0.0
    %3237 = vmatmul.mubr.f32.gmra.mrb[0].mxu0 %v3153
    %v3238 = vpop.f32.mrb[0].mxu0
    %v3239 = vadd.f32 0.0, %v3238
    %v3240 = vpop.f32.mrb[0].mxu0
    %3241 = vmatprep.mubr.f32.mxu0 0.0
    %3242 = vmatmul.mubr.f32.gmra.mrb[0].mxu0 %v3156
    %v3243 = vpop.f32.mrb[0].mxu0
    %v3244 = vadd.f32 0.0, %v3243
    %v3245 = vpop.f32.mrb[0].mxu0
    %3246 = vmatprep.mubr.f32.mxu0 0.0
    %3247 = vmatmul.mubr.f32.gmra.mrb[0].mxu0 %v3159
    %v3248 = vpop.f32.mrb[0].mxu0
    %v3249 = vadd.f32 0.0, %v3248
    %v3250 = vpop.f32.mrb[0].mxu0
    %3251 = vmatprep.mubr.f32.mxu0 0.0
    %3252 = vmatmul.mubr.f32.gmra.mrb[0].mxu0 %v3162
    %v3253 = vpop.f32.mrb[0].mxu0
    %v3254 = vadd.f32 0.0, %v3253
    %v3255 = vpop.f32.mrb[0].mxu0
    %3256 = vdwg.mxu0
    %v3257 = vadd.f32 %v3021, %v3234
    %v3258 = vadd.f32 %v3022, %v3239
    %v3259 = vadd.f32 %v3023, %v3244
    %v3260 = vadd.f32 %v3024, %v3249
    %v3261 = vadd.f32 %v3025, %v3254
    %s3262 = scalar_lea.vmem %s4, 160
    %v3263 = vld [vmem:[%s3262] sm:$0xff]
    %v3264 = vld [vmem:[%s3262 + $0x8] sm:$0xff]
    %v3265 = vld [vmem:[%s3262 + $0x10] sm:$0xff]
    %v3266 = vld [vmem:[%s3262 + $0x18] sm:$0xff]
    %v3267 = vld [vmem:[%s3262 + $0x20] sm:$0xff]
    %v3269 = vsel %vm2332, %v3263, 0
    %v3272 = vsel %vm2332, %v3264, 0
    %v3275 = vsel %vm2332, %v3265, 0
    %v3278 = vsel %vm2332, %v3266, 0
    %v3281 = vsel %vm2332, %v3267, 0
    %3283 = vmatprep.subr.mxu0 0.0
    %3284 = vmatpush1.msra.mxu0 %v2313
    %3285 = vmatprep.subr.mxu0 0.0
    %3286 = vmatpush1.msra.mxu0 %v2314
    %3287 = vmatprep.subr.mxu0 0.0
    %3288 = vmatpush1.msra.mxu0 %v2315
    %3289 = vmatprep.subr.mxu0 0.0
    %3290 = vmatpush1.msra.mxu0 %v2316
    %3291 = vmatprep.subr.mxu0 0.0
    %3292 = vmatpush1.msra.mxu0 %v2317
    %3293 = vmatprep.subr.mxu0 0.0
    %3294 = vmatpush1.msra.mxu0 %v2318
    %3295 = vmatprep.subr.mxu0 0.0
    %3296 = vmatpush1.msra.mxu0 %v2319
    %3297 = vmatprep.subr.mxu0 0.0
    %3298 = vmatpush1.msra.mxu0 %v2320
    %3299 = vmatprep.subr.mxu0 0.0
    %3300 = vmatpush1.msra.mxu0 %v2321
    %3301 = vmatprep.subr.mxu0 0.0
    %3302 = vmatpush1.msra.mxu0 %v2322
    %3303 = vmatprep.subr.mxu0 0.0
    %3304 = vmatpush1.msra.mxu0 %v2323
    %3305 = vmatprep.subr.mxu0 0.0
    %3306 = vmatpush1.msra.mxu0 %v2324
    %3307 = vmatprep.subr.mxu0 0.0
    %3308 = vmatpush1.msra.mxu0 %v2325
    %3309 = vmatprep.subr.mxu0 0.0
    %3310 = vmatpush1.msra.mxu0 %v2326
    %3311 = vmatprep.subr.mxu0 0.0
    %3312 = vmatpush1.msra.mxu0 0.0
    %3313 = vmatprep.subr.mxu0 0.0
    %3314 = vmatpush1.msra.mxu0 0.0
    %3315 = vmatprep.subr.mxu0 0.0
    %3316 = vmatpush1.msra.mxu0 0.0
    %3317 = vmatprep.subr.mxu0 0.0
    %3318 = vmatpush1.msra.mxu0 0.0
    %3319 = vmatprep.subr.mxu0 0.0
    %3320 = vmatpush1.msra.mxu0 0.0
    %3321 = vmatprep.subr.mxu0 0.0
    %3322 = vmatpush1.msra.mxu0 0.0
    %3323 = vmatprep.subr.mxu0 0.0
    %3324 = vmatpush1.msra.mxu0 0.0
    %3325 = vmatprep.subr.mxu0 0.0
    %3326 = vmatpush1.msra.mxu0 0.0
    %3327 = vmatprep.subr.mxu0 0.0
    %3328 = vmatpush1.msra.mxu0 0.0
    %3329 = vmatprep.subr.mxu0 0.0
    %3330 = vmatpush1.msra.mxu0 0.0
    %3331 = vmatprep.subr.mxu0 0.0
    %3332 = vmatpush1.msra.mxu0 0.0
    %3333 = vmatprep.subr.mxu0 0.0
    %3334 = vmatpush1.msra.mxu0 0.0
    %3335 = vmatprep.subr.mxu0 0.0
    %3336 = vmatpush1.msra.mxu0 0.0
    %3337 = vmatprep.subr.mxu0 0.0
    %3338 = vmatpush1.msra.mxu0 0.0
    %3339 = vmatprep.subr.mxu0 0.0
    %3340 = vmatpush1.msra.mxu0 0.0
    %3341 = vmatprep.subr.mxu0 0.0
    %3342 = vmatpush1.msra.mxu0 0.0
    %3343 = vmatprep.subr.mxu0 0.0
    %3344 = vmatpush1.msra.mxu0 0.0
    %3345 = vmatprep.subr.mxu0 0.0
    %3346 = vmatpush1.msra.mxu0 0.0
    %3347 = vmatprep.mubr.f32.mxu0 0.0
    %3348 = vmatmul.mubr.f32.gmra.mrb[0].mxu0 %v3269
    %v3349 = vpop.f32.mrb[0].mxu0
    %v3350 = vadd.f32 0.0, %v3349
    %v3351 = vpop.f32.mrb[0].mxu0
    %3352 = vmatprep.mubr.f32.mxu0 0.0
    %3353 = vmatmul.mubr.f32.gmra.mrb[0].mxu0 %v3272
    %v3354 = vpop.f32.mrb[0].mxu0
    %v3355 = vadd.f32 0.0, %v3354
    %v3356 = vpop.f32.mrb[0].mxu0
    %3357 = vmatprep.mubr.f32.mxu0 0.0
    %3358 = vmatmul.mubr.f32.gmra.mrb[0].mxu0 %v3275
    %v3359 = vpop.f32.mrb[0].mxu0
    %v3360 = vadd.f32 0.0, %v3359
    %v3361 = vpop.f32.mrb[0].mxu0
    %3362 = vmatprep.mubr.f32.mxu0 0.0
    %3363 = vmatmul.mubr.f32.gmra.mrb[0].mxu0 %v3278
    %v3364 = vpop.f32.mrb[0].mxu0
    %v3365 = vadd.f32 0.0, %v3364
    %v3366 = vpop.f32.mrb[0].mxu0
    %3367 = vmatprep.mubr.f32.mxu0 0.0
    %3368 = vmatmul.mubr.f32.gmra.mrb[0].mxu0 %v3281
    %v3369 = vpop.f32.mrb[0].mxu0
    %v3370 = vadd.f32 0.0, %v3369
    %v3371 = vpop.f32.mrb[0].mxu0
    %3372 = vdwg.mxu0
    %s3373 = scalar_lea.vmem %s5, 352
    %v3374 = vld [vmem:[%s3373] sm:$0xff]
    %v3375 = vld [vmem:[%s3373 + $0x8] sm:$0xff]
    %v3376 = vld [vmem:[%s3373 + $0x10] sm:$0xff]
    %v3377 = vld [vmem:[%s3373 + $0x18] sm:$0xff]
    %v3378 = vld [vmem:[%s3373 + $0x20] sm:$0xff]
    %v3379 = vld [vmem:[%s3373 + $0x28] sm:$0xff]
    %v3380 = vld [vmem:[%s3373 + $0x30] sm:$0xff]
    %v3381 = vld [vmem:[%s3373 + $0x38] sm:$0xff]
    %v3382 = vld [vmem:[%s3373 + $0x40] sm:$0xff]
    %v3383 = vld [vmem:[%s3373 + $0x48] sm:$0xff]
    %v3384 = vld [vmem:[%s3373 + $0x50] sm:$0xf]
    %v3386 = vsel %vm2572, %v3350, 0
    %v3389 = vsel %vm2572, %v3355, 0
    %v3392 = vsel %vm2572, %v3360, 0
    %v3395 = vsel %vm2572, %v3365, 0
    %v3398 = vsel %vm2572, %v3370, 0
    %v3401 = vsel %vm2588, %v3384, 0
    %3403 = vmatprep.subr.mxu0 0.0
    %3404 = vmatpush1.msra.mxu0 %v3374
    %3405 = vmatprep.subr.mxu0 0.0
    %3406 = vmatpush1.msra.mxu0 %v3375
    %3407 = vmatprep.subr.mxu0 0.0
    %3408 = vmatpush1.msra.mxu0 %v3376
    %3409 = vmatprep.subr.mxu0 0.0
    %3410 = vmatpush1.msra.mxu0 %v3377
    %3411 = vmatprep.subr.mxu0 0.0
    %3412 = vmatpush1.msra.mxu0 %v3378
    %3413 = vmatprep.subr.mxu0 0.0
    %3414 = vmatpush1.msra.mxu0 %v3379
    %3415 = vmatprep.subr.mxu0 0.0
    %3416 = vmatpush1.msra.mxu0 %v3380
    %3417 = vmatprep.subr.mxu0 0.0
    %3418 = vmatpush1.msra.mxu0 %v3381
    %3419 = vmatprep.subr.mxu0 0.0
    %3420 = vmatpush1.msra.mxu0 %v3382
    %3421 = vmatprep.subr.mxu0 0.0
    %3422 = vmatpush1.msra.mxu0 %v3383
    %3423 = vmatprep.subr.mxu0 0.0
    %3424 = vmatpush1.msra.mxu0 %v3401
    %3425 = vmatprep.subr.mxu0 0.0
    %3426 = vmatpush1.msra.mxu0 0.0
    %3427 = vmatprep.subr.mxu0 0.0
    %3428 = vmatpush1.msra.mxu0 0.0
    %3429 = vmatprep.subr.mxu0 0.0
    %3430 = vmatpush1.msra.mxu0 0.0
    %3431 = vmatprep.subr.mxu0 0.0
    %3432 = vmatpush1.msra.mxu0 0.0
    %3433 = vmatprep.subr.mxu0 0.0
    %3434 = vmatpush1.msra.mxu0 0.0
    %3435 = vmatprep.subr.mxu0 0.0
    %3436 = vmatpush1.msra.mxu0 0.0
    %3437 = vmatprep.subr.mxu0 0.0
    %3438 = vmatpush1.msra.mxu0 0.0
    %3439 = vmatprep.subr.mxu0 0.0
    %3440 = vmatpush1.msra.mxu0 0.0
    %3441 = vmatprep.subr.mxu0 0.0
    %3442 = vmatpush1.msra.mxu0 0.0
    %3443 = vmatprep.subr.mxu0 0.0
    %3444 = vmatpush1.msra.mxu0 0.0
    %3445 = vmatprep.subr.mxu0 0.0
    %3446 = vmatpush1.msra.mxu0 0.0
    %3447 = vmatprep.subr.mxu0 0.0
    %3448 = vmatpush1.msra.mxu0 0.0
    %3449 = vmatprep.subr.mxu0 0.0
    %3450 = vmatpush1.msra.mxu0 0.0
    %3451 = vmatprep.subr.mxu0 0.0
    %3452 = vmatpush1.msra.mxu0 0.0
    %3453 = vmatprep.subr.mxu0 0.0
    %3454 = vmatpush1.msra.mxu0 0.0
    %3455 = vmatprep.subr.mxu0 0.0
    %3456 = vmatpush1.msra.mxu0 0.0
    %3457 = vmatprep.subr.mxu0 0.0
    %3458 = vmatpush1.msra.mxu0 0.0
    %3459 = vmatprep.subr.mxu0 0.0
    %3460 = vmatpush1.msra.mxu0 0.0
    %3461 = vmatprep.subr.mxu0 0.0
    %3462 = vmatpush1.msra.mxu0 0.0
    %3463 = vmatprep.subr.mxu0 0.0
    %3464 = vmatpush1.msra.mxu0 0.0
    %3465 = vmatprep.subr.mxu0 0.0
    %3466 = vmatpush1.msra.mxu0 0.0
    %3467 = vmatprep.mubr.f32.mxu0 0.0
    %3468 = vmatmul.mubr.f32.gmra.mrb[0].mxu0 %v3386
    %v3469 = vpop.f32.mrb[0].mxu0
    %v3470 = vadd.f32 0.0, %v3469
    %v3471 = vpop.f32.mrb[0].mxu0
    %3472 = vmatprep.mubr.f32.mxu0 0.0
    %3473 = vmatmul.mubr.f32.gmra.mrb[0].mxu0 %v3389
    %v3474 = vpop.f32.mrb[0].mxu0
    %v3475 = vadd.f32 0.0, %v3474
    %v3476 = vpop.f32.mrb[0].mxu0
    %3477 = vmatprep.mubr.f32.mxu0 0.0
    %3478 = vmatmul.mubr.f32.gmra.mrb[0].mxu0 %v3392
    %v3479 = vpop.f32.mrb[0].mxu0
    %v3480 = vadd.f32 0.0, %v3479
    %v3481 = vpop.f32.mrb[0].mxu0
    %3482 = vmatprep.mubr.f32.mxu0 0.0
    %3483 = vmatmul.mubr.f32.gmra.mrb[0].mxu0 %v3395
    %v3484 = vpop.f32.mrb[0].mxu0
    %v3485 = vadd.f32 0.0, %v3484
    %v3486 = vpop.f32.mrb[0].mxu0
    %3487 = vmatprep.mubr.f32.mxu0 0.0
    %3488 = vmatmul.mubr.f32.gmra.mrb[0].mxu0 %v3398
    %v3489 = vpop.f32.mrb[0].mxu0
    %v3490 = vadd.f32 0.0, %v3489
    %v3491 = vpop.f32.mrb[0].mxu0
    %3492 = vdwg.mxu0
    %v3493 = vadd.f32 %v3257, %v3470
    %v3494 = vadd.f32 %v3258, %v3475
    %v3495 = vadd.f32 %v3259, %v3480
    %v3496 = vadd.f32 %v3260, %v3485
    %v3497 = vadd.f32 %v3261, %v3490
    %s3498 = scalar_lea.vmem %s4, 200
    %v3499 = vld [vmem:[%s3498] sm:$0xff]
    %v3500 = vld [vmem:[%s3498 + $0x8] sm:$0xff]
    %v3501 = vld [vmem:[%s3498 + $0x10] sm:$0xff]
    %v3502 = vld [vmem:[%s3498 + $0x18] sm:$0xff]
    %v3503 = vld [vmem:[%s3498 + $0x20] sm:$0xff]
    %v3505 = vsel %vm2332, %v3499, 0
    %v3508 = vsel %vm2332, %v3500, 0
    %v3511 = vsel %vm2332, %v3501, 0
    %v3514 = vsel %vm2332, %v3502, 0
    %v3517 = vsel %vm2332, %v3503, 0
    %3519 = vmatprep.subr.mxu0 0.0
    %3520 = vmatpush1.msra.mxu0 %v2313
    %3521 = vmatprep.subr.mxu0 0.0
    %3522 = vmatpush1.msra.mxu0 %v2314
    %3523 = vmatprep.subr.mxu0 0.0
    %3524 = vmatpush1.msra.mxu0 %v2315
    %3525 = vmatprep.subr.mxu0 0.0
    %3526 = vmatpush1.msra.mxu0 %v2316
    %3527 = vmatprep.subr.mxu0 0.0
    %3528 = vmatpush1.msra.mxu0 %v2317
    %3529 = vmatprep.subr.mxu0 0.0
    %3530 = vmatpush1.msra.mxu0 %v2318
    %3531 = vmatprep.subr.mxu0 0.0
    %3532 = vmatpush1.msra.mxu0 %v2319
    %3533 = vmatprep.subr.mxu0 0.0
    %3534 = vmatpush1.msra.mxu0 %v2320
    %3535 = vmatprep.subr.mxu0 0.0
    %3536 = vmatpush1.msra.mxu0 %v2321
    %3537 = vmatprep.subr.mxu0 0.0
    %3538 = vmatpush1.msra.mxu0 %v2322
    %3539 = vmatprep.subr.mxu0 0.0
    %3540 = vmatpush1.msra.mxu0 %v2323
    %3541 = vmatprep.subr.mxu0 0.0
    %3542 = vmatpush1.msra.mxu0 %v2324
    %3543 = vmatprep.subr.mxu0 0.0
    %3544 = vmatpush1.msra.mxu0 %v2325
    %3545 = vmatprep.subr.mxu0 0.0
    %3546 = vmatpush1.msra.mxu0 %v2326
    %3547 = vmatprep.subr.mxu0 0.0
    %3548 = vmatpush1.msra.mxu0 0.0
    %3549 = vmatprep.subr.mxu0 0.0
    %3550 = vmatpush1.msra.mxu0 0.0
    %3551 = vmatprep.subr.mxu0 0.0
    %3552 = vmatpush1.msra.mxu0 0.0
    %3553 = vmatprep.subr.mxu0 0.0
    %3554 = vmatpush1.msra.mxu0 0.0
    %3555 = vmatprep.subr.mxu0 0.0
    %3556 = vmatpush1.msra.mxu0 0.0
    %3557 = vmatprep.subr.mxu0 0.0
    %3558 = vmatpush1.msra.mxu0 0.0
    %3559 = vmatprep.subr.mxu0 0.0
    %3560 = vmatpush1.msra.mxu0 0.0
    %3561 = vmatprep.subr.mxu0 0.0
    %3562 = vmatpush1.msra.mxu0 0.0
    %3563 = vmatprep.subr.mxu0 0.0
    %3564 = vmatpush1.msra.mxu0 0.0
    %3565 = vmatprep.subr.mxu0 0.0
    %3566 = vmatpush1.msra.mxu0 0.0
    %3567 = vmatprep.subr.mxu0 0.0
    %3568 = vmatpush1.msra.mxu0 0.0
    %3569 = vmatprep.subr.mxu0 0.0
    %3570 = vmatpush1.msra.mxu0 0.0
    %3571 = vmatprep.subr.mxu0 0.0
    %3572 = vmatpush1.msra.mxu0 0.0
    %3573 = vmatprep.subr.mxu0 0.0
    %3574 = vmatpush1.msra.mxu0 0.0
    %3575 = vmatprep.subr.mxu0 0.0
    %3576 = vmatpush1.msra.mxu0 0.0
    %3577 = vmatprep.subr.mxu0 0.0
    %3578 = vmatpush1.msra.mxu0 0.0
    %3579 = vmatprep.subr.mxu0 0.0
    %3580 = vmatpush1.msra.mxu0 0.0
    %3581 = vmatprep.subr.mxu0 0.0
    %3582 = vmatpush1.msra.mxu0 0.0
    %3583 = vmatprep.mubr.f32.mxu0 0.0
    %3584 = vmatmul.mubr.f32.gmra.mrb[0].mxu0 %v3505
    %v3585 = vpop.f32.mrb[0].mxu0
    %v3586 = vadd.f32 0.0, %v3585
    %v3587 = vpop.f32.mrb[0].mxu0
    %3588 = vmatprep.mubr.f32.mxu0 0.0
    %3589 = vmatmul.mubr.f32.gmra.mrb[0].mxu0 %v3508
    %v3590 = vpop.f32.mrb[0].mxu0
    %v3591 = vadd.f32 0.0, %v3590
    %v3592 = vpop.f32.mrb[0].mxu0
    %3593 = vmatprep.mubr.f32.mxu0 0.0
    %3594 = vmatmul.mubr.f32.gmra.mrb[0].mxu0 %v3511
    %v3595 = vpop.f32.mrb[0].mxu0
    %v3596 = vadd.f32 0.0, %v3595
    %v3597 = vpop.f32.mrb[0].mxu0
    %3598 = vmatprep.mubr.f32.mxu0 0.0
    %3599 = vmatmul.mubr.f32.gmra.mrb[0].mxu0 %v3514
    %v3600 = vpop.f32.mrb[0].mxu0
    %v3601 = vadd.f32 0.0, %v3600
    %v3602 = vpop.f32.mrb[0].mxu0
    %3603 = vmatprep.mubr.f32.mxu0 0.0
    %3604 = vmatmul.mubr.f32.gmra.mrb[0].mxu0 %v3517
    %v3605 = vpop.f32.mrb[0].mxu0
    %v3606 = vadd.f32 0.0, %v3605
    %v3607 = vpop.f32.mrb[0].mxu0
    %3608 = vdwg.mxu0
    %s3609 = scalar_lea.vmem %s5, 440
    %v3610 = vld [vmem:[%s3609] sm:$0xff]
    %v3611 = vld [vmem:[%s3609 + $0x8] sm:$0xff]
    %v3612 = vld [vmem:[%s3609 + $0x10] sm:$0xff]
    %v3613 = vld [vmem:[%s3609 + $0x18] sm:$0xff]
    %v3614 = vld [vmem:[%s3609 + $0x20] sm:$0xff]
    %v3615 = vld [vmem:[%s3609 + $0x28] sm:$0xff]
    %v3616 = vld [vmem:[%s3609 + $0x30] sm:$0xff]
    %v3617 = vld [vmem:[%s3609 + $0x38] sm:$0xff]
    %v3618 = vld [vmem:[%s3609 + $0x40] sm:$0xff]
    %v3619 = vld [vmem:[%s3609 + $0x48] sm:$0xff]
    %v3620 = vld [vmem:[%s3609 + $0x50] sm:$0xf]
    %v3622 = vsel %vm2572, %v3586, 0
    %v3625 = vsel %vm2572, %v3591, 0
    %v3628 = vsel %vm2572, %v3596, 0
    %v3631 = vsel %vm2572, %v3601, 0
    %v3634 = vsel %vm2572, %v3606, 0
    %v3637 = vsel %vm2588, %v3620, 0
    %3639 = vmatprep.subr.mxu0 0.0
    %3640 = vmatpush1.msra.mxu0 %v3610
    %3641 = vmatprep.subr.mxu0 0.0
    %3642 = vmatpush1.msra.mxu0 %v3611
    %3643 = vmatprep.subr.mxu0 0.0
    %3644 = vmatpush1.msra.mxu0 %v3612
    %3645 = vmatprep.subr.mxu0 0.0
    %3646 = vmatpush1.msra.mxu0 %v3613
    %3647 = vmatprep.subr.mxu0 0.0
    %3648 = vmatpush1.msra.mxu0 %v3614
    %3649 = vmatprep.subr.mxu0 0.0
    %3650 = vmatpush1.msra.mxu0 %v3615
    %3651 = vmatprep.subr.mxu0 0.0
    %3652 = vmatpush1.msra.mxu0 %v3616
    %3653 = vmatprep.subr.mxu0 0.0
    %3654 = vmatpush1.msra.mxu0 %v3617
    %3655 = vmatprep.subr.mxu0 0.0
    %3656 = vmatpush1.msra.mxu0 %v3618
    %3657 = vmatprep.subr.mxu0 0.0
    %3658 = vmatpush1.msra.mxu0 %v3619
    %3659 = vmatprep.subr.mxu0 0.0
    %3660 = vmatpush1.msra.mxu0 %v3637
    %3661 = vmatprep.subr.mxu0 0.0
    %3662 = vmatpush1.msra.mxu0 0.0
    %3663 = vmatprep.subr.mxu0 0.0
    %3664 = vmatpush1.msra.mxu0 0.0
    %3665 = vmatprep.subr.mxu0 0.0
    %3666 = vmatpush1.msra.mxu0 0.0
    %3667 = vmatprep.subr.mxu0 0.0
    %3668 = vmatpush1.msra.mxu0 0.0
    %3669 = vmatprep.subr.mxu0 0.0
    %3670 = vmatpush1.msra.mxu0 0.0
    %3671 = vmatprep.subr.mxu0 0.0
    %3672 = vmatpush1.msra.mxu0 0.0
    %3673 = vmatprep.subr.mxu0 0.0
    %3674 = vmatpush1.msra.mxu0 0.0
    %3675 = vmatprep.subr.mxu0 0.0
    %3676 = vmatpush1.msra.mxu0 0.0
    %3677 = vmatprep.subr.mxu0 0.0
    %3678 = vmatpush1.msra.mxu0 0.0
    %3679 = vmatprep.subr.mxu0 0.0
    %3680 = vmatpush1.msra.mxu0 0.0
    %3681 = vmatprep.subr.mxu0 0.0
    %3682 = vmatpush1.msra.mxu0 0.0
    %3683 = vmatprep.subr.mxu0 0.0
    %3684 = vmatpush1.msra.mxu0 0.0
    %3685 = vmatprep.subr.mxu0 0.0
    %3686 = vmatpush1.msra.mxu0 0.0
    %3687 = vmatprep.subr.mxu0 0.0
    %3688 = vmatpush1.msra.mxu0 0.0
    %3689 = vmatprep.subr.mxu0 0.0
    %3690 = vmatpush1.msra.mxu0 0.0
    %3691 = vmatprep.subr.mxu0 0.0
    %3692 = vmatpush1.msra.mxu0 0.0
    %3693 = vmatprep.subr.mxu0 0.0
    %3694 = vmatpush1.msra.mxu0 0.0
    %3695 = vmatprep.subr.mxu0 0.0
    %3696 = vmatpush1.msra.mxu0 0.0
    %3697 = vmatprep.subr.mxu0 0.0
    %3698 = vmatpush1.msra.mxu0 0.0
    %3699 = vmatprep.subr.mxu0 0.0
    %3700 = vmatpush1.msra.mxu0 0.0
    %3701 = vmatprep.subr.mxu0 0.0
    %3702 = vmatpush1.msra.mxu0 0.0
    %3703 = vmatprep.mubr.f32.mxu0 0.0
    %3704 = vmatmul.mubr.f32.gmra.mrb[0].mxu0 %v3622
    %v3705 = vpop.f32.mrb[0].mxu0
    %v3706 = vadd.f32 0.0, %v3705
    %v3707 = vpop.f32.mrb[0].mxu0
    %3708 = vmatprep.mubr.f32.mxu0 0.0
    %3709 = vmatmul.mubr.f32.gmra.mrb[0].mxu0 %v3625
    %v3710 = vpop.f32.mrb[0].mxu0
    %v3711 = vadd.f32 0.0, %v3710
    %v3712 = vpop.f32.mrb[0].mxu0
    %3713 = vmatprep.mubr.f32.mxu0 0.0
    %3714 = vmatmul.mubr.f32.gmra.mrb[0].mxu0 %v3628
    %v3715 = vpop.f32.mrb[0].mxu0
    %v3716 = vadd.f32 0.0, %v3715
    %v3717 = vpop.f32.mrb[0].mxu0
    %3718 = vmatprep.mubr.f32.mxu0 0.0
    %3719 = vmatmul.mubr.f32.gmra.mrb[0].mxu0 %v3631
    %v3720 = vpop.f32.mrb[0].mxu0
    %v3721 = vadd.f32 0.0, %v3720
    %v3722 = vpop.f32.mrb[0].mxu0
    %3723 = vmatprep.mubr.f32.mxu0 0.0
    %3724 = vmatmul.mubr.f32.gmra.mrb[0].mxu0 %v3634
    %v3725 = vpop.f32.mrb[0].mxu0
    %v3726 = vadd.f32 0.0, %v3725
    %v3727 = vpop.f32.mrb[0].mxu0
    %3728 = vdwg.mxu0
    %v3729 = vadd.f32 %v3493, %v3706
    %v3730 = vadd.f32 %v3494, %v3711
    %v3731 = vadd.f32 %v3495, %v3716
    %v3732 = vadd.f32 %v3496, %v3721
    %v3733 = vadd.f32 %v3497, %v3726
    %v3734 = vmul.f32 %v3729, 0.25
    %v3735 = vmul.f32 %v3730, 0.25
    %v3736 = vmul.f32 %v3731, 0.25
    %v3737 = vmul.f32 %v3732, 0.25
    %v3738 = vmul.f32 %v3733, 0.25
    %v3739 = vld [vmem:[%s6] sm:$0x1]
    %v3741 = vlaneseq
    %v3742 = vshrl.u32 %v3741, 7
    %v3743 = vsub.s32 0, %v3742
    %v3744 = vrot.slane %v3739, %v3743
    %v3746 = vadd.f32 %v3734, %v3744
    %v3747 = vadd.f32 %v3735, %v3744
    %v3748 = vadd.f32 %v3736, %v3744
    %v3749 = vadd.f32 %v3737, %v3744
    %v3750 = vadd.f32 %v3738, %v3744
    %v3751 = vmax.f32 %v3746, 0.0
    %v3752 = vmax.f32 %v3747, 0.0
    %v3753 = vmax.f32 %v3748, 0.0
    %v3754 = vmax.f32 %v3749, 0.0
    %v3755 = vmax.f32 %v3750, 0.0
    %v3756 = vld [vmem:[%s9] sm:$0x1]
    %v3758 = vlaneseq
    %v3759 = vshrl.u32 %v3758, 7
    %v3760 = vsub.s32 0, %v3759
    %v3761 = vrot.slane %v3756, %v3760
    %v3763 = vadd.f32 %v3761, 0.0
    %v3764 = vld [vmem:[#allocation4] sm:$0xff]
    %vm3765 = vcmask 326656
    %v3767 = vsel %vm3765, %v3764, 0
    %3769 = vmatprep.subr.mxu0 0.0
    %3770 = vmatpush1.msra.mxu0 %v3751
    %3771 = vmatprep.subr.mxu0 0.0
    %3772 = vmatpush1.msra.mxu0 %v3752
    %3773 = vmatprep.subr.mxu0 0.0
    %3774 = vmatpush1.msra.mxu0 %v3753
    %3775 = vmatprep.subr.mxu0 0.0
    %3776 = vmatpush1.msra.mxu0 %v3754
    %3777 = vmatprep.subr.mxu0 0.0
    %3778 = vmatpush1.msra.mxu0 %v3755
    %3779 = vmatprep.subr.mxu0 0.0
    %3780 = vmatpush1.msra.mxu0 0.0
    %3781 = vmatprep.subr.mxu0 0.0
    %3782 = vmatpush1.msra.mxu0 0.0
    %3783 = vmatprep.subr.mxu0 0.0
    %3784 = vmatpush1.msra.mxu0 0.0
    %3785 = vmatprep.subr.mxu0 0.0
    %3786 = vmatpush1.msra.mxu0 0.0
    %3787 = vmatprep.subr.mxu0 0.0
    %3788 = vmatpush1.msra.mxu0 0.0
    %3789 = vmatprep.subr.mxu0 0.0
    %3790 = vmatpush1.msra.mxu0 0.0
    %3791 = vmatprep.subr.mxu0 0.0
    %3792 = vmatpush1.msra.mxu0 0.0
    %3793 = vmatprep.subr.mxu0 0.0
    %3794 = vmatpush1.msra.mxu0 0.0
    %3795 = vmatprep.subr.mxu0 0.0
    %3796 = vmatpush1.msra.mxu0 0.0
    %3797 = vmatprep.subr.mxu0 0.0
    %3798 = vmatpush1.msra.mxu0 0.0
    %3799 = vmatprep.subr.mxu0 0.0
    %3800 = vmatpush1.msra.mxu0 0.0
    %3801 = vmatprep.subr.mxu0 0.0
    %3802 = vmatpush1.msra.mxu0 0.0
    %3803 = vmatprep.subr.mxu0 0.0
    %3804 = vmatpush1.msra.mxu0 0.0
    %3805 = vmatprep.subr.mxu0 0.0
    %3806 = vmatpush1.msra.mxu0 0.0
    %3807 = vmatprep.subr.mxu0 0.0
    %3808 = vmatpush1.msra.mxu0 0.0
    %3809 = vmatprep.subr.mxu0 0.0
    %3810 = vmatpush1.msra.mxu0 0.0
    %3811 = vmatprep.subr.mxu0 0.0
    %3812 = vmatpush1.msra.mxu0 0.0
    %3813 = vmatprep.subr.mxu0 0.0
    %3814 = vmatpush1.msra.mxu0 0.0
    %3815 = vmatprep.subr.mxu0 0.0
    %3816 = vmatpush1.msra.mxu0 0.0
    %3817 = vmatprep.subr.mxu0 0.0
    %3818 = vmatpush1.msra.mxu0 0.0
    %3819 = vmatprep.subr.mxu0 0.0
    %3820 = vmatpush1.msra.mxu0 0.0
    %3821 = vmatprep.subr.mxu0 0.0
    %3822 = vmatpush1.msra.mxu0 0.0
    %3823 = vmatprep.subr.mxu0 0.0
    %3824 = vmatpush1.msra.mxu0 0.0
    %3825 = vmatprep.subr.mxu0 0.0
    %3826 = vmatpush1.msra.mxu0 0.0
    %3827 = vmatprep.subr.mxu0 0.0
    %3828 = vmatpush1.msra.mxu0 0.0
    %3829 = vmatprep.subr.mxu0 0.0
    %3830 = vmatpush1.msra.mxu0 0.0
    %3831 = vmatprep.subr.mxu0 0.0
    %3832 = vmatpush1.msra.mxu0 0.0
    %3833 = vmatprep.mubr.f32.mxu0 0.0
    %3834 = vmatmul.mubr.f32.gmra.mrb[0].mxu0 %v3767
    %v3835 = vpop.f32.mrb[0].mxu0
    %v3836 = vadd.f32 0.0, %v3835
    %v3837 = vpop.f32.mrb[0].mxu0
    %3838 = vdwg.mxu0
    %v3839 = vld [vmem:[#allocation6] sm:$0xff]
    %v3840 = vld [vmem:[#allocation6 + $0x8] sm:$0xff]
    %v3841 = vld [vmem:[#allocation6 + $0x10] sm:$0xff]
    %v3842 = vld [vmem:[#allocation6 + $0x18] sm:$0xff]
    %v3843 = vld [vmem:[#allocation6 + $0x20] sm:$0xff]
    %v3844 = vld [vmem:[#allocation6 + $0x28] sm:$0xff]
    %v3845 = vld [vmem:[#allocation6 + $0x30] sm:$0xff]
    %v3846 = vld [vmem:[#allocation6 + $0x38] sm:$0xff]
    %v3847 = vld [vmem:[#allocation6 + $0x40] sm:$0xff]
    %v3848 = vld [vmem:[#allocation6 + $0x48] sm:$0xff]
    %vm3849 = vcmask 654336
    %v3851 = vsel %vm3849, %v3836, 0
    %3853 = vmatprep.subr.mxu0 0.0
    %3854 = vmatpush1.msra.mxu0 %v3839
    %3855 = vmatprep.subr.mxu0 0.0
    %3856 = vmatpush1.msra.mxu0 %v3840
    %3857 = vmatprep.subr.mxu0 0.0
    %3858 = vmatpush1.msra.mxu0 %v3841
    %3859 = vmatprep.subr.mxu0 0.0
    %3860 = vmatpush1.msra.mxu0 %v3842
    %3861 = vmatprep.subr.mxu0 0.0
    %3862 = vmatpush1.msra.mxu0 %v3843
    %3863 = vmatprep.subr.mxu0 0.0
    %3864 = vmatpush1.msra.mxu0 %v3844
    %3865 = vmatprep.subr.mxu0 0.0
    %3866 = vmatpush1.msra.mxu0 %v3845
    %3867 = vmatprep.subr.mxu0 0.0
    %3868 = vmatpush1.msra.mxu0 %v3846
    %3869 = vmatprep.subr.mxu0 0.0
    %3870 = vmatpush1.msra.mxu0 %v3847
    %3871 = vmatprep.subr.mxu0 0.0
    %3872 = vmatpush1.msra.mxu0 %v3848
    %3873 = vmatprep.subr.mxu0 0.0
    %3874 = vmatpush1.msra.mxu0 0.0
    %3875 = vmatprep.subr.mxu0 0.0
    %3876 = vmatpush1.msra.mxu0 0.0
    %3877 = vmatprep.subr.mxu0 0.0
    %3878 = vmatpush1.msra.mxu0 0.0
    %3879 = vmatprep.subr.mxu0 0.0
    %3880 = vmatpush1.msra.mxu0 0.0
    %3881 = vmatprep.subr.mxu0 0.0
    %3882 = vmatpush1.msra.mxu0 0.0
    %3883 = vmatprep.subr.mxu0 0.0
    %3884 = vmatpush1.msra.mxu0 0.0
    %3885 = vmatprep.subr.mxu0 0.0
    %3886 = vmatpush1.msra.mxu0 0.0
    %3887 = vmatprep.subr.mxu0 0.0
    %3888 = vmatpush1.msra.mxu0 0.0
    %3889 = vmatprep.subr.mxu0 0.0
    %3890 = vmatpush1.msra.mxu0 0.0
    %3891 = vmatprep.subr.mxu0 0.0
    %3892 = vmatpush1.msra.mxu0 0.0
    %3893 = vmatprep.subr.mxu0 0.0
    %3894 = vmatpush1.msra.mxu0 0.0
    %3895 = vmatprep.subr.mxu0 0.0
    %3896 = vmatpush1.msra.mxu0 0.0
    %3897 = vmatprep.subr.mxu0 0.0
    %3898 = vmatpush1.msra.mxu0 0.0
    %3899 = vmatprep.subr.mxu0 0.0
    %3900 = vmatpush1.msra.mxu0 0.0
    %3901 = vmatprep.subr.mxu0 0.0
    %3902 = vmatpush1.msra.mxu0 0.0
    %3903 = vmatprep.subr.mxu0 0.0
    %3904 = vmatpush1.msra.mxu0 0.0
    %3905 = vmatprep.subr.mxu0 0.0
    %3906 = vmatpush1.msra.mxu0 0.0
    %3907 = vmatprep.subr.mxu0 0.0
    %3908 = vmatpush1.msra.mxu0 0.0
    %3909 = vmatprep.subr.mxu0 0.0
    %3910 = vmatpush1.msra.mxu0 0.0
    %3911 = vmatprep.subr.mxu0 0.0
    %3912 = vmatpush1.msra.mxu0 0.0
    %3913 = vmatprep.subr.mxu0 0.0
    %3914 = vmatpush1.msra.mxu0 0.0
    %3915 = vmatprep.subr.mxu0 0.0
    %3916 = vmatpush1.msra.mxu0 0.0
    %3917 = vmatprep.mubr.f32.mxu0 0.0
    %3918 = vmatmul.mubr.f32.gmra.mrb[0].mxu0 %v3851
    %v3919 = vpop.f32.mrb[0].mxu0
    %v3920 = vadd.f32 0.0, %v3919
    %v3921 = vpop.f32.mrb[0].mxu0
    %3922 = vdwg.mxu0
    %v3923 = vadd.f32 %v3763, %v3920
    %s3924 = scalar_lea.vmem [#allocation4], 8
    %v3925 = vld [vmem:[%s3924] sm:$0xff]
    %v3927 = vsel %vm3765, %v3925, 0
    %3929 = vmatprep.subr.mxu0 0.0
    %3930 = vmatpush1.msra.mxu0 %v3751
    %3931 = vmatprep.subr.mxu0 0.0
    %3932 = vmatpush1.msra.mxu0 %v3752
    %3933 = vmatprep.subr.mxu0 0.0
    %3934 = vmatpush1.msra.mxu0 %v3753
    %3935 = vmatprep.subr.mxu0 0.0
    %3936 = vmatpush1.msra.mxu0 %v3754
    %3937 = vmatprep.subr.mxu0 0.0
    %3938 = vmatpush1.msra.mxu0 %v3755
    %3939 = vmatprep.subr.mxu0 0.0
    %3940 = vmatpush1.msra.mxu0 0.0
    %3941 = vmatprep.subr.mxu0 0.0
    %3942 = vmatpush1.msra.mxu0 0.0
    %3943 = vmatprep.subr.mxu0 0.0
    %3944 = vmatpush1.msra.mxu0 0.0
    %3945 = vmatprep.subr.mxu0 0.0
    %3946 = vmatpush1.msra.mxu0 0.0
    %3947 = vmatprep.subr.mxu0 0.0
    %3948 = vmatpush1.msra.mxu0 0.0
    %3949 = vmatprep.subr.mxu0 0.0
    %3950 = vmatpush1.msra.mxu0 0.0
    %3951 = vmatprep.subr.mxu0 0.0
    %3952 = vmatpush1.msra.mxu0 0.0
    %3953 = vmatprep.subr.mxu0 0.0
    %3954 = vmatpush1.msra.mxu0 0.0
    %3955 = vmatprep.subr.mxu0 0.0
    %3956 = vmatpush1.msra.mxu0 0.0
    %3957 = vmatprep.subr.mxu0 0.0
    %3958 = vmatpush1.msra.mxu0 0.0
    %3959 = vmatprep.subr.mxu0 0.0
    %3960 = vmatpush1.msra.mxu0 0.0
    %3961 = vmatprep.subr.mxu0 0.0
    %3962 = vmatpush1.msra.mxu0 0.0
    %3963 = vmatprep.subr.mxu0 0.0
    %3964 = vmatpush1.msra.mxu0 0.0
    %3965 = vmatprep.subr.mxu0 0.0
    %3966 = vmatpush1.msra.mxu0 0.0
    %3967 = vmatprep.subr.mxu0 0.0
    %3968 = vmatpush1.msra.mxu0 0.0
    %3969 = vmatprep.subr.mxu0 0.0
    %3970 = vmatpush1.msra.mxu0 0.0
    %3971 = vmatprep.subr.mxu0 0.0
    %3972 = vmatpush1.msra.mxu0 0.0
    %3973 = vmatprep.subr.mxu0 0.0
    %3974 = vmatpush1.msra.mxu0 0.0
    %3975 = vmatprep.subr.mxu0 0.0
    %3976 = vmatpush1.msra.mxu0 0.0
    %3977 = vmatprep.subr.mxu0 0.0
    %3978 = vmatpush1.msra.mxu0 0.0
    %3979 = vmatprep.subr.mxu0 0.0
    %3980 = vmatpush1.msra.mxu0 0.0
    %3981 = vmatprep.subr.mxu0 0.0
    %3982 = vmatpush1.msra.mxu0 0.0
    %3983 = vmatprep.subr.mxu0 0.0
    %3984 = vmatpush1.msra.mxu0 0.0
    %3985 = vmatprep.subr.mxu0 0.0
    %3986 = vmatpush1.msra.mxu0 0.0
    %3987 = vmatprep.subr.mxu0 0.0
    %3988 = vmatpush1.msra.mxu0 0.0
    %3989 = vmatprep.subr.mxu0 0.0
    %3990 = vmatpush1.msra.mxu0 0.0
    %3991 = vmatprep.subr.mxu0 0.0
    %3992 = vmatpush1.msra.mxu0 0.0
    %3993 = vmatprep.mubr.f32.mxu0 0.0
    %3994 = vmatmul.mubr.f32.gmra.mrb[0].mxu0 %v3927
    %v3995 = vpop.f32.mrb[0].mxu0
    %v3996 = vadd.f32 0.0, %v3995
    %v3997 = vpop.f32.mrb[0].mxu0
    %3998 = vdwg.mxu0
    %s3999 = scalar_lea.vmem [#allocation6], 80
    %v4000 = vld [vmem:[%s3999] sm:$0xff]
    %v4001 = vld [vmem:[%s3999 + $0x8] sm:$0xff]
    %v4002 = vld [vmem:[%s3999 + $0x10] sm:$0xff]
    %v4003 = vld [vmem:[%s3999 + $0x18] sm:$0xff]
    %v4004 = vld [vmem:[%s3999 + $0x20] sm:$0xff]
    %v4005 = vld [vmem:[%s3999 + $0x28] sm:$0xff]
    %v4006 = vld [vmem:[%s3999 + $0x30] sm:$0xff]
    %v4007 = vld [vmem:[%s3999 + $0x38] sm:$0xff]
    %v4008 = vld [vmem:[%s3999 + $0x40] sm:$0xff]
    %v4009 = vld [vmem:[%s3999 + $0x48] sm:$0xff]
    %v4011 = vsel %vm3849, %v3996, 0
    %4013 = vmatprep.subr.mxu0 0.0
    %4014 = vmatpush1.msra.mxu0 %v4000
    %4015 = vmatprep.subr.mxu0 0.0
    %4016 = vmatpush1.msra.mxu0 %v4001
    %4017 = vmatprep.subr.mxu0 0.0
    %4018 = vmatpush1.msra.mxu0 %v4002
    %4019 = vmatprep.subr.mxu0 0.0
    %4020 = vmatpush1.msra.mxu0 %v4003
    %4021 = vmatprep.subr.mxu0 0.0
    %4022 = vmatpush1.msra.mxu0 %v4004
    %4023 = vmatprep.subr.mxu0 0.0
    %4024 = vmatpush1.msra.mxu0 %v4005
    %4025 = vmatprep.subr.mxu0 0.0
    %4026 = vmatpush1.msra.mxu0 %v4006
    %4027 = vmatprep.subr.mxu0 0.0
    %4028 = vmatpush1.msra.mxu0 %v4007
    %4029 = vmatprep.subr.mxu0 0.0
    %4030 = vmatpush1.msra.mxu0 %v4008
    %4031 = vmatprep.subr.mxu0 0.0
    %4032 = vmatpush1.msra.mxu0 %v4009
    %4033 = vmatprep.subr.mxu0 0.0
    %4034 = vmatpush1.msra.mxu0 0.0
    %4035 = vmatprep.subr.mxu0 0.0
    %4036 = vmatpush1.msra.mxu0 0.0
    %4037 = vmatprep.subr.mxu0 0.0
    %4038 = vmatpush1.msra.mxu0 0.0
    %4039 = vmatprep.subr.mxu0 0.0
    %4040 = vmatpush1.msra.mxu0 0.0
    %4041 = vmatprep.subr.mxu0 0.0
    %4042 = vmatpush1.msra.mxu0 0.0
    %4043 = vmatprep.subr.mxu0 0.0
    %4044 = vmatpush1.msra.mxu0 0.0
    %4045 = vmatprep.subr.mxu0 0.0
    %4046 = vmatpush1.msra.mxu0 0.0
    %4047 = vmatprep.subr.mxu0 0.0
    %4048 = vmatpush1.msra.mxu0 0.0
    %4049 = vmatprep.subr.mxu0 0.0
    %4050 = vmatpush1.msra.mxu0 0.0
    %4051 = vmatprep.subr.mxu0 0.0
    %4052 = vmatpush1.msra.mxu0 0.0
    %4053 = vmatprep.subr.mxu0 0.0
    %4054 = vmatpush1.msra.mxu0 0.0
    %4055 = vmatprep.subr.mxu0 0.0
    %4056 = vmatpush1.msra.mxu0 0.0
    %4057 = vmatprep.subr.mxu0 0.0
    %4058 = vmatpush1.msra.mxu0 0.0
    %4059 = vmatprep.subr.mxu0 0.0
    %4060 = vmatpush1.msra.mxu0 0.0
    %4061 = vmatprep.subr.mxu0 0.0
    %4062 = vmatpush1.msra.mxu0 0.0
    %4063 = vmatprep.subr.mxu0 0.0
    %4064 = vmatpush1.msra.mxu0 0.0
    %4065 = vmatprep.subr.mxu0 0.0
    %4066 = vmatpush1.msra.mxu0 0.0
    %4067 = vmatprep.subr.mxu0 0.0
    %4068 = vmatpush1.msra.mxu0 0.0
    %4069 = vmatprep.subr.mxu0 0.0
    %4070 = vmatpush1.msra.mxu0 0.0
    %4071 = vmatprep.subr.mxu0 0.0
    %4072 = vmatpush1.msra.mxu0 0.0
    %4073 = vmatprep.subr.mxu0 0.0
    %4074 = vmatpush1.msra.mxu0 0.0
    %4075 = vmatprep.subr.mxu0 0.0
    %4076 = vmatpush1.msra.mxu0 0.0
    %4077 = vmatprep.mubr.f32.mxu0 0.0
    %4078 = vmatmul.mubr.f32.gmra.mrb[0].mxu0 %v4011
    %v4079 = vpop.f32.mrb[0].mxu0
    %v4080 = vadd.f32 0.0, %v4079
    %v4081 = vpop.f32.mrb[0].mxu0
    %4082 = vdwg.mxu0
    %v4083 = vadd.f32 %v3923, %v4080
    %s4084 = scalar_lea.vmem [#allocation4], 16
    %v4085 = vld [vmem:[%s4084] sm:$0xff]
    %v4087 = vsel %vm3765, %v4085, 0
    %4089 = vmatprep.subr.mxu0 0.0
    %4090 = vmatpush1.msra.mxu0 %v3751
    %4091 = vmatprep.subr.mxu0 0.0
    %4092 = vmatpush1.msra.mxu0 %v3752
    %4093 = vmatprep.subr.mxu0 0.0
    %4094 = vmatpush1.msra.mxu0 %v3753
    %4095 = vmatprep.subr.mxu0 0.0
    %4096 = vmatpush1.msra.mxu0 %v3754
    %4097 = vmatprep.subr.mxu0 0.0
    %4098 = vmatpush1.msra.mxu0 %v3755
    %4099 = vmatprep.subr.mxu0 0.0
    %4100 = vmatpush1.msra.mxu0 0.0
    %4101 = vmatprep.subr.mxu0 0.0
    %4102 = vmatpush1.msra.mxu0 0.0
    %4103 = vmatprep.subr.mxu0 0.0
    %4104 = vmatpush1.msra.mxu0 0.0
    %4105 = vmatprep.subr.mxu0 0.0
    %4106 = vmatpush1.msra.mxu0 0.0
    %4107 = vmatprep.subr.mxu0 0.0
    %4108 = vmatpush1.msra.mxu0 0.0
    %4109 = vmatprep.subr.mxu0 0.0
    %4110 = vmatpush1.msra.mxu0 0.0
    %4111 = vmatprep.subr.mxu0 0.0
    %4112 = vmatpush1.msra.mxu0 0.0
    %4113 = vmatprep.subr.mxu0 0.0
    %4114 = vmatpush1.msra.mxu0 0.0
    %4115 = vmatprep.subr.mxu0 0.0
    %4116 = vmatpush1.msra.mxu0 0.0
    %4117 = vmatprep.subr.mxu0 0.0
    %4118 = vmatpush1.msra.mxu0 0.0
    %4119 = vmatprep.subr.mxu0 0.0
    %4120 = vmatpush1.msra.mxu0 0.0
    %4121 = vmatprep.subr.mxu0 0.0
    %4122 = vmatpush1.msra.mxu0 0.0
    %4123 = vmatprep.subr.mxu0 0.0
    %4124 = vmatpush1.msra.mxu0 0.0
    %4125 = vmatprep.subr.mxu0 0.0
    %4126 = vmatpush1.msra.mxu0 0.0
    %4127 = vmatprep.subr.mxu0 0.0
    %4128 = vmatpush1.msra.mxu0 0.0
    %4129 = vmatprep.subr.mxu0 0.0
    %4130 = vmatpush1.msra.mxu0 0.0
    %4131 = vmatprep.subr.mxu0 0.0
    %4132 = vmatpush1.msra.mxu0 0.0
    %4133 = vmatprep.subr.mxu0 0.0
    %4134 = vmatpush1.msra.mxu0 0.0
    %4135 = vmatprep.subr.mxu0 0.0
    %4136 = vmatpush1.msra.mxu0 0.0
    %4137 = vmatprep.subr.mxu0 0.0
    %4138 = vmatpush1.msra.mxu0 0.0
    %4139 = vmatprep.subr.mxu0 0.0
    %4140 = vmatpush1.msra.mxu0 0.0
    %4141 = vmatprep.subr.mxu0 0.0
    %4142 = vmatpush1.msra.mxu0 0.0
    %4143 = vmatprep.subr.mxu0 0.0
    %4144 = vmatpush1.msra.mxu0 0.0
    %4145 = vmatprep.subr.mxu0 0.0
    %4146 = vmatpush1.msra.mxu0 0.0
    %4147 = vmatprep.subr.mxu0 0.0
    %4148 = vmatpush1.msra.mxu0 0.0
    %4149 = vmatprep.subr.mxu0 0.0
    %4150 = vmatpush1.msra.mxu0 0.0
    %4151 = vmatprep.subr.mxu0 0.0
    %4152 = vmatpush1.msra.mxu0 0.0
    %4153 = vmatprep.mubr.f32.mxu0 0.0
    %4154 = vmatmul.mubr.f32.gmra.mrb[0].mxu0 %v4087
    %v4155 = vpop.f32.mrb[0].mxu0
    %v4156 = vadd.f32 0.0, %v4155
    %v4157 = vpop.f32.mrb[0].mxu0
    %4158 = vdwg.mxu0
    %s4159 = scalar_lea.vmem [#allocation6], 160
    %v4160 = vld [vmem:[%s4159] sm:$0xff]
    %v4161 = vld [vmem:[%s4159 + $0x8] sm:$0xff]
    %v4162 = vld [vmem:[%s4159 + $0x10] sm:$0xff]
    %v4163 = vld [vmem:[%s4159 + $0x18] sm:$0xff]
    %v4164 = vld [vmem:[%s4159 + $0x20] sm:$0xff]
    %v4165 = vld [vmem:[%s4159 + $0x28] sm:$0xff]
    %v4166 = vld [vmem:[%s4159 + $0x30] sm:$0xff]
    %v4167 = vld [vmem:[%s4159 + $0x38] sm:$0xff]
    %v4168 = vld [vmem:[%s4159 + $0x40] sm:$0xff]
    %v4169 = vld [vmem:[%s4159 + $0x48] sm:$0xff]
    %v4171 = vsel %vm3849, %v4156, 0
    %4173 = vmatprep.subr.mxu0 0.0
    %4174 = vmatpush1.msra.mxu0 %v4160
    %4175 = vmatprep.subr.mxu0 0.0
    %4176 = vmatpush1.msra.mxu0 %v4161
    %4177 = vmatprep.subr.mxu0 0.0
    %4178 = vmatpush1.msra.mxu0 %v4162
    %4179 = vmatprep.subr.mxu0 0.0
    %4180 = vmatpush1.msra.mxu0 %v4163
    %4181 = vmatprep.subr.mxu0 0.0
    %4182 = vmatpush1.msra.mxu0 %v4164
    %4183 = vmatprep.subr.mxu0 0.0
    %4184 = vmatpush1.msra.mxu0 %v4165
    %4185 = vmatprep.subr.mxu0 0.0
    %4186 = vmatpush1.msra.mxu0 %v4166
    %4187 = vmatprep.subr.mxu0 0.0
    %4188 = vmatpush1.msra.mxu0 %v4167
    %4189 = vmatprep.subr.mxu0 0.0
    %4190 = vmatpush1.msra.mxu0 %v4168
    %4191 = vmatprep.subr.mxu0 0.0
    %4192 = vmatpush1.msra.mxu0 %v4169
    %4193 = vmatprep.subr.mxu0 0.0
    %4194 = vmatpush1.msra.mxu0 0.0
    %4195 = vmatprep.subr.mxu0 0.0
    %4196 = vmatpush1.msra.mxu0 0.0
    %4197 = vmatprep.subr.mxu0 0.0
    %4198 = vmatpush1.msra.mxu0 0.0
    %4199 = vmatprep.subr.mxu0 0.0
    %4200 = vmatpush1.msra.mxu0 0.0
    %4201 = vmatprep.subr.mxu0 0.0
    %4202 = vmatpush1.msra.mxu0 0.0
    %4203 = vmatprep.subr.mxu0 0.0
    %4204 = vmatpush1.msra.mxu0 0.0
    %4205 = vmatprep.subr.mxu0 0.0
    %4206 = vmatpush1.msra.mxu0 0.0
    %4207 = vmatprep.subr.mxu0 0.0
    %4208 = vmatpush1.msra.mxu0 0.0
    %4209 = vmatprep.subr.mxu0 0.0
    %4210 = vmatpush1.msra.mxu0 0.0
    %4211 = vmatprep.subr.mxu0 0.0
    %4212 = vmatpush1.msra.mxu0 0.0
    %4213 = vmatprep.subr.mxu0 0.0
    %4214 = vmatpush1.msra.mxu0 0.0
    %4215 = vmatprep.subr.mxu0 0.0
    %4216 = vmatpush1.msra.mxu0 0.0
    %4217 = vmatprep.subr.mxu0 0.0
    %4218 = vmatpush1.msra.mxu0 0.0
    %4219 = vmatprep.subr.mxu0 0.0
    %4220 = vmatpush1.msra.mxu0 0.0
    %4221 = vmatprep.subr.mxu0 0.0
    %4222 = vmatpush1.msra.mxu0 0.0
    %4223 = vmatprep.subr.mxu0 0.0
    %4224 = vmatpush1.msra.mxu0 0.0
    %4225 = vmatprep.subr.mxu0 0.0
    %4226 = vmatpush1.msra.mxu0 0.0
    %4227 = vmatprep.subr.mxu0 0.0
    %4228 = vmatpush1.msra.mxu0 0.0
    %4229 = vmatprep.subr.mxu0 0.0
    %4230 = vmatpush1.msra.mxu0 0.0
    %4231 = vmatprep.subr.mxu0 0.0
    %4232 = vmatpush1.msra.mxu0 0.0
    %4233 = vmatprep.subr.mxu0 0.0
    %4234 = vmatpush1.msra.mxu0 0.0
    %4235 = vmatprep.subr.mxu0 0.0
    %4236 = vmatpush1.msra.mxu0 0.0
    %4237 = vmatprep.mubr.f32.mxu0 0.0
    %4238 = vmatmul.mubr.f32.gmra.mrb[0].mxu0 %v4171
    %v4239 = vpop.f32.mrb[0].mxu0
    %v4240 = vadd.f32 0.0, %v4239
    %v4241 = vpop.f32.mrb[0].mxu0
    %4242 = vdwg.mxu0
    %v4243 = vadd.f32 %v4083, %v4240
    %s4244 = scalar_lea.vmem [#allocation4], 24
    %v4245 = vld [vmem:[%s4244] sm:$0xff]
    %v4247 = vsel %vm3765, %v4245, 0
    %4249 = vmatprep.subr.mxu0 0.0
    %4250 = vmatpush1.msra.mxu0 %v3751
    %4251 = vmatprep.subr.mxu0 0.0
    %4252 = vmatpush1.msra.mxu0 %v3752
    %4253 = vmatprep.subr.mxu0 0.0
    %4254 = vmatpush1.msra.mxu0 %v3753
    %4255 = vmatprep.subr.mxu0 0.0
    %4256 = vmatpush1.msra.mxu0 %v3754
    %4257 = vmatprep.subr.mxu0 0.0
    %4258 = vmatpush1.msra.mxu0 %v3755
    %4259 = vmatprep.subr.mxu0 0.0
    %4260 = vmatpush1.msra.mxu0 0.0
    %4261 = vmatprep.subr.mxu0 0.0
    %4262 = vmatpush1.msra.mxu0 0.0
    %4263 = vmatprep.subr.mxu0 0.0
    %4264 = vmatpush1.msra.mxu0 0.0
    %4265 = vmatprep.subr.mxu0 0.0
    %4266 = vmatpush1.msra.mxu0 0.0
    %4267 = vmatprep.subr.mxu0 0.0
    %4268 = vmatpush1.msra.mxu0 0.0
    %4269 = vmatprep.subr.mxu0 0.0
    %4270 = vmatpush1.msra.mxu0 0.0
    %4271 = vmatprep.subr.mxu0 0.0
    %4272 = vmatpush1.msra.mxu0 0.0
    %4273 = vmatprep.subr.mxu0 0.0
    %4274 = vmatpush1.msra.mxu0 0.0
    %4275 = vmatprep.subr.mxu0 0.0
    %4276 = vmatpush1.msra.mxu0 0.0
    %4277 = vmatprep.subr.mxu0 0.0
    %4278 = vmatpush1.msra.mxu0 0.0
    %4279 = vmatprep.subr.mxu0 0.0
    %4280 = vmatpush1.msra.mxu0 0.0
    %4281 = vmatprep.subr.mxu0 0.0
    %4282 = vmatpush1.msra.mxu0 0.0
    %4283 = vmatprep.subr.mxu0 0.0
    %4284 = vmatpush1.msra.mxu0 0.0
    %4285 = vmatprep.subr.mxu0 0.0
    %4286 = vmatpush1.msra.mxu0 0.0
    %4287 = vmatprep.subr.mxu0 0.0
    %4288 = vmatpush1.msra.mxu0 0.0
    %4289 = vmatprep.subr.mxu0 0.0
    %4290 = vmatpush1.msra.mxu0 0.0
    %4291 = vmatprep.subr.mxu0 0.0
    %4292 = vmatpush1.msra.mxu0 0.0
    %4293 = vmatprep.subr.mxu0 0.0
    %4294 = vmatpush1.msra.mxu0 0.0
    %4295 = vmatprep.subr.mxu0 0.0
    %4296 = vmatpush1.msra.mxu0 0.0
    %4297 = vmatprep.subr.mxu0 0.0
    %4298 = vmatpush1.msra.mxu0 0.0
    %4299 = vmatprep.subr.mxu0 0.0
    %4300 = vmatpush1.msra.mxu0 0.0
    %4301 = vmatprep.subr.mxu0 0.0
    %4302 = vmatpush1.msra.mxu0 0.0
    %4303 = vmatprep.subr.mxu0 0.0
    %4304 = vmatpush1.msra.mxu0 0.0
    %4305 = vmatprep.subr.mxu0 0.0
    %4306 = vmatpush1.msra.mxu0 0.0
    %4307 = vmatprep.subr.mxu0 0.0
    %4308 = vmatpush1.msra.mxu0 0.0
    %4309 = vmatprep.subr.mxu0 0.0
    %4310 = vmatpush1.msra.mxu0 0.0
    %4311 = vmatprep.subr.mxu0 0.0
    %4312 = vmatpush1.msra.mxu0 0.0
    %4313 = vmatprep.mubr.f32.mxu0 0.0
    %4314 = vmatmul.mubr.f32.gmra.mrb[0].mxu0 %v4247
    %v4315 = vpop.f32.mrb[0].mxu0
    %v4316 = vadd.f32 0.0, %v4315
    %v4317 = vpop.f32.mrb[0].mxu0
    %4318 = vdwg.mxu0
    %s4319 = scalar_lea.vmem [#allocation6], 240
    %v4320 = vld [vmem:[%s4319] sm:$0xff]
    %v4321 = vld [vmem:[%s4319 + $0x8] sm:$0xff]
    %v4322 = vld [vmem:[%s4319 + $0x10] sm:$0xff]
    %v4323 = vld [vmem:[%s4319 + $0x18] sm:$0xff]
    %v4324 = vld [vmem:[%s4319 + $0x20] sm:$0xff]
    %v4325 = vld [vmem:[%s4319 + $0x28] sm:$0xff]
    %v4326 = vld [vmem:[%s4319 + $0x30] sm:$0xff]
    %v4327 = vld [vmem:[%s4319 + $0x38] sm:$0xff]
    %v4328 = vld [vmem:[%s4319 + $0x40] sm:$0xff]
    %v4329 = vld [vmem:[%s4319 + $0x48] sm:$0xff]
    %v4331 = vsel %vm3849, %v4316, 0
    %4333 = vmatprep.subr.mxu0 0.0
    %4334 = vmatpush1.msra.mxu0 %v4320
    %4335 = vmatprep.subr.mxu0 0.0
    %4336 = vmatpush1.msra.mxu0 %v4321
    %4337 = vmatprep.subr.mxu0 0.0
    %4338 = vmatpush1.msra.mxu0 %v4322
    %4339 = vmatprep.subr.mxu0 0.0
    %4340 = vmatpush1.msra.mxu0 %v4323
    %4341 = vmatprep.subr.mxu0 0.0
    %4342 = vmatpush1.msra.mxu0 %v4324
    %4343 = vmatprep.subr.mxu0 0.0
    %4344 = vmatpush1.msra.mxu0 %v4325
    %4345 = vmatprep.subr.mxu0 0.0
    %4346 = vmatpush1.msra.mxu0 %v4326
    %4347 = vmatprep.subr.mxu0 0.0
    %4348 = vmatpush1.msra.mxu0 %v4327
    %4349 = vmatprep.subr.mxu0 0.0
    %4350 = vmatpush1.msra.mxu0 %v4328
    %4351 = vmatprep.subr.mxu0 0.0
    %4352 = vmatpush1.msra.mxu0 %v4329
    %4353 = vmatprep.subr.mxu0 0.0
    %4354 = vmatpush1.msra.mxu0 0.0
    %4355 = vmatprep.subr.mxu0 0.0
    %4356 = vmatpush1.msra.mxu0 0.0
    %4357 = vmatprep.subr.mxu0 0.0
    %4358 = vmatpush1.msra.mxu0 0.0
    %4359 = vmatprep.subr.mxu0 0.0
    %4360 = vmatpush1.msra.mxu0 0.0
    %4361 = vmatprep.subr.mxu0 0.0
    %4362 = vmatpush1.msra.mxu0 0.0
    %4363 = vmatprep.subr.mxu0 0.0
    %4364 = vmatpush1.msra.mxu0 0.0
    %4365 = vmatprep.subr.mxu0 0.0
    %4366 = vmatpush1.msra.mxu0 0.0
    %4367 = vmatprep.subr.mxu0 0.0
    %4368 = vmatpush1.msra.mxu0 0.0
    %4369 = vmatprep.subr.mxu0 0.0
    %4370 = vmatpush1.msra.mxu0 0.0
    %4371 = vmatprep.subr.mxu0 0.0
    %4372 = vmatpush1.msra.mxu0 0.0
    %4373 = vmatprep.subr.mxu0 0.0
    %4374 = vmatpush1.msra.mxu0 0.0
    %4375 = vmatprep.subr.mxu0 0.0
    %4376 = vmatpush1.msra.mxu0 0.0
    %4377 = vmatprep.subr.mxu0 0.0
    %4378 = vmatpush1.msra.mxu0 0.0
    %4379 = vmatprep.subr.mxu0 0.0
    %4380 = vmatpush1.msra.mxu0 0.0
    %4381 = vmatprep.subr.mxu0 0.0
    %4382 = vmatpush1.msra.mxu0 0.0
    %4383 = vmatprep.subr.mxu0 0.0
    %4384 = vmatpush1.msra.mxu0 0.0
    %4385 = vmatprep.subr.mxu0 0.0
    %4386 = vmatpush1.msra.mxu0 0.0
    %4387 = vmatprep.subr.mxu0 0.0
    %4388 = vmatpush1.msra.mxu0 0.0
    %4389 = vmatprep.subr.mxu0 0.0
    %4390 = vmatpush1.msra.mxu0 0.0
    %4391 = vmatprep.subr.mxu0 0.0
    %4392 = vmatpush1.msra.mxu0 0.0
    %4393 = vmatprep.subr.mxu0 0.0
    %4394 = vmatpush1.msra.mxu0 0.0
    %4395 = vmatprep.subr.mxu0 0.0
    %4396 = vmatpush1.msra.mxu0 0.0
    %4397 = vmatprep.mubr.f32.mxu0 0.0
    %4398 = vmatmul.mubr.f32.gmra.mrb[0].mxu0 %v4331
    %v4399 = vpop.f32.mrb[0].mxu0
    %v4400 = vadd.f32 0.0, %v4399
    %v4401 = vpop.f32.mrb[0].mxu0
    %4402 = vdwg.mxu0
    %v4403 = vadd.f32 %v4243, %v4400
    %s4404 = scalar_lea.vmem [#allocation4], 32
    %v4405 = vld [vmem:[%s4404] sm:$0xff]
    %v4407 = vsel %vm3765, %v4405, 0
    %4409 = vmatprep.subr.mxu0 0.0
    %4410 = vmatpush1.msra.mxu0 %v3751
    %4411 = vmatprep.subr.mxu0 0.0
    %4412 = vmatpush1.msra.mxu0 %v3752
    %4413 = vmatprep.subr.mxu0 0.0
    %4414 = vmatpush1.msra.mxu0 %v3753
    %4415 = vmatprep.subr.mxu0 0.0
    %4416 = vmatpush1.msra.mxu0 %v3754
    %4417 = vmatprep.subr.mxu0 0.0
    %4418 = vmatpush1.msra.mxu0 %v3755
    %4419 = vmatprep.subr.mxu0 0.0
    %4420 = vmatpush1.msra.mxu0 0.0
    %4421 = vmatprep.subr.mxu0 0.0
    %4422 = vmatpush1.msra.mxu0 0.0
    %4423 = vmatprep.subr.mxu0 0.0
    %4424 = vmatpush1.msra.mxu0 0.0
    %4425 = vmatprep.subr.mxu0 0.0
    %4426 = vmatpush1.msra.mxu0 0.0
    %4427 = vmatprep.subr.mxu0 0.0
    %4428 = vmatpush1.msra.mxu0 0.0
    %4429 = vmatprep.subr.mxu0 0.0
    %4430 = vmatpush1.msra.mxu0 0.0
    %4431 = vmatprep.subr.mxu0 0.0
    %4432 = vmatpush1.msra.mxu0 0.0
    %4433 = vmatprep.subr.mxu0 0.0
    %4434 = vmatpush1.msra.mxu0 0.0
    %4435 = vmatprep.subr.mxu0 0.0
    %4436 = vmatpush1.msra.mxu0 0.0
    %4437 = vmatprep.subr.mxu0 0.0
    %4438 = vmatpush1.msra.mxu0 0.0
    %4439 = vmatprep.subr.mxu0 0.0
    %4440 = vmatpush1.msra.mxu0 0.0
    %4441 = vmatprep.subr.mxu0 0.0
    %4442 = vmatpush1.msra.mxu0 0.0
    %4443 = vmatprep.subr.mxu0 0.0
    %4444 = vmatpush1.msra.mxu0 0.0
    %4445 = vmatprep.subr.mxu0 0.0
    %4446 = vmatpush1.msra.mxu0 0.0
    %4447 = vmatprep.subr.mxu0 0.0
    %4448 = vmatpush1.msra.mxu0 0.0
    %4449 = vmatprep.subr.mxu0 0.0
    %4450 = vmatpush1.msra.mxu0 0.0
    %4451 = vmatprep.subr.mxu0 0.0
    %4452 = vmatpush1.msra.mxu0 0.0
    %4453 = vmatprep.subr.mxu0 0.0
    %4454 = vmatpush1.msra.mxu0 0.0
    %4455 = vmatprep.subr.mxu0 0.0
    %4456 = vmatpush1.msra.mxu0 0.0
    %4457 = vmatprep.subr.mxu0 0.0
    %4458 = vmatpush1.msra.mxu0 0.0
    %4459 = vmatprep.subr.mxu0 0.0
    %4460 = vmatpush1.msra.mxu0 0.0
    %4461 = vmatprep.subr.mxu0 0.0
    %4462 = vmatpush1.msra.mxu0 0.0
    %4463 = vmatprep.subr.mxu0 0.0
    %4464 = vmatpush1.msra.mxu0 0.0
    %4465 = vmatprep.subr.mxu0 0.0
    %4466 = vmatpush1.msra.mxu0 0.0
    %4467 = vmatprep.subr.mxu0 0.0
    %4468 = vmatpush1.msra.mxu0 0.0
    %4469 = vmatprep.subr.mxu0 0.0
    %4470 = vmatpush1.msra.mxu0 0.0
    %4471 = vmatprep.subr.mxu0 0.0
    %4472 = vmatpush1.msra.mxu0 0.0
    %4473 = vmatprep.mubr.f32.mxu0 0.0
    %4474 = vmatmul.mubr.f32.gmra.mrb[0].mxu0 %v4407
    %v4475 = vpop.f32.mrb[0].mxu0
    %v4476 = vadd.f32 0.0, %v4475
    %v4477 = vpop.f32.mrb[0].mxu0
    %4478 = vdwg.mxu0
    %s4479 = scalar_lea.vmem [#allocation6], 320
    %v4480 = vld [vmem:[%s4479] sm:$0xff]
    %v4481 = vld [vmem:[%s4479 + $0x8] sm:$0xff]
    %v4482 = vld [vmem:[%s4479 + $0x10] sm:$0xff]
    %v4483 = vld [vmem:[%s4479 + $0x18] sm:$0xff]
    %v4484 = vld [vmem:[%s4479 + $0x20] sm:$0xff]
    %v4485 = vld [vmem:[%s4479 + $0x28] sm:$0xff]
    %v4486 = vld [vmem:[%s4479 + $0x30] sm:$0xff]
    %v4487 = vld [vmem:[%s4479 + $0x38] sm:$0xff]
    %v4488 = vld [vmem:[%s4479 + $0x40] sm:$0xff]
    %v4489 = vld [vmem:[%s4479 + $0x48] sm:$0xff]
    %v4491 = vsel %vm3849, %v4476, 0
    %4493 = vmatprep.subr.mxu0 0.0
    %4494 = vmatpush1.msra.mxu0 %v4480
    %4495 = vmatprep.subr.mxu0 0.0
    %4496 = vmatpush1.msra.mxu0 %v4481
    %4497 = vmatprep.subr.mxu0 0.0
    %4498 = vmatpush1.msra.mxu0 %v4482
    %4499 = vmatprep.subr.mxu0 0.0
    %4500 = vmatpush1.msra.mxu0 %v4483
    %4501 = vmatprep.subr.mxu0 0.0
    %4502 = vmatpush1.msra.mxu0 %v4484
    %4503 = vmatprep.subr.mxu0 0.0
    %4504 = vmatpush1.msra.mxu0 %v4485
    %4505 = vmatprep.subr.mxu0 0.0
    %4506 = vmatpush1.msra.mxu0 %v4486
    %4507 = vmatprep.subr.mxu0 0.0
    %4508 = vmatpush1.msra.mxu0 %v4487
    %4509 = vmatprep.subr.mxu0 0.0
    %4510 = vmatpush1.msra.mxu0 %v4488
    %4511 = vmatprep.subr.mxu0 0.0
    %4512 = vmatpush1.msra.mxu0 %v4489
    %4513 = vmatprep.subr.mxu0 0.0
    %4514 = vmatpush1.msra.mxu0 0.0
    %4515 = vmatprep.subr.mxu0 0.0
    %4516 = vmatpush1.msra.mxu0 0.0
    %4517 = vmatprep.subr.mxu0 0.0
    %4518 = vmatpush1.msra.mxu0 0.0
    %4519 = vmatprep.subr.mxu0 0.0
    %4520 = vmatpush1.msra.mxu0 0.0
    %4521 = vmatprep.subr.mxu0 0.0
    %4522 = vmatpush1.msra.mxu0 0.0
    %4523 = vmatprep.subr.mxu0 0.0
    %4524 = vmatpush1.msra.mxu0 0.0
    %4525 = vmatprep.subr.mxu0 0.0
    %4526 = vmatpush1.msra.mxu0 0.0
    %4527 = vmatprep.subr.mxu0 0.0
    %4528 = vmatpush1.msra.mxu0 0.0
    %4529 = vmatprep.subr.mxu0 0.0
    %4530 = vmatpush1.msra.mxu0 0.0
    %4531 = vmatprep.subr.mxu0 0.0
    %4532 = vmatpush1.msra.mxu0 0.0
    %4533 = vmatprep.subr.mxu0 0.0
    %4534 = vmatpush1.msra.mxu0 0.0
    %4535 = vmatprep.subr.mxu0 0.0
    %4536 = vmatpush1.msra.mxu0 0.0
    %4537 = vmatprep.subr.mxu0 0.0
    %4538 = vmatpush1.msra.mxu0 0.0
    %4539 = vmatprep.subr.mxu0 0.0
    %4540 = vmatpush1.msra.mxu0 0.0
    %4541 = vmatprep.subr.mxu0 0.0
    %4542 = vmatpush1.msra.mxu0 0.0
    %4543 = vmatprep.subr.mxu0 0.0
    %4544 = vmatpush1.msra.mxu0 0.0
    %4545 = vmatprep.subr.mxu0 0.0
    %4546 = vmatpush1.msra.mxu0 0.0
    %4547 = vmatprep.subr.mxu0 0.0
    %4548 = vmatpush1.msra.mxu0 0.0
    %4549 = vmatprep.subr.mxu0 0.0
    %4550 = vmatpush1.msra.mxu0 0.0
    %4551 = vmatprep.subr.mxu0 0.0
    %4552 = vmatpush1.msra.mxu0 0.0
    %4553 = vmatprep.subr.mxu0 0.0
    %4554 = vmatpush1.msra.mxu0 0.0
    %4555 = vmatprep.subr.mxu0 0.0
    %4556 = vmatpush1.msra.mxu0 0.0
    %4557 = vmatprep.mubr.f32.mxu0 0.0
    %4558 = vmatmul.mubr.f32.gmra.mrb[0].mxu0 %v4491
    %v4559 = vpop.f32.mrb[0].mxu0
    %v4560 = vadd.f32 0.0, %v4559
    %v4561 = vpop.f32.mrb[0].mxu0
    %4562 = vdwg.mxu0
    %v4563 = vadd.f32 %v4403, %v4560
    %v4564 = vld [vmem:[#allocation7] sm:$0xff]
    %v4565 = vld [vmem:[#allocation7 + $0x8] sm:$0xff]
    %v4566 = vld [vmem:[#allocation7 + $0x10] sm:$0xff]
    %v4567 = vld [vmem:[#allocation7 + $0x18] sm:$0xff]
    %v4568 = vld [vmem:[#allocation7 + $0x20] sm:$0xff]
    %v4569 = vld [vmem:[#allocation7 + $0x28] sm:$0xff]
    %v4570 = vld [vmem:[#allocation7 + $0x30] sm:$0xff]
    %v4571 = vld [vmem:[#allocation7 + $0x38] sm:$0xff]
    %v4572 = vld [vmem:[#allocation7 + $0x40] sm:$0xff]
    %v4573 = vld [vmem:[#allocation7 + $0x48] sm:$0xff]
    %v4574 = vld [vmem:[#allocation7 + $0x50] sm:$0xff]
    %v4575 = vld [vmem:[#allocation7 + $0x58] sm:$0xff]
    %v4576 = vld [vmem:[#allocation7 + $0x60] sm:$0xff]
    %v4577 = vld [vmem:[#allocation7 + $0x68] sm:$0xff]
    %v4578 = vld [vmem:[#allocation7 + $0x70] sm:$0xff]
    %v4579 = vld [vmem:[#allocation7 + $0x78] sm:$0xff]
    %v4580 = vld [vmem:[%s11] sm:$0x1]
    %v4582 = vlaneseq
    %v4583 = vshrl.u32 %v4582, 7
    %v4584 = vsub.s32 0, %v4583
    %v4585 = vrot.slane %v4580, %v4584
    %4587 = vmatprep.subr.mxu0 0.0
    %4588 = vmatpush1.msra.mxu0 %v4564
    %4589 = vmatprep.subr.mxu0 0.0
    %4590 = vmatpush1.msra.mxu0 %v4565
    %4591 = vmatprep.subr.mxu0 0.0
    %4592 = vmatpush1.msra.mxu0 %v4566
    %4593 = vmatprep.subr.mxu0 0.0
    %4594 = vmatpush1.msra.mxu0 %v4567
    %4595 = vmatprep.subr.mxu0 0.0
    %4596 = vmatpush1.msra.mxu0 %v4568
    %4597 = vmatprep.subr.mxu0 0.0
    %4598 = vmatpush1.msra.mxu0 %v4569
    %4599 = vmatprep.subr.mxu0 0.0
    %4600 = vmatpush1.msra.mxu0 %v4570
    %4601 = vmatprep.subr.mxu0 0.0
    %4602 = vmatpush1.msra.mxu0 %v4571
    %4603 = vmatprep.subr.mxu0 0.0
    %4604 = vmatpush1.msra.mxu0 %v4572
    %4605 = vmatprep.subr.mxu0 0.0
    %4606 = vmatpush1.msra.mxu0 %v4573
    %4607 = vmatprep.subr.mxu0 0.0
    %4608 = vmatpush1.msra.mxu0 %v4574
    %4609 = vmatprep.subr.mxu0 0.0
    %4610 = vmatpush1.msra.mxu0 %v4575
    %4611 = vmatprep.subr.mxu0 0.0
    %4612 = vmatpush1.msra.mxu0 %v4576
    %4613 = vmatprep.subr.mxu0 0.0
    %4614 = vmatpush1.msra.mxu0 %v4577
    %4615 = vmatprep.subr.mxu0 0.0
    %4616 = vmatpush1.msra.mxu0 %v4578
    %4617 = vmatprep.subr.mxu0 0.0
    %4618 = vmatpush1.msra.mxu0 %v4579
    %4619 = vmatprep.subr.mxu0 0.0
    %4620 = vmatpush1.msra.mxu0 0.0
    %4621 = vmatprep.subr.mxu0 0.0
    %4622 = vmatpush1.msra.mxu0 0.0
    %4623 = vmatprep.subr.mxu0 0.0
    %4624 = vmatpush1.msra.mxu0 0.0
    %4625 = vmatprep.subr.mxu0 0.0
    %4626 = vmatpush1.msra.mxu0 0.0
    %4627 = vmatprep.subr.mxu0 0.0
    %4628 = vmatpush1.msra.mxu0 0.0
    %4629 = vmatprep.subr.mxu0 0.0
    %4630 = vmatpush1.msra.mxu0 0.0
    %4631 = vmatprep.subr.mxu0 0.0
    %4632 = vmatpush1.msra.mxu0 0.0
    %4633 = vmatprep.subr.mxu0 0.0
    %4634 = vmatpush1.msra.mxu0 0.0
    %4635 = vmatprep.subr.mxu0 0.0
    %4636 = vmatpush1.msra.mxu0 0.0
    %4637 = vmatprep.subr.mxu0 0.0
    %4638 = vmatpush1.msra.mxu0 0.0
    %4639 = vmatprep.subr.mxu0 0.0
    %4640 = vmatpush1.msra.mxu0 0.0
    %4641 = vmatprep.subr.mxu0 0.0
    %4642 = vmatpush1.msra.mxu0 0.0
    %4643 = vmatprep.subr.mxu0 0.0
    %4644 = vmatpush1.msra.mxu0 0.0
    %4645 = vmatprep.subr.mxu0 0.0
    %4646 = vmatpush1.msra.mxu0 0.0
    %4647 = vmatprep.subr.mxu0 0.0
    %4648 = vmatpush1.msra.mxu0 0.0
    %4649 = vmatprep.subr.mxu0 0.0
    %4650 = vmatpush1.msra.mxu0 0.0
    %4651 = vmatprep.mubr.f32.mxu0 0.0
    %4652 = vmatmul.mubr.f32.gmra.mrb[0].mxu0 %v4563
    %v4653 = vpop.f32.mrb[0].mxu0
    %v4654 = vadd.f32 %v4585, %v4653
    %v4655 = vpop.f32.mrb[0].mxu0
    %4656 = vdwg.mxu0
    %v4657 = vld [vmem:[#allocation9] sm:$0xff]
    %v4658 = vld [vmem:[#allocation9 + $0x8] sm:$0xff]
    %v4659 = vld [vmem:[#allocation9 + $0x10] sm:$0xff]
    %v4660 = vld [vmem:[#allocation9 + $0x18] sm:$0xff]
    %v4661 = vld [vmem:[#allocation9 + $0x20] sm:$0xff]
    %v4662 = vld [vmem:[#allocation9 + $0x28] sm:$0xff]
    %v4663 = vld [vmem:[#allocation9 + $0x30] sm:$0xff]
    %v4664 = vld [vmem:[#allocation9 + $0x38] sm:$0xff]
    %v4665 = vld [vmem:[#allocation9 + $0x40] sm:$0xff]
    %v4666 = vld [vmem:[#allocation9 + $0x48] sm:$0xff]
    %v4667 = vld [vmem:[#allocation9 + $0x50] sm:$0xff]
    %v4668 = vld [vmem:[#allocation9 + $0x58] sm:$0xff]
    %v4669 = vld [vmem:[#allocation9 + $0x60] sm:$0xff]
    %v4670 = vld [vmem:[#allocation9 + $0x68] sm:$0xff]
    %v4671 = vld [vmem:[#allocation9 + $0x70] sm:$0xff]
    %v4672 = vld [vmem:[#allocation9 + $0x78] sm:$0xff]
    %v4673 = vld [vmem:[%s13] sm:$0x1]
    %v4675 = vlaneseq
    %v4676 = vshrl.u32 %v4675, 7
    %v4677 = vsub.s32 0, %v4676
    %v4678 = vrot.slane %v4673, %v4677
    %4680 = vmatprep.subr.mxu0 0.0
    %4681 = vmatpush1.msra.mxu0 %v4657
    %4682 = vmatprep.subr.mxu0 0.0
    %4683 = vmatpush1.msra.mxu0 %v4658
    %4684 = vmatprep.subr.mxu0 0.0
    %4685 = vmatpush1.msra.mxu0 %v4659
    %4686 = vmatprep.subr.mxu0 0.0
    %4687 = vmatpush1.msra.mxu0 %v4660
    %4688 = vmatprep.subr.mxu0 0.0
    %4689 = vmatpush1.msra.mxu0 %v4661
    %4690 = vmatprep.subr.mxu0 0.0
    %4691 = vmatpush1.msra.mxu0 %v4662
    %4692 = vmatprep.subr.mxu0 0.0
    %4693 = vmatpush1.msra.mxu0 %v4663
    %4694 = vmatprep.subr.mxu0 0.0
    %4695 = vmatpush1.msra.mxu0 %v4664
    %4696 = vmatprep.subr.mxu0 0.0
    %4697 = vmatpush1.msra.mxu0 %v4665
    %4698 = vmatprep.subr.mxu0 0.0
    %4699 = vmatpush1.msra.mxu0 %v4666
    %4700 = vmatprep.subr.mxu0 0.0
    %4701 = vmatpush1.msra.mxu0 %v4667
    %4702 = vmatprep.subr.mxu0 0.0
    %4703 = vmatpush1.msra.mxu0 %v4668
    %4704 = vmatprep.subr.mxu0 0.0
    %4705 = vmatpush1.msra.mxu0 %v4669
    %4706 = vmatprep.subr.mxu0 0.0
    %4707 = vmatpush1.msra.mxu0 %v4670
    %4708 = vmatprep.subr.mxu0 0.0
    %4709 = vmatpush1.msra.mxu0 %v4671
    %4710 = vmatprep.subr.mxu0 0.0
    %4711 = vmatpush1.msra.mxu0 %v4672
    %4712 = vmatprep.subr.mxu0 0.0
    %4713 = vmatpush1.msra.mxu0 0.0
    %4714 = vmatprep.subr.mxu0 0.0
    %4715 = vmatpush1.msra.mxu0 0.0
    %4716 = vmatprep.subr.mxu0 0.0
    %4717 = vmatpush1.msra.mxu0 0.0
    %4718 = vmatprep.subr.mxu0 0.0
    %4719 = vmatpush1.msra.mxu0 0.0
    %4720 = vmatprep.subr.mxu0 0.0
    %4721 = vmatpush1.msra.mxu0 0.0
    %4722 = vmatprep.subr.mxu0 0.0
    %4723 = vmatpush1.msra.mxu0 0.0
    %4724 = vmatprep.subr.mxu0 0.0
    %4725 = vmatpush1.msra.mxu0 0.0
    %4726 = vmatprep.subr.mxu0 0.0
    %4727 = vmatpush1.msra.mxu0 0.0
    %4728 = vmatprep.subr.mxu0 0.0
    %4729 = vmatpush1.msra.mxu0 0.0
    %4730 = vmatprep.subr.mxu0 0.0
    %4731 = vmatpush1.msra.mxu0 0.0
    %4732 = vmatprep.subr.mxu0 0.0
    %4733 = vmatpush1.msra.mxu0 0.0
    %4734 = vmatprep.subr.mxu0 0.0
    %4735 = vmatpush1.msra.mxu0 0.0
    %4736 = vmatprep.subr.mxu0 0.0
    %4737 = vmatpush1.msra.mxu0 0.0
    %4738 = vmatprep.subr.mxu0 0.0
    %4739 = vmatpush1.msra.mxu0 0.0
    %4740 = vmatprep.subr.mxu0 0.0
    %4741 = vmatpush1.msra.mxu0 0.0
    %4742 = vmatprep.subr.mxu0 0.0
    %4743 = vmatpush1.msra.mxu0 0.0
    %4744 = vmatprep.mubr.f32.mxu0 0.0
    %4745 = vmatmul.mubr.f32.gmra.mrb[0].mxu0 %v4654
    %v4746 = vpop.f32.mrb[0].mxu0
    %v4747 = vadd.f32 %v4678, %v4746
    %v4748 = vpop.f32.mrb[0].mxu0
    %4749 = vdwg.mxu0
    %4750 = vst [vmem:[%s14] sm:$0xff] %v4747
    // Predicated region
    $region78: #{lenet_forward.1} parent=1 // pred_check
      _
    $region79: #{lenet_forward.1} parent=1 // pred_check_branch
      %4752 = sbr.rel (0) target = $region81
    $region80: #{lenet_forward.1} parent=1 // pred_region
      _
    $region81: #{lenet_forward.1} parent=1 // pred_fallthru
      _
    // Predicated region
    $region82: #{lenet_forward.1} parent=1 // pred_check
      _
    $region83: #{lenet_forward.1} parent=1 // pred_check_branch
      %4754 = sbr.rel (0) target = $region85
    $region84: #{lenet_forward.1} parent=1 // pred_region
      _
    $region85: #{lenet_forward.1} parent=1 // pred_fallthru
      _
    %4755 = vsyncpa [#allocation3], 1
    %4756 = vsyncpa [#allocation5], 1
    %4757 = vsyncpa [#allocation8], 1

</llo_original>
